<compile_context>
chip_gen: v7x
topology: tpu7x:2x2x1
jax: 0.10.0
libtpu: 0.0.40
codegen_flags: <defaults>
</compile_context>

<pallas_src>
import functools

import jax
import jax.numpy as jnp
from jax import lax
from jax.experimental import pallas as pl
from jax.experimental.pallas import tpu as pltpu

FEAT_C = 2048          # resnet50.fc.in_features
EMBED_SIZE = 128       # embed_size
EPS = 1e-5             # nn.BatchNorm1d default eps
_HW_TILE_CAP = 2048    # per-step HW tile cap (sub-chunked -> ~3 MiB VMEM peak)
_SUBCHUNK = 256        # rows of the dot consumed per inner-loop step
_K_PAD = 32            # im2col K (27) + bias column (1), padded to 32


def _pick_hw_tile(hw, cap, sub):
    """HW tile: a multiple of `sub`, <= cap. Prefers the round-up of hw (single
    tile / exact fit) else the largest exact divisor, else the cap (the HW axis
    is then zero-padded up to a tile multiple by the wrapper)."""
    hw_r = pl.cdiv(hw, sub) * sub
    if hw_r <= cap:
        return hw_r
    divisors = [t for t in range(sub, cap + 1, sub) if hw % t == 0]
    return max(divisors) if divisors else cap


# ----------------------------------------------------------------------------
# Pallas kernels
# ----------------------------------------------------------------------------
def _stem_pool_kernel(p_ref, w_ref, o_ref, *, inv_hw, sub):
    """Fused stand-in stem (im2col matmul with folded bias + ReLU) + avg-pool.

    grid = (B, n_oc, HW_pad // t_hw); per step:
      p_ref: (t_hw, Kp) bf16  im2col patches (+ ones bias column, zero K-pad;
                              HW rows past the true extent are all-zero)
      w_ref: (Kp, OCc)  bf16  conv weights with b_stem folded in as a row
      o_ref: (1, OCc)   f32   pooled features, resident across the HW axis
    """
    t = pl.program_id(2)

    @pl.when(t == 0)
    def _init():
        o_ref[...] = jnp.zeros_like(o_ref)

    t_hw = p_ref.shape[0]
    occ = o_ref.shape[1]

    def _sub_chunk(i, acc):
        start = pl.multiple_of(i * sub, sub)
        # MXU matmul in bf16 with f32 accumulation; bias already in w_ref.
        x = jnp.dot(p_ref[pl.ds(start, sub), :], w_ref[...],
                    preferred_element_type=jnp.float32)        # (sub, OCc) f32
        return acc + jnp.sum(jnp.maximum(x, 0.0), axis=0, keepdims=True)

    partial = lax.fori_loop(0, t_hw // sub, _sub_chunk,
                            jnp.zeros((1, occ), jnp.float32), unroll=True)
    o_ref[...] += partial                                      # resident acc

    @pl.when(t == pl.num_programs(2) - 1)
    def _finalize():
        o_ref[...] = o_ref[...] * inv_hw                       # mean over H*W


def _encoder_head_kernel(f_ref, w_ref, b_ref, g_ref, beta_ref, o_ref):
    """Fused flatten + Linear(2048, E) + train-mode BatchNorm1d(E).

    f_ref: (B, C) f32   w_ref: (C, E) bf16   b/g/beta: (1, E) f32   o: (B, E)
    """
    pooled = f_ref[...].astype(jnp.bfloat16)                   # bf16 MXU operand
    emb = jnp.dot(pooled, w_ref[...],
                  preferred_element_type=jnp.float32) + b_ref[...]
    mu = jnp.mean(emb, axis=0, keepdims=True)                  # batch stats
    var = jnp.mean((emb - mu) ** 2, axis=0, keepdims=True)     # biased variance
    xhat = (emb - mu) * lax.rsqrt(var + EPS)
    o_ref[...] = (xhat * g_ref[...] + beta_ref[...]).astype(o_ref.dtype)


# ----------------------------------------------------------------------------
# Wrappers (glue in plain JAX, hot path in Pallas)
# ----------------------------------------------------------------------------
def conv_stem_pool_pallas(images, w_stem, b_stem, *, stride=4, pad=1,
                          n_oc=1, hw_tile_cap=_HW_TILE_CAP, sub=_SUBCHUNK):
    """Stand-in trunk (strided conv + ReLU) fused with global average pooling.

    images: (B, 3, H, W) NCHW  ->  pooled trunk features (B, FEAT_C) f32.
    n_oc: optional output-channel grid split ("parallel") for v7x megacore.
    """
    B, _, H, W = images.shape
    OC, IC, KH, KW = w_stem.shape
    assert OC % n_oc == 0 and (OC // n_oc) % 128 == 0
    assert hw_tile_cap % sub == 0

    x = jnp.pad(images, ((0, 0), (0, 0), (pad, pad), (pad, pad)))
    OH = (H + 2 * pad - KH) // stride + 1
    OW = (W + 2 * pad - KW) // stride + 1
    HW, K = OH * OW, IC * KH * KW
    Kp = _K_PAD
    assert K + 1 <= Kp

    t_hw = _pick_hw_tile(HW, hw_tile_cap, sub)
    hw_pad = pl.cdiv(HW, t_hw) * t_hw
    n_t = hw_pad // t_hw
    occ = OC // n_oc

    # im2col glue (XLA-side).  Bias folded in as a ones column; HW rows past
    # the true extent are all-zero (incl. the bias column) -> contribute 0.
    patches = []
    for ky in range(KH):
        for kx in range(KW):
            patches.append(
                x[:, :, ky:ky + stride * OH:stride, kx:kx + stride * OW:stride])
    p = jnp.stack(patches, axis=-1)                   # (B, IC, OH, OW, KH*KW)
    p = jnp.transpose(p, (0, 2, 3, 1, 4))             # (B, OH, OW, IC, KH*KW)
    p = p.reshape(B, HW, K)
    p = jnp.concatenate([p, jnp.ones((B, HW, 1), p.dtype)], axis=-1)
    p = jnp.pad(p, ((0, 0), (0, hw_pad - HW), (0, Kp - (K + 1))))
    p = p.astype(jnp.bfloat16)                        # (B, hw_pad, Kp) bf16

    w_mat = jnp.transpose(w_stem.reshape(OC, K))      # (K, OC)
    w_mat = jnp.concatenate([w_mat, b_stem.reshape(1, OC)], axis=0)
    w_mat = jnp.pad(w_mat, ((0, Kp - (K + 1)), (0, 0))).astype(jnp.bfloat16)

    cost = pl.CostEstimate(
        flops=2 * B * hw_pad * Kp * OC + 2 * B * hw_pad * OC,
        transcendentals=0,
        bytes_accessed=int(p.size) * 2 * n_oc + B * int(w_mat.size) * 2
                       + B * OC * 4)

    out = pl.pallas_call(
        functools.partial(_stem_pool_kernel, inv_hw=1.0 / HW, sub=sub),
        out_shape=jax.ShapeDtypeStruct((B, 1, OC), jnp.float32),
        grid=(B, n_oc, n_t),
        in_specs=[
            pl.BlockSpec((None, t_hw, Kp), lambda b, oc, t: (b, t, 0)),
            pl.BlockSpec((Kp, occ), lambda b, oc, t: (0, oc)),
        ],
        out_specs=pl.BlockSpec((None, 1, occ), lambda b, oc, t: (b, 0, oc)),
        compiler_params=pltpu.CompilerParams(
            dimension_semantics=("parallel", "parallel", "arbitrary"),
            # Actual per-step VMEM is ~3 MiB after sub-chunking; 32 MiB gives
            # ample headroom on all generations (v5e scoped default is 16 MiB,
            # v7x physical is 64 MiB).
            vmem_limit_bytes=32 * 1024 * 1024),
        cost_estimate=cost,
    )(p, w_mat)
    return out.reshape(B, OC)                          # pooled features


def encoder_head_pallas(pooled, w_embed, b_embed, gamma, beta):
    """pooled: (B, C) f32 -> (B, E) f32. Exact Linear + train-mode BatchNorm1d.

    Kept as one tiny pallas_call for module fidelity (this Linear+BatchNorm1d
    is the PyTorch module's trainable head); its cost is fixed launch overhead
    (~µs) next to the stem -- at production scale fold it into XLA instead.
    """
    B, C = pooled.shape
    E = w_embed.shape[1]
    cost = pl.CostEstimate(
        flops=2 * B * C * E + 8 * B * E,
        transcendentals=E,                 # rsqrt of the batch variance
        bytes_accessed=B * C * 4 + C * E * 2 + 3 * E * 4 + B * E * 4)
    return pl.pallas_call(
        _encoder_head_kernel,
        out_shape=jax.ShapeDtypeStruct((B, E), jnp.float32),
        grid=(1,),
        in_specs=[
            pl.BlockSpec((B, C), lambda i: (0, 0)),
            pl.BlockSpec((C, E), lambda i: (0, 0)),
            pl.BlockSpec((1, E), lambda i: (0, 0)),
            pl.BlockSpec((1, E), lambda i: (0, 0)),
            pl.BlockSpec((1, E), lambda i: (0, 0)),
        ],
        out_specs=pl.BlockSpec((B, E), lambda i: (0, 0)),
        cost_estimate=cost,
    )(pooled, w_embed.astype(jnp.bfloat16), b_embed.reshape(1, E),
      gamma.reshape(1, E), beta.reshape(1, E))


def encoder_cnn_forward(images, params, *, n_oc=1, hw_tile_cap=_HW_TILE_CAP):
    pooled = conv_stem_pool_pallas(images, params["w_stem"], params["b_stem"],
                                   n_oc=n_oc, hw_tile_cap=hw_tile_cap)
    return encoder_head_pallas(pooled, params["w_embed"], params["b_embed"],
                               params["gamma"], params["beta"])


# ----------------------------------------------------------------------------
# Pure-JAX reference (same bf16-operand / f32-accumulation precision policy;
# the conv bias is bf16 in-kernel since it is folded into the bf16 weights).
# ----------------------------------------------------------------------------
def _ref_forward(images, params):
    b_stem = params["b_stem"].astype(jnp.bfloat16).astype(jnp.float32)
    y = lax.conv_general_dilated(
        images.astype(jnp.bfloat16), params["w_stem"].astype(jnp.bfloat16),
        window_strides=(4, 4), padding=((1, 1), (1, 1)),
        dimension_numbers=("NCHW", "OIHW", "NCHW"),
        preferred_element_type=jnp.float32)
    y = jnp.maximum(y + b_stem[None, :, None, None], 0.0)
    pooled = jnp.mean(y, axis=(2, 3))                                   # (B, C)
    emb = jnp.dot(pooled.astype(jnp.bfloat16),
                  params["w_embed"].astype(jnp.bfloat16),
                  preferred_element_type=jnp.float32) + params["b_embed"]
    mu = jnp.mean(emb, axis=0, keepdims=True)
    var = jnp.mean((emb - mu) ** 2, axis=0, keepdims=True)
    return (emb - mu) / jnp.sqrt(var + EPS) * params["gamma"] + params["beta"]


# ----------------------------------------------------------------------------
if __name__ == "__main__":
    key = jax.random.PRNGKey(0)
    k_img, k_ws, k_bs, k_we, k_be = jax.random.split(key, 5)

    # Small test: stride-4 stand-in stem on 180x180 -> 45x45 trunk map
    # (HW = 2025).  A reduced hw_tile_cap=512 is used here purely to exercise
    # the multi-tile accumulation, sub-chunk loop, zero-padded HW tail, and the
    # n_oc=2 megacore split at toy scale; the production default cap is 2048.
    B, H, W = 4, 180, 180
    images = jax.random.normal(k_img, (B, 3, H, W), jnp.float32)

    # Deterministic parameter init (synthetic; no checkpoint load).
    w_stem = 0.1 * jax.random.normal(k_ws, (FEAT_C, 3, 3, 3), jnp.float32)
    b_stem = 0.1 * jax.random.normal(k_bs, (FEAT_C,), jnp.float32)
    bound = 1.0 / (FEAT_C ** 0.5)                       # nn.Linear default init
    w_embed = jax.random.uniform(k_we, (FEAT_C, EMBED_SIZE), jnp.float32,
                                 -bound, bound)
    b_embed = jax.random.uniform(k_be, (EMBED_SIZE,), jnp.float32, -bound, bound)
    gamma = jnp.ones((EMBED_SIZE,), jnp.float32)        # BatchNorm1d weight
    beta = jnp.zeros((EMBED_SIZE,), jnp.float32)        # BatchNorm1d bias

    params = dict(w_stem=w_stem, b_stem=b_stem, w_embed=w_embed,
                  b_embed=b_embed, gamma=gamma, beta=beta)

    fwd = jax.jit(functools.partial(encoder_cnn_forward,
                                    n_oc=2, hw_tile_cap=512))
    out = jax.block_until_ready(fwd(images, params))
    ref = jax.block_until_ready(_ref_forward(images, params))

    assert out.shape == (B, EMBED_SIZE), out.shape
    assert out.dtype == jnp.float32
    max_err = float(jnp.max(jnp.abs(out - ref)))
    assert jnp.allclose(out, ref, atol=1e-2, rtol=1e-2), max_err
    print("KERNEL_OK")
</pallas_src>

<mosaic_0001>
module attributes {stable_mosaic.version = 11 : i64} {
  func.func @_stem_pool_kernel(%arg0: i32, %arg1: i32, %arg2: i32, %arg3: memref<1x512x32xbf16, #tpu.memory_space<vmem>>, %arg4: memref<32x1024xbf16, #tpu.memory_space<vmem>>, %arg5: memref<1x1x1024xf32, #tpu.memory_space<vmem>>) attributes {dimension_semantics = [#tpu.dimension_semantics<parallel>, #tpu.dimension_semantics<parallel>, #tpu.dimension_semantics<arbitrary>], iteration_bounds = array<i64: 4, 2, 4>, scalar_prefetch = 0 : i64, scratch_operands = 0 : i64, tpu.core_type = #tpu.core_type<tc>, window_params = [{transform_indices = @transform_0, window_bounds = array<i64: 1, 512, 32>}, {transform_indices = @transform_1, window_bounds = array<i64: 32, 1024>}, {transform_indices = @transform_2, window_bounds = array<i64: 1, 1, 1024>}]} {
    %c0_i32 = arith.constant 0 : i32
    %0 = arith.cmpi eq, %arg2, %c0_i32 : i32
    %1 = arith.extui %0 : i1 to i32
    %c0_i32_0 = arith.constant 0 : i32
    %2 = arith.cmpi ne, %1, %c0_i32_0 : i32
    scf.if %2 {
      %cst_23 = arith.constant 0.000000e+00 : f32
      %37 = vector.broadcast %cst_23 : f32 to vector<1x1024xf32>
      %c0_24 = arith.constant 0 : index
      %c0_25 = arith.constant 0 : index
      %c0_26 = arith.constant 0 : index
      %38 = vector.load %arg5[%c0_24, %c0_25, %c0_26] : memref<1x1x1024xf32, #tpu.memory_space<vmem>>, vector<1x1x1024xf32>
      %39 = vector.shape_cast %38 : vector<1x1x1024xf32> to vector<1x1024xf32>
      %40 = vector.shape_cast %37 : vector<1x1024xf32> to vector<1x1x1024xf32>
      tpu.vector_store %arg5[%c0_24, %c0_25, %c0_26], %40 {strides = array<i32>} : memref<1x1x1024xf32, #tpu.memory_space<vmem>>, vector<1x1x1024xf32>,
    } else {
    }
    %cst = arith.constant 0.000000e+00 : f32
    %3 = vector.broadcast %cst : f32 to vector<1x1024xf32>
    %c0_i32_1 = arith.constant 0 : i32
    %c256_i32 = arith.constant 256 : i32
    %4 = arith.muli %c0_i32_1, %c256_i32 : i32
    %5 = tpu.assume_multiple %4, 256 : i32
    %c0 = arith.constant 0 : index
    %6 = arith.index_cast %5 : i32 to index
    %c0_2 = arith.constant 0 : index
    %7 = vector.load %arg3[%c0, %6, %c0_2] : memref<1x512x32xbf16, #tpu.memory_space<vmem>>, vector<1x256x32xbf16>
    %8 = vector.shape_cast %7 : vector<1x256x32xbf16> to vector<256x32xbf16>
    %c0_3 = arith.constant 0 : index
    %c0_4 = arith.constant 0 : index
    %9 = vector.load %arg4[%c0_3, %c0_4] : memref<32x1024xbf16, #tpu.memory_space<vmem>>, vector<32x1024xbf16>
    %cst_5 = arith.constant dense<0.000000e+00> : vector<256x1024xf32>
    %10 = tpu.matmul %8, %9, %cst_5 {dimension_numbers = #tpu.dot_dimension_numbers<[1], [0], [0], [1], [0, 0, 1, 1], [], []>} : vector<256x32xbf16>, vector<32x1024xbf16>, vector<256x1024xf32> -> vector<256x1024xf32>
    %cst_6 = arith.constant 0.000000e+00 : f32
    %11 = vector.broadcast %cst_6 : f32 to vector<256x1024xf32>
    %12 = arith.maximumf %10, %11 : vector<256x1024xf32>
    %cst_7 = arith.constant dense<0.000000e+00> : vector<1024xf32>
    %13 = vector.multi_reduction <add>, %12, %cst_7 [0] : vector<256x1024xf32> to vector<1024xf32>
    %14 = vector.shape_cast %13 : vector<1024xf32> to vector<1x1024xf32>
    %15 = arith.addf %3, %14 : vector<1x1024xf32>
    %c1_i32 = arith.constant 1 : i32
    %c256_i32_8 = arith.constant 256 : i32
    %16 = arith.muli %c1_i32, %c256_i32_8 : i32
    %17 = tpu.assume_multiple %16, 256 : i32
    %c0_9 = arith.constant 0 : index
    %18 = arith.index_cast %17 : i32 to index
    %c0_10 = arith.constant 0 : index
    %19 = vector.load %arg3[%c0_9, %18, %c0_10] : memref<1x512x32xbf16, #tpu.memory_space<vmem>>, vector<1x256x32xbf16>
    %20 = vector.shape_cast %19 : vector<1x256x32xbf16> to vector<256x32xbf16>
    %c0_11 = arith.constant 0 : index
    %c0_12 = arith.constant 0 : index
    %21 = vector.load %arg4[%c0_11, %c0_12] : memref<32x1024xbf16, #tpu.memory_space<vmem>>, vector<32x1024xbf16>
    %cst_13 = arith.constant dense<0.000000e+00> : vector<256x1024xf32>
    %22 = tpu.matmul %20, %21, %cst_13 {dimension_numbers = #tpu.dot_dimension_numbers<[1], [0], [0], [1], [0, 0, 1, 1], [], []>} : vector<256x32xbf16>, vector<32x1024xbf16>, vector<256x1024xf32> -> vector<256x1024xf32>
    %cst_14 = arith.constant 0.000000e+00 : f32
    %23 = vector.broadcast %cst_14 : f32 to vector<256x1024xf32>
    %24 = arith.maximumf %22, %23 : vector<256x1024xf32>
    %cst_15 = arith.constant dense<0.000000e+00> : vector<1024xf32>
    %25 = vector.multi_reduction <add>, %24, %cst_15 [0] : vector<256x1024xf32> to vector<1024xf32>
    %26 = vector.shape_cast %25 : vector<1024xf32> to vector<1x1024xf32>
    %27 = arith.addf %15, %26 : vector<1x1024xf32>
    %c2_i32 = arith.constant 2 : i32
    %c0_16 = arith.constant 0 : index
    %c0_17 = arith.constant 0 : index
    %c0_18 = arith.constant 0 : index
    %28 = vector.load %arg5[%c0_16, %c0_17, %c0_18] : memref<1x1x1024xf32, #tpu.memory_space<vmem>>, vector<1x1x1024xf32>
    %29 = vector.shape_cast %28 : vector<1x1x1024xf32> to vector<1x1024xf32>
    %30 = arith.addf %29, %27 : vector<1x1024xf32>
    %c0_19 = arith.constant 0 : index
    %c0_20 = arith.constant 0 : index
    %c0_21 = arith.constant 0 : index
    %31 = vector.load %arg5[%c0_19, %c0_20, %c0_21] : memref<1x1x1024xf32, #tpu.memory_space<vmem>>, vector<1x1x1024xf32>
    %32 = vector.shape_cast %31 : vector<1x1x1024xf32> to vector<1x1024xf32>
    %33 = vector.shape_cast %30 : vector<1x1024xf32> to vector<1x1x1024xf32>
    tpu.vector_store %arg5[%c0_19, %c0_20, %c0_21], %33 {strides = array<i32>} : memref<1x1x1024xf32, #tpu.memory_space<vmem>>, vector<1x1x1024xf32>,
    %c3_i32 = arith.constant 3 : i32
    %34 = arith.cmpi eq, %arg2, %c3_i32 : i32
    %35 = arith.extui %34 : i1 to i32
    %c0_i32_22 = arith.constant 0 : i32
    %36 = arith.cmpi ne, %35, %c0_i32_22 : i32
    scf.if %36 {
      %c0_23 = arith.constant 0 : index
      %c0_24 = arith.constant 0 : index
      %c0_25 = arith.constant 0 : index
      %37 = vector.load %arg5[%c0_23, %c0_24, %c0_25] : memref<1x1x1024xf32, #tpu.memory_space<vmem>>, vector<1x1x1024xf32>
      %38 = vector.shape_cast %37 : vector<1x1x1024xf32> to vector<1x1024xf32>
      %cst_26 = arith.constant 4.9382716E-4 : f32
      %39 = vector.broadcast %cst_26 : f32 to vector<1x1024xf32>
      %40 = arith.mulf %38, %39 : vector<1x1024xf32>
      %c0_27 = arith.constant 0 : index
      %c0_28 = arith.constant 0 : index
      %c0_29 = arith.constant 0 : index
      %41 = vector.load %arg5[%c0_27, %c0_28, %c0_29] : memref<1x1x1024xf32, #tpu.memory_space<vmem>>, vector<1x1x1024xf32>
      %42 = vector.shape_cast %41 : vector<1x1x1024xf32> to vector<1x1024xf32>
      %43 = vector.shape_cast %40 : vector<1x1024xf32> to vector<1x1x1024xf32>
      tpu.vector_store %arg5[%c0_27, %c0_28, %c0_29], %43 {strides = array<i32>} : memref<1x1x1024xf32, #tpu.memory_space<vmem>>, vector<1x1x1024xf32>,
    } else {
    }
    return
  }
  func.func @transform_0(%arg0: i32, %arg1: i32, %arg2: i32) -> (i32, i32, i32) {
    %c0_i32 = arith.constant 0 : i32
    %c0_i32_0 = arith.constant 0 : i32
    return %arg0, %arg2, %c0_i32 : i32, i32, i32
  }
  func.func @transform_1(%arg0: i32, %arg1: i32, %arg2: i32) -> (i32, i32) {
    %c0_i32 = arith.constant 0 : i32
    %c0_i32_0 = arith.constant 0 : i32
    return %c0_i32, %arg1 : i32, i32
  }
  func.func @transform_2(%arg0: i32, %arg1: i32, %arg2: i32) -> (i32, i32, i32) {
    %c0_i32 = arith.constant 0 : i32
    %c0_i32_0 = arith.constant 0 : i32
    return %arg0, %c0_i32, %arg1 : i32, i32, i32
  }
}

module attributes {stable_mosaic.version = 11 : i64} {
  func.func @_encoder_head_kernel(%arg0: i32, %arg1: memref<4x2048xf32, #tpu.memory_space<vmem>>, %arg2: memref<2048x128xbf16, #tpu.memory_space<vmem>>, %arg3: memref<1x128xf32, #tpu.memory_space<vmem>>, %arg4: memref<1x128xf32, #tpu.memory_space<vmem>>, %arg5: memref<1x128xf32, #tpu.memory_space<vmem>>, %arg6: memref<4x128xf32, #tpu.memory_space<vmem>>) attributes {dimension_semantics = [#tpu.dimension_semantics<arbitrary>], iteration_bounds = array<i64: 1>, scalar_prefetch = 0 : i64, scratch_operands = 0 : i64, tpu.core_type = #tpu.core_type<tc>, window_params = [{pipeline_mode = #tpu.pipeline_mode<synchronous>, transform_indices = @transform_0, window_bounds = array<i64: 4, 2048>}, {pipeline_mode = #tpu.pipeline_mode<synchronous>, transform_indices = @transform_1, window_bounds = array<i64: 2048, 128>}, {pipeline_mode = #tpu.pipeline_mode<synchronous>, transform_indices = @transform_2, window_bounds = array<i64: 1, 128>}, {pipeline_mode = #tpu.pipeline_mode<synchronous>, transform_indices = @transform_3, window_bounds = array<i64: 1, 128>}, {pipeline_mode = #tpu.pipeline_mode<synchronous>, transform_indices = @transform_4, window_bounds = array<i64: 1, 128>}, {pipeline_mode = #tpu.pipeline_mode<synchronous>, transform_indices = @transform_5, window_bounds = array<i64: 4, 128>}]} {
    %c0 = arith.constant 0 : index
    %c0_0 = arith.constant 0 : index
    %0 = vector.load %arg1[%c0, %c0_0] : memref<4x2048xf32, #tpu.memory_space<vmem>>, vector<4x2048xf32>
    %1 = arith.truncf %0 : vector<4x2048xf32> to vector<4x2048xbf16>
    %c0_1 = arith.constant 0 : index
    %c0_2 = arith.constant 0 : index
    %2 = vector.load %arg2[%c0_1, %c0_2] : memref<2048x128xbf16, #tpu.memory_space<vmem>>, vector<2048x128xbf16>
    %cst = arith.constant dense<0.000000e+00> : vector<4x128xf32>
    %3 = tpu.matmul %1, %2, %cst {dimension_numbers = #tpu.dot_dimension_numbers<[1], [0], [0], [1], [0, 0, 1, 1], [], []>} : vector<4x2048xbf16>, vector<2048x128xbf16>, vector<4x128xf32> -> vector<4x128xf32>
    %c0_3 = arith.constant 0 : index
    %c0_4 = arith.constant 0 : index
    %4 = vector.load %arg3[%c0_3, %c0_4] : memref<1x128xf32, #tpu.memory_space<vmem>>, vector<1x128xf32>
    %5 = vector.broadcast %4 : vector<1x128xf32> to vector<4x128xf32>
    %6 = arith.addf %3, %5 : vector<4x128xf32>
    %cst_5 = arith.constant dense<0.000000e+00> : vector<128xf32>
    %7 = vector.multi_reduction <add>, %6, %cst_5 [0] : vector<4x128xf32> to vector<128xf32>
    %8 = vector.shape_cast %7 : vector<128xf32> to vector<1x128xf32>
    %cst_6 = arith.constant 4.000000e+00 : f32
    %9 = vector.broadcast %cst_6 : f32 to vector<1x128xf32>
    %10 = arith.divf %8, %9 : vector<1x128xf32>
    %11 = vector.broadcast %10 : vector<1x128xf32> to vector<4x128xf32>
    %12 = arith.subf %6, %11 : vector<4x128xf32>
    %13 = arith.mulf %12, %12 : vector<4x128xf32>
    %cst_7 = arith.constant dense<0.000000e+00> : vector<128xf32>
    %14 = vector.multi_reduction <add>, %13, %cst_7 [0] : vector<4x128xf32> to vector<128xf32>
    %15 = vector.shape_cast %14 : vector<128xf32> to vector<1x128xf32>
    %cst_8 = arith.constant 4.000000e+00 : f32
    %16 = vector.broadcast %cst_8 : f32 to vector<1x128xf32>
    %17 = arith.divf %15, %16 : vector<1x128xf32>
    %18 = vector.broadcast %10 : vector<1x128xf32> to vector<4x128xf32>
    %19 = arith.subf %6, %18 : vector<4x128xf32>
    %cst_9 = arith.constant 9.99999974E-6 : f32
    %20 = vector.broadcast %cst_9 : f32 to vector<1x128xf32>
    %21 = arith.addf %17, %20 : vector<1x128xf32>
    %22 = math.rsqrt %21 : vector<1x128xf32>
    %23 = vector.broadcast %22 : vector<1x128xf32> to vector<4x128xf32>
    %24 = arith.mulf %19, %23 : vector<4x128xf32>
    %c0_10 = arith.constant 0 : index
    %c0_11 = arith.constant 0 : index
    %25 = vector.load %arg4[%c0_10, %c0_11] : memref<1x128xf32, #tpu.memory_space<vmem>>, vector<1x128xf32>
    %26 = vector.broadcast %25 : vector<1x128xf32> to vector<4x128xf32>
    %27 = arith.mulf %24, %26 : vector<4x128xf32>
    %c0_12 = arith.constant 0 : index
    %c0_13 = arith.constant 0 : index
    %28 = vector.load %arg5[%c0_12, %c0_13] : memref<1x128xf32, #tpu.memory_space<vmem>>, vector<1x128xf32>
    %29 = vector.broadcast %28 : vector<1x128xf32> to vector<4x128xf32>
    %30 = arith.addf %27, %29 : vector<4x128xf32>
    %c0_14 = arith.constant 0 : index
    %c0_15 = arith.constant 0 : index
    %31 = vector.load %arg6[%c0_14, %c0_15] : memref<4x128xf32, #tpu.memory_space<vmem>>, vector<4x128xf32>
    tpu.vector_store %arg6[%c0_14, %c0_15], %30 {strides = array<i32>} : memref<4x128xf32, #tpu.memory_space<vmem>>, vector<4x128xf32>,
    return
  }
  func.func @transform_0(%arg0: i32) -> (i32, i32) {
    %c0_i32 = arith.constant 0 : i32
    %c0_i32_0 = arith.constant 0 : i32
    %c0_i32_1 = arith.constant 0 : i32
    return %c0_i32, %c0_i32_0 : i32, i32
  }
  func.func @transform_1(%arg0: i32) -> (i32, i32) {
    %c0_i32 = arith.constant 0 : i32
    %c0_i32_0 = arith.constant 0 : i32
    %c0_i32_1 = arith.constant 0 : i32
    return %c0_i32, %c0_i32_0 : i32, i32
  }
  func.func @transform_2(%arg0: i32) -> (i32, i32) {
    %c0_i32 = arith.constant 0 : i32
    %c0_i32_0 = arith.constant 0 : i32
    %c0_i32_1 = arith.constant 0 : i32
    return %c0_i32, %c0_i32_0 : i32, i32
  }
  func.func @transform_3(%arg0: i32) -> (i32, i32) {
    %c0_i32 = arith.constant 0 : i32
    %c0_i32_0 = arith.constant 0 : i32
    %c0_i32_1 = arith.constant 0 : i32
    return %c0_i32, %c0_i32_0 : i32, i32
  }
  func.func @transform_4(%arg0: i32) -> (i32, i32) {
    %c0_i32 = arith.constant 0 : i32
    %c0_i32_0 = arith.constant 0 : i32
    %c0_i32_1 = arith.constant 0 : i32
    return %c0_i32, %c0_i32_0 : i32, i32
  }
  func.func @transform_5(%arg0: i32) -> (i32, i32) {
    %c0_i32 = arith.constant 0 : i32
    %c0_i32_0 = arith.constant 0 : i32
    %c0_i32_1 = arith.constant 0 : i32
    return %c0_i32, %c0_i32_0 : i32, i32
  }
}

</mosaic_0001>

<llo_original>
// kernel: encoder_cnn_forward.2
$region0: #{encoder_cnn_forward.2}
  #allocation0 [shape = 'u32[]', space=smem, size = 0x4, offset = 0x4, fixed_abs, tag = 'smem constant byte address 0x4 - core index']
  #allocation1 [shape = 'u32[144,128]{1,0:T(1,128)}', space=vmem, size = 0x12000, scoped, tag = 'internal scratch']
  %s0 = inlined_call_operand.vmem [shape: bf16[4,2048,32], index: 0, kind: input, shape index: {}]
  %s1 = inlined_call_operand.vmem [shape: bf16[32,2048], index: 1, kind: input, shape index: {}]
  %s2 = inlined_call_operand.vmem [shape: f32[4,1,2048], index: 2, kind: output, shape index: {}]
  %s3 = sld [smem:[#allocation0]]
  $region72: #{encoder_cnn_forward.2} parent=0
    _
  %s5 = ssub.s32 1, %s3
  %s6 = scalar_select 0, %s5, %s3
  $region1: #{encoder_cnn_forward.2} parent=0
    #allocation2 [shape = 'u8[131072]{0}', space=vmem, size = 0x20000, scoped, tag = 'input window, operand 1']
    loop: start=0, step=1, limit=34
    $region2: #{encoder_cnn_forward.2} parent=1 // loop_pre_header
      _
    $region3: #{encoder_cnn_forward.2} parent=1 // loop_header
      %s8 = sphi 0, %s12
      %p9 = scmp.ge.s32.totalorder %s8, 34
      %s15 = sphi 0, %s34
      %s16 = sphi 0, %s30
      %s17 = sphi 0, %s26
      %s18 = sphi 0, %s15
      %s19 = sphi 0, %s16
      %s20 = sphi 0, %s17
      %s21 = sphi 0, %s18
      %s22 = sphi 0, %s19
      %s23 = sphi 0, %s20
      %s39 = sphi 0, %s41
      %s42 = sphi 0, %s39
      %s43 = sphi 0, %s42
      %s59 = sphi 0, %s43
      %s65 = sphi 0, %s67
      %s68 = sphi 0, %s65
      %s69 = sphi 0, %s68
      %s85 = sphi 0, %s69
      %s93 = sphi 0, %s95
      %s96 = sphi 0, %s93
      %s97 = sphi 0, %s96
      %s113 = sphi 0, %s97
    $region4: #{encoder_cnn_forward.2} parent=1 // loop_header_branch
      %11 = sbr.rel (%p9) target = $region8
    $region5: #{encoder_cnn_forward.2} parent=1 // loop_body
      %s13 = ssub.s32 %s8, 1
      %s14 = ssub.s32 %s8, 2
      %s24 = sadd.s32 1, %s17
      %p25 = scmp.ge.s32.totalorder %s24, 4
      %s26 = scalar_select %p25, 0, %s24
      %s27 = sadd.s32 1, %s16
      %s28 = scalar_select %p25, %s27, %s16
      %p29 = scmp.ge.s32.totalorder %s28, 2
      %s30 = scalar_select %p29, 0, %s28
      %s31 = sadd.s32 1, %s15
      %s32 = scalar_select %p29, %s31, %s15
      %p33 = scmp.ge.s32.totalorder %s32, 4
      %s34 = scalar_select %p33, 0, %s32
      %s35 = ssub.s32 %s15, %s34
      %s36 = ssub.s32 %s17, %s26
      %s37 = sor.u32 %s35, %s36
      %p38 = scmp.eq.s32.totalorder %s37, 0
      %s40 = sadd.s32 %s39, 1
      %s41 = scalar_select %p38, %s39, %s40
      %p44 = pneg %p38
      %p45 = scmp.eq.s32.totalorder %s8, 31
      %p46 = por %p44, %p45
      %p47 = scmp.ne.s32.totalorder %s39, %s42
      %p48 = scmp.eq.s32.totalorder %s8, 0
      %p49 = por %p47, %p48
      %p50 = scmp.ne.s32.totalorder %s39, %s42
      %p51 = scmp.eq.s32.totalorder %s13, 31
      %p52 = por %p50, %p51
      %p53 = scmp.ne.s32.totalorder %s42, %s43
      %p54 = scmp.eq.s32.totalorder %s13, 0
      %p55 = por %p53, %p54
      %p56 = scmp.ne.s32.totalorder %s42, %s43
      %p57 = scmp.eq.s32.totalorder %s14, 31
      %p58 = por %p56, %p57
      %p60 = scmp.ne.s32.totalorder %s43, %s59
      %p61 = scmp.eq.s32.totalorder %s14, 0
      %p62 = por %p60, %p61
      %s63 = ssub.s32 %s16, %s30
      %p64 = scmp.eq.s32.totalorder %s63, 0
      %s66 = sadd.s32 %s65, 1
      %s67 = scalar_select %p64, %s65, %s66
      %p70 = pneg %p64
      %p71 = scmp.eq.s32.totalorder %s8, 31
      %p72 = por %p70, %p71
      %p73 = scmp.ne.s32.totalorder %s65, %s68
      %p74 = scmp.eq.s32.totalorder %s8, 0
      %p75 = por %p73, %p74
      %p76 = scmp.ne.s32.totalorder %s65, %s68
      %p77 = scmp.eq.s32.totalorder %s13, 31
      %p78 = por %p76, %p77
      %p79 = scmp.ne.s32.totalorder %s68, %s69
      %p80 = scmp.eq.s32.totalorder %s13, 0
      %p81 = por %p79, %p80
      %p82 = scmp.ne.s32.totalorder %s68, %s69
      %p83 = scmp.eq.s32.totalorder %s14, 31
      %p84 = por %p82, %p83
      %p86 = scmp.ne.s32.totalorder %s69, %s85
      %p87 = scmp.eq.s32.totalorder %s14, 0
      %p88 = por %p86, %p87
      %s89 = ssub.s32 %s15, %s34
      %s90 = ssub.s32 %s16, %s30
      %s91 = sor.u32 %s89, %s90
      %p92 = scmp.eq.s32.totalorder %s91, 0
      %s94 = sadd.s32 %s93, 1
      %s95 = scalar_select %p92, %s93, %s94
      %p98 = pneg %p92
      %p99 = scmp.eq.s32.totalorder %s8, 31
      %p100 = por %p98, %p99
      %p101 = scmp.ne.s32.totalorder %s93, %s96
      %p102 = scmp.eq.s32.totalorder %s8, 0
      %p103 = por %p101, %p102
      %p104 = scmp.ne.s32.totalorder %s93, %s96
      %p105 = scmp.eq.s32.totalorder %s13, 31
      %p106 = por %p104, %p105
      %p107 = scmp.ne.s32.totalorder %s96, %s97
      %p108 = scmp.eq.s32.totalorder %s13, 0
      %p109 = por %p107, %p108
      %p110 = scmp.ne.s32.totalorder %s96, %s97
      %p111 = scmp.eq.s32.totalorder %s14, 31
      %p112 = por %p110, %p111
      %p114 = scmp.ne.s32.totalorder %s97, %s113
      %p115 = scmp.eq.s32.totalorder %s14, 0
      %p116 = por %p114, %p115
      %p117 = scmp.le.s32.totalorder 1, %s8
      %p118 = scmp.lt.s32.totalorder %s8, 33
      %p119 = pnand %p117, %p118
      %p120 = pneg %p119
      // Predicated region
      $region9: #{encoder_cnn_forward.2} parent=5 // pred_check
        _
      $region10: #{encoder_cnn_forward.2} parent=5 // pred_check_branch
        %122 = sbr.rel (%p119) target = $region12
      $region11: #{encoder_cnn_forward.2} parent=5 // pred_region
        %s123 = ssub.s32 %s8, 1
      $region12: #{encoder_cnn_forward.2} parent=5 // pred_fallthru
        _
      %p124 = scmp.lt.s32.totalorder %s8, 32
      // Predicated region
      $region13: #{encoder_cnn_forward.2} parent=5 // pred_check
        %p125 = pneg %p124
      $region14: #{encoder_cnn_forward.2} parent=5 // pred_check_branch
        %127 = sbr.rel (%p125) target = $region16
      $region15: #{encoder_cnn_forward.2} parent=5 // pred_region
        // Predicated region
        $region17: #{encoder_cnn_forward.2} parent=15 // pred_check
          %p128 = pneg %p49
        $region18: #{encoder_cnn_forward.2} parent=15 // pred_check_branch
          %130 = sbr.rel (%p128) target = $region20
        $region19: #{encoder_cnn_forward.2} parent=15 // pred_region
          %s131 = smul.u32 64, %s17
          %p132 = scmp.lt.s32.totalorder %s15, 3
          %s133 = scalar_select %p132, %s15, 3
          %p134 = scmp.lt.s32.totalorder %s131, 255
          %s135 = scalar_select %p134, %s131, 255
          %s136 = smul.addr %s133, 256
          %s137 = sadd.s32 %s135, %s136
          %s138 = smul.addr %s137, 4
          %s139 = scalar_lea.vmem %s0, %s138
          %s140 = smul.u32 64, %s17
        $region20: #{encoder_cnn_forward.2} parent=15 // pred_fallthru
          _
        // Predicated region
        $region21: #{encoder_cnn_forward.2} parent=15 // pred_check
          %p141 = pneg %p75
        $region22: #{encoder_cnn_forward.2} parent=15 // pred_check_branch
          %143 = sbr.rel (%p141) target = $region24
        $region23: #{encoder_cnn_forward.2} parent=15 // pred_region
          %s144 = sand.u32 %s65, 1
          %s145 = sand.u32 %s65, 1
          %s146 = smul.addr %s145, 128
          %s147 = scalar_lea.vmem [#allocation2], %s146
          %s148 = smul.u32 8, %s16
          %s149 = smul.addr %s148, 4
          %s150 = scalar_lea.vmem %s1, %s149
          // Predicated region
          $region25: #{encoder_cnn_forward.2} parent=23 // pred_check
            _
          $region26: #{encoder_cnn_forward.2} parent=23 // pred_check_branch
            %152 = sbr.rel (0) target = $region28
          $region27: #{encoder_cnn_forward.2} parent=23 // pred_region
            // Predicated region
            $region29: #{encoder_cnn_forward.2} parent=27 // pred_check
              _
            $region30: #{encoder_cnn_forward.2} parent=27 // pred_check_branch
              %154 = sbr.rel (0) target = $region32
            $region31: #{encoder_cnn_forward.2} parent=27 // pred_region
              loop: start=0, step=1, limit=1
              $region33: #{encoder_cnn_forward.2} parent=31 // loop_pre_header
                _
              $region34: #{encoder_cnn_forward.2} parent=31 // loop_header
                %s156 = sphi 0, %s160
                %p157 = scmp.ge.s32.totalorder %s156, 1
                %s161 = sphi %s150, %s150
                %s162 = sphi %s147, %s147
              $region35: #{encoder_cnn_forward.2} parent=31 // loop_header_branch
                %159 = sbr.rel (%p157) target = $region39
              $region36: #{encoder_cnn_forward.2} parent=31 // loop_body
                %v163 = vld [vmem:[%s161] sm:$0xff]
                %164 = vst [vmem:[%s162] sm:$0xff] %v163
                %v165 = vld [vmem:[%s161 + $0x8] sm:$0xff]
                %166 = vst [vmem:[%s162 + $0x8] sm:$0xff] %v165
                %v167 = vld [vmem:[%s161 + $0x10] sm:$0xff]
                %168 = vst [vmem:[%s162 + $0x10] sm:$0xff] %v167
                %v169 = vld [vmem:[%s161 + $0x18] sm:$0xff]
                %170 = vst [vmem:[%s162 + $0x18] sm:$0xff] %v169
                %v171 = vld [vmem:[%s161 + $0x40] sm:$0xff]
                %172 = vst [vmem:[%s162 + $0x20] sm:$0xff] %v171
                %v173 = vld [vmem:[%s161 + $0x48] sm:$0xff]
                %174 = vst [vmem:[%s162 + $0x28] sm:$0xff] %v173
                %v175 = vld [vmem:[%s161 + $0x50] sm:$0xff]
                %176 = vst [vmem:[%s162 + $0x30] sm:$0xff] %v175
                %v177 = vld [vmem:[%s161 + $0x58] sm:$0xff]
                %178 = vst [vmem:[%s162 + $0x38] sm:$0xff] %v177
                %v179 = vld [vmem:[%s161 + $0x80] sm:$0xff]
                %180 = vst [vmem:[%s162 + $0x40] sm:$0xff] %v179
                %v181 = vld [vmem:[%s161 + $0x88] sm:$0xff]
                %182 = vst [vmem:[%s162 + $0x48] sm:$0xff] %v181
                %v183 = vld [vmem:[%s161 + $0x90] sm:$0xff]
                %184 = vst [vmem:[%s162 + $0x50] sm:$0xff] %v183
                %v185 = vld [vmem:[%s161 + $0x98] sm:$0xff]
                %186 = vst [vmem:[%s162 + $0x58] sm:$0xff] %v185
                %v187 = vld [vmem:[%s161 + $0xc0] sm:$0xff]
                %188 = vst [vmem:[%s162 + $0x60] sm:$0xff] %v187
                %v189 = vld [vmem:[%s161 + $0xc8] sm:$0xff]
                %190 = vst [vmem:[%s162 + $0x68] sm:$0xff] %v189
                %v191 = vld [vmem:[%s161 + $0xd0] sm:$0xff]
                %192 = vst [vmem:[%s162 + $0x70] sm:$0xff] %v191
                %v193 = vld [vmem:[%s161 + $0xd8] sm:$0xff]
                %194 = vst [vmem:[%s162 + $0x78] sm:$0xff] %v193
              $region37: #{encoder_cnn_forward.2} parent=31 // loop_footer
                %s160 = sadd.s32 1, %s156
              $region38: #{encoder_cnn_forward.2} parent=31 // loop_footer_branch
                %155 = sbr.rel target = $region34
              $region39: #{encoder_cnn_forward.2} parent=31 // loop_exit
                _
            $region32: #{encoder_cnn_forward.2} parent=27 // pred_fallthru
              _
            // Predicated region
            $region40: #{encoder_cnn_forward.2} parent=27 // pred_check
              _
            $region41: #{encoder_cnn_forward.2} parent=27 // pred_check_branch
              %196 = sbr.rel target = $region43
            $region42: #{encoder_cnn_forward.2} parent=27 // pred_region
              _
            $region43: #{encoder_cnn_forward.2} parent=27 // pred_fallthru
              _
          $region28: #{encoder_cnn_forward.2} parent=23 // pred_fallthru
            _
          %197 = vnop
        $region24: #{encoder_cnn_forward.2} parent=15 // pred_fallthru
          _
      $region16: #{encoder_cnn_forward.2} parent=5 // pred_fallthru
        _
      %p198 = scmp.le.s32.totalorder 1, %s8
      %p199 = scmp.lt.s32.totalorder %s8, 33
      %p200 = pnand %p198, %p199
      %p201 = pneg %p200
      // Predicated region
      $region44: #{encoder_cnn_forward.2} parent=5 // pred_check
        _
      $region45: #{encoder_cnn_forward.2} parent=5 // pred_check_branch
        %203 = sbr.rel (%p200) target = $region47
      $region46: #{encoder_cnn_forward.2} parent=5 // pred_region
        %s204 = ssub.s32 %s8, 1
        %s205 = sand.u32 %s68, 1
        %s206 = sand.u32 %s68, 1
        %s207 = smul.addr %s206, 128
        %s208 = scalar_lea.vmem [#allocation2], %s207
        // Predicated region
        $region48: #{encoder_cnn_forward.2} parent=46 // pred_check
          %p209 = pneg %p81
        $region49: #{encoder_cnn_forward.2} parent=46 // pred_check_branch
          %211 = sbr.rel (%p209) target = $region51
        $region50: #{encoder_cnn_forward.2} parent=46 // pred_region
          _
        $region51: #{encoder_cnn_forward.2} parent=46 // pred_fallthru
          _
        %s212 = smul.u32 64, %s20
        %p213 = scmp.lt.s32.totalorder %s18, 3
        %s214 = scalar_select %p213, %s18, 3
        %p215 = scmp.lt.s32.totalorder %s212, 255
        %s216 = scalar_select %p215, %s212, 255
        %s217 = smul.addr %s214, 256
        %s218 = sadd.s32 %s216, %s217
        %s219 = smul.addr %s218, 4
        %s220 = scalar_lea.vmem %s0, %s219
        %p221 = pneg %p55
        %p222 = pneg %p52
        %s223 = sand.u32 %s68, 1
        %s224 = sand.u32 %s68, 1
        %s225 = smul.addr %s224, 128
        %s226 = scalar_lea.vmem [#allocation2], %s225
        %p227 = pneg %p81
        %p228 = pneg %p78
        %p229 = pneg %p109
        %p230 = pneg %p106
        %s231 = smul.u32 8, %s19
        %p232 = scmp.lt.s32.totalorder %s18, 3
        %s233 = scalar_select %p232, %s18, 3
        %p234 = scmp.lt.s32.totalorder %s231, 15
        %s235 = scalar_select %p234, %s231, 15
        %s236 = smul.addr %s233, 16
        %s237 = sadd.s32 %s235, %s236
        %s238 = scalar_lea.vmem %s2, %s237
        %s239 = smul.u32 64, %s20
        %p240 = scmp.lt.s32.totalorder %s18, 3
        %s241 = scalar_select %p240, %s18, 3
        %p242 = scmp.lt.s32.totalorder %s239, 255
        %s243 = scalar_select %p242, %s239, 255
        %s244 = smul.addr %s241, 256
        %s245 = sadd.s32 %s243, %s244
        %s246 = smul.addr %s245, 4
        %s247 = scalar_lea.vmem %s0, %s246
        %s248 = smul.u32 64, %s20
        %s249 = smul.u32 8, %s19
        %s250 = smul.u32 8, %s19
        %p251 = scmp.lt.s32.totalorder %s18, 3
        %s252 = scalar_select %p251, %s18, 3
        %p253 = scmp.lt.s32.totalorder %s250, 15
        %s254 = scalar_select %p253, %s250, 15
        %s255 = smul.addr %s252, 16
        %s256 = sadd.s32 %s254, %s255
        %s257 = scalar_lea.vmem %s2, %s256
        %s258 = smul.u32 8, %s19
        %p260 = scmp.eq.s32.totalorder %s20, 0
        // Predicated region
        $region52: #{encoder_cnn_forward.2} parent=46 // pred_check
          %p261 = pneg %p260
        $region53: #{encoder_cnn_forward.2} parent=46 // pred_check_branch
          %263 = sbr.rel (%p261) target = $region55
        $region54: #{encoder_cnn_forward.2} parent=46 // pred_region
          %264 = vst [vmem:[%s257] sm:$0xff] 0.0
        $region55: #{encoder_cnn_forward.2} parent=46 // pred_fallthru
          _
        %v265 = vld [vmem:[%s247] sm:$0xf]
        %v266 = vld [vmem:[%s247 + $0x4] sm:$0xf]
        %v267 = vld [vmem:[%s247 + $0x8] sm:$0xf]
        %v268 = vld [vmem:[%s247 + $0xc] sm:$0xf]
        %v269 = vld [vmem:[%s247 + $0x10] sm:$0xf]
        %v270 = vld [vmem:[%s247 + $0x14] sm:$0xf]
        %v271 = vld [vmem:[%s247 + $0x18] sm:$0xf]
        %v272 = vld [vmem:[%s247 + $0x1c] sm:$0xf]
        %v273 = vld [vmem:[%s247 + $0x20] sm:$0xf]
        %v274 = vld [vmem:[%s247 + $0x24] sm:$0xf]
        %v275 = vld [vmem:[%s247 + $0x28] sm:$0xf]
        %v276 = vld [vmem:[%s247 + $0x2c] sm:$0xf]
        %v277 = vld [vmem:[%s247 + $0x30] sm:$0xf]
        %v278 = vld [vmem:[%s247 + $0x34] sm:$0xf]
        %v279 = vld [vmem:[%s247 + $0x38] sm:$0xf]
        %v280 = vld [vmem:[%s247 + $0x3c] sm:$0xf]
        %v281 = vld [vmem:[%s247 + $0x40] sm:$0xf]
        %v282 = vld [vmem:[%s247 + $0x44] sm:$0xf]
        %v283 = vld [vmem:[%s247 + $0x48] sm:$0xf]
        %v284 = vld [vmem:[%s247 + $0x4c] sm:$0xf]
        %v285 = vld [vmem:[%s247 + $0x50] sm:$0xf]
        %v286 = vld [vmem:[%s247 + $0x54] sm:$0xf]
        %v287 = vld [vmem:[%s247 + $0x58] sm:$0xf]
        %v288 = vld [vmem:[%s247 + $0x5c] sm:$0xf]
        %v289 = vld [vmem:[%s247 + $0x60] sm:$0xf]
        %v290 = vld [vmem:[%s247 + $0x64] sm:$0xf]
        %v291 = vld [vmem:[%s247 + $0x68] sm:$0xf]
        %v292 = vld [vmem:[%s247 + $0x6c] sm:$0xf]
        %v293 = vld [vmem:[%s247 + $0x70] sm:$0xf]
        %v294 = vld [vmem:[%s247 + $0x74] sm:$0xf]
        %v295 = vld [vmem:[%s247 + $0x78] sm:$0xf]
        %v296 = vld [vmem:[%s247 + $0x7c] sm:$0xf]
        %v297 = vld [vmem:[%s208] sm:$0xff]
        %v298 = vld [vmem:[%s208 + $0x8] sm:$0xff]
        %v299 = vld [vmem:[%s208 + $0x10] sm:$0xff]
        %v300 = vld [vmem:[%s208 + $0x18] sm:$0xff]
        %v301 = vld [vmem:[%s208 + $0x20] sm:$0xff]
        %v302 = vld [vmem:[%s208 + $0x28] sm:$0xff]
        %v303 = vld [vmem:[%s208 + $0x30] sm:$0xff]
        %v304 = vld [vmem:[%s208 + $0x38] sm:$0xff]
        %v305 = vld [vmem:[%s208 + $0x40] sm:$0xff]
        %v306 = vld [vmem:[%s208 + $0x48] sm:$0xff]
        %v307 = vld [vmem:[%s208 + $0x50] sm:$0xff]
        %v308 = vld [vmem:[%s208 + $0x58] sm:$0xff]
        %v309 = vld [vmem:[%s208 + $0x60] sm:$0xff]
        %v310 = vld [vmem:[%s208 + $0x68] sm:$0xff]
        %v311 = vld [vmem:[%s208 + $0x70] sm:$0xff]
        %v312 = vld [vmem:[%s208 + $0x78] sm:$0xff]
        %v345 = vunpack.c.l.b16 %v265
        %v346 = vunpack.c.l.b16 %v266
        %v347 = vunpack.c.l.b16 %v267
        %v348 = vunpack.c.l.b16 %v268
        %v349 = vunpack.c.l.b16 %v269
        %v350 = vunpack.c.l.b16 %v270
        %v351 = vunpack.c.l.b16 %v271
        %v352 = vunpack.c.l.b16 %v272
        %v353 = vunpack.c.l.b16 %v273
        %v354 = vunpack.c.l.b16 %v274
        %v355 = vunpack.c.l.b16 %v275
        %v356 = vunpack.c.l.b16 %v276
        %v357 = vunpack.c.l.b16 %v277
        %v358 = vunpack.c.l.b16 %v278
        %v359 = vunpack.c.l.b16 %v279
        %v360 = vunpack.c.l.b16 %v280
        %v361 = vunpack.c.l.b16 %v281
        %v362 = vunpack.c.l.b16 %v282
        %v363 = vunpack.c.l.b16 %v283
        %v364 = vunpack.c.l.b16 %v284
        %v365 = vunpack.c.l.b16 %v285
        %v366 = vunpack.c.l.b16 %v286
        %v367 = vunpack.c.l.b16 %v287
        %v368 = vunpack.c.l.b16 %v288
        %v369 = vunpack.c.l.b16 %v289
        %v370 = vunpack.c.l.b16 %v290
        %v371 = vunpack.c.l.b16 %v291
        %v372 = vunpack.c.l.b16 %v292
        %v373 = vunpack.c.l.b16 %v293
        %v374 = vunpack.c.l.b16 %v294
        %v375 = vunpack.c.l.b16 %v295
        %v376 = vunpack.c.l.b16 %v296
        %v377 = vpack.c.b16 %v346, %v345
        %v378 = vpack.c.b16 %v348, %v347
        %v379 = vpack.c.b16 %v350, %v349
        %v380 = vpack.c.b16 %v352, %v351
        %v381 = vpack.c.b16 %v354, %v353
        %v382 = vpack.c.b16 %v356, %v355
        %v383 = vpack.c.b16 %v358, %v357
        %v384 = vpack.c.b16 %v360, %v359
        %v385 = vpack.c.b16 %v362, %v361
        %v386 = vpack.c.b16 %v364, %v363
        %v387 = vpack.c.b16 %v366, %v365
        %v388 = vpack.c.b16 %v368, %v367
        %v389 = vpack.c.b16 %v370, %v369
        %v390 = vpack.c.b16 %v372, %v371
        %v391 = vpack.c.b16 %v374, %v373
        %v392 = vpack.c.b16 %v376, %v375
        %v409 = vunpack.c.l.b16 %v297
        %v410 = vunpack.c.h.b16 %v297
        %v411 = vunpack.c.l.b16 %v298
        %v412 = vunpack.c.h.b16 %v298
        %v413 = vunpack.c.l.b16 %v299
        %v414 = vunpack.c.h.b16 %v299
        %v415 = vunpack.c.l.b16 %v300
        %v416 = vunpack.c.h.b16 %v300
        %v417 = vunpack.c.l.b16 %v301
        %v418 = vunpack.c.h.b16 %v301
        %v419 = vunpack.c.l.b16 %v302
        %v420 = vunpack.c.h.b16 %v302
        %v421 = vunpack.c.l.b16 %v303
        %v422 = vunpack.c.h.b16 %v303
        %v423 = vunpack.c.l.b16 %v304
        %v424 = vunpack.c.h.b16 %v304
        %v425 = vunpack.c.l.b16 %v305
        %v426 = vunpack.c.h.b16 %v305
        %v427 = vunpack.c.l.b16 %v306
        %v428 = vunpack.c.h.b16 %v306
        %v429 = vunpack.c.l.b16 %v307
        %v430 = vunpack.c.h.b16 %v307
        %v431 = vunpack.c.l.b16 %v308
        %v432 = vunpack.c.h.b16 %v308
        %v433 = vunpack.c.l.b16 %v309
        %v434 = vunpack.c.h.b16 %v309
        %v435 = vunpack.c.l.b16 %v310
        %v436 = vunpack.c.h.b16 %v310
        %v437 = vunpack.c.l.b16 %v311
        %v438 = vunpack.c.h.b16 %v311
        %v439 = vunpack.c.l.b16 %v312
        %v440 = vunpack.c.h.b16 %v312
        %v441 = vpack.c.b16 %v417, %v409
        %v442 = vpack.c.b16 %v418, %v410
        %v443 = vpack.c.b16 %v419, %v411
        %v444 = vpack.c.b16 %v420, %v412
        %v445 = vpack.c.b16 %v421, %v413
        %v446 = vpack.c.b16 %v422, %v414
        %v447 = vpack.c.b16 %v423, %v415
        %v448 = vpack.c.b16 %v424, %v416
        %v449 = vpack.c.b16 %v433, %v425
        %v450 = vpack.c.b16 %v434, %v426
        %v451 = vpack.c.b16 %v435, %v427
        %v452 = vpack.c.b16 %v436, %v428
        %v453 = vpack.c.b16 %v437, %v429
        %v454 = vpack.c.b16 %v438, %v430
        %v455 = vpack.c.b16 %v439, %v431
        %v456 = vpack.c.b16 %v440, %v432
        %vm473 = vcmask 261120
        %v475 = vsel %vm473, %v377, 0
        %v478 = vsel %vm473, %v378, 0
        %v481 = vsel %vm473, %v379, 0
        %v484 = vsel %vm473, %v380, 0
        %v487 = vsel %vm473, %v381, 0
        %v490 = vsel %vm473, %v382, 0
        %v493 = vsel %vm473, %v383, 0
        %v496 = vsel %vm473, %v384, 0
        %v499 = vsel %vm473, %v385, 0
        %v502 = vsel %vm473, %v386, 0
        %v505 = vsel %vm473, %v387, 0
        %v508 = vsel %vm473, %v388, 0
        %v511 = vsel %vm473, %v389, 0
        %v514 = vsel %vm473, %v390, 0
        %v517 = vsel %vm473, %v391, 0
        %v520 = vsel %vm473, %v392, 0
        %522 = vmatprep.subr.bf16.mxu0 %v442
        %523 = vmatpush1.bf16.msra.mxu0 %v441
        %524 = vmatprep.subr.bf16.mxu0 %v450
        %525 = vmatpush1.bf16.msra.mxu0 %v449
        %526 = vmatprep.subr.bf16.mxu0 0
        %527 = vmatpush1.bf16.msra.mxu0 0
        %528 = vmatprep.subr.bf16.mxu0 0
        %529 = vmatpush1.bf16.msra.mxu0 0
        %530 = vmatprep.subr.bf16.mxu0 0
        %531 = vmatpush1.bf16.msra.mxu0 0
        %532 = vmatprep.subr.bf16.mxu0 0
        %533 = vmatpush1.bf16.msra.mxu0 0
        %534 = vmatprep.subr.bf16.mxu0 0
        %535 = vmatpush1.bf16.msra.mxu0 0
        %536 = vmatprep.subr.bf16.mxu0 0
        %537 = vmatpush1.bf16.msra.mxu0 0
        %538 = vmatprep.subr.bf16.mxu0 0
        %539 = vmatpush1.bf16.msra.mxu0 0
        %540 = vmatprep.subr.bf16.mxu0 0
        %541 = vmatpush1.bf16.msra.mxu0 0
        %542 = vmatprep.subr.bf16.mxu0 0
        %543 = vmatpush1.bf16.msra.mxu0 0
        %544 = vmatprep.subr.bf16.mxu0 0
        %545 = vmatpush1.bf16.msra.mxu0 0
        %546 = vmatprep.subr.bf16.mxu0 0
        %547 = vmatpush1.bf16.msra.mxu0 0
        %548 = vmatprep.subr.bf16.mxu0 0
        %549 = vmatpush1.bf16.msra.mxu0 0
        %550 = vmatprep.subr.bf16.mxu0 0
        %551 = vmatpush1.bf16.msra.mxu0 0
        %552 = vmatprep.subr.bf16.mxu0 0
        %553 = vmatpush1.bf16.msra.mxu0 0
        %554 = vmatprep.mubr.bf16.mxu0 0
        %555 = vmatmul.mubr.bf16.gmra.mrb[0].mxu0 %v475
        %v556 = vpop.f32.mrb[0].mxu0
        %v557 = vadd.f32 0.0, %v556
        %v558 = vpop.f32.mrb[0].mxu0
        %v559 = vadd.f32 0.0, %v558
        %v560 = vpop.f32.mrb[0].mxu0
        %v561 = vadd.f32 0.0, %v560
        %v562 = vpop.f32.mrb[0].mxu0
        %v563 = vadd.f32 0.0, %v562
        %564 = vmatprep.mubr.bf16.mxu0 0
        %565 = vmatmul.mubr.bf16.gmra.mrb[0].mxu0 %v478
        %v566 = vpop.f32.mrb[0].mxu0
        %v567 = vadd.f32 0.0, %v566
        %v568 = vpop.f32.mrb[0].mxu0
        %v569 = vadd.f32 0.0, %v568
        %v570 = vpop.f32.mrb[0].mxu0
        %v571 = vadd.f32 0.0, %v570
        %v572 = vpop.f32.mrb[0].mxu0
        %v573 = vadd.f32 0.0, %v572
        %574 = vmatprep.mubr.bf16.mxu0 0
        %575 = vmatmul.mubr.bf16.gmra.mrb[0].mxu0 %v481
        %v576 = vpop.f32.mrb[0].mxu0
        %v577 = vadd.f32 0.0, %v576
        %v578 = vpop.f32.mrb[0].mxu0
        %v579 = vadd.f32 0.0, %v578
        %v580 = vpop.f32.mrb[0].mxu0
        %v581 = vadd.f32 0.0, %v580
        %v582 = vpop.f32.mrb[0].mxu0
        %v583 = vadd.f32 0.0, %v582
        %584 = vmatprep.mubr.bf16.mxu0 0
        %585 = vmatmul.mubr.bf16.gmra.mrb[0].mxu0 %v484
        %v586 = vpop.f32.mrb[0].mxu0
        %v587 = vadd.f32 0.0, %v586
        %v588 = vpop.f32.mrb[0].mxu0
        %v589 = vadd.f32 0.0, %v588
        %v590 = vpop.f32.mrb[0].mxu0
        %v591 = vadd.f32 0.0, %v590
        %v592 = vpop.f32.mrb[0].mxu0
        %v593 = vadd.f32 0.0, %v592
        %594 = vmatprep.mubr.bf16.mxu0 0
        %595 = vmatmul.mubr.bf16.gmra.mrb[0].mxu0 %v487
        %v596 = vpop.f32.mrb[0].mxu0
        %v597 = vadd.f32 0.0, %v596
        %v598 = vpop.f32.mrb[0].mxu0
        %v599 = vadd.f32 0.0, %v598
        %v600 = vpop.f32.mrb[0].mxu0
        %v601 = vadd.f32 0.0, %v600
        %v602 = vpop.f32.mrb[0].mxu0
        %v603 = vadd.f32 0.0, %v602
        %604 = vmatprep.mubr.bf16.mxu0 0
        %605 = vmatmul.mubr.bf16.gmra.mrb[0].mxu0 %v490
        %v606 = vpop.f32.mrb[0].mxu0
        %v607 = vadd.f32 0.0, %v606
        %v608 = vpop.f32.mrb[0].mxu0
        %v609 = vadd.f32 0.0, %v608
        %v610 = vpop.f32.mrb[0].mxu0
        %v611 = vadd.f32 0.0, %v610
        %v612 = vpop.f32.mrb[0].mxu0
        %v613 = vadd.f32 0.0, %v612
        %614 = vmatprep.mubr.bf16.mxu0 0
        %615 = vmatmul.mubr.bf16.gmra.mrb[0].mxu0 %v493
        %v616 = vpop.f32.mrb[0].mxu0
        %v617 = vadd.f32 0.0, %v616
        %v618 = vpop.f32.mrb[0].mxu0
        %v619 = vadd.f32 0.0, %v618
        %v620 = vpop.f32.mrb[0].mxu0
        %v621 = vadd.f32 0.0, %v620
        %v622 = vpop.f32.mrb[0].mxu0
        %v623 = vadd.f32 0.0, %v622
        %624 = vmatprep.mubr.bf16.mxu0 0
        %625 = vmatmul.mubr.bf16.gmra.mrb[0].mxu0 %v496
        %v626 = vpop.f32.mrb[0].mxu0
        %v627 = vadd.f32 0.0, %v626
        %v628 = vpop.f32.mrb[0].mxu0
        %v629 = vadd.f32 0.0, %v628
        %v630 = vpop.f32.mrb[0].mxu0
        %v631 = vadd.f32 0.0, %v630
        %v632 = vpop.f32.mrb[0].mxu0
        %v633 = vadd.f32 0.0, %v632
        %634 = vmatprep.mubr.bf16.mxu0 0
        %635 = vmatmul.mubr.bf16.gmra.mrb[0].mxu0 %v499
        %v636 = vpop.f32.mrb[0].mxu0
        %v637 = vadd.f32 0.0, %v636
        %v638 = vpop.f32.mrb[0].mxu0
        %v639 = vadd.f32 0.0, %v638
        %v640 = vpop.f32.mrb[0].mxu0
        %v641 = vadd.f32 0.0, %v640
        %v642 = vpop.f32.mrb[0].mxu0
        %v643 = vadd.f32 0.0, %v642
        %644 = vmatprep.mubr.bf16.mxu0 0
        %645 = vmatmul.mubr.bf16.gmra.mrb[0].mxu0 %v502
        %v646 = vpop.f32.mrb[0].mxu0
        %v647 = vadd.f32 0.0, %v646
        %v648 = vpop.f32.mrb[0].mxu0
        %v649 = vadd.f32 0.0, %v648
        %v650 = vpop.f32.mrb[0].mxu0
        %v651 = vadd.f32 0.0, %v650
        %v652 = vpop.f32.mrb[0].mxu0
        %v653 = vadd.f32 0.0, %v652
        %654 = vmatprep.mubr.bf16.mxu0 0
        %655 = vmatmul.mubr.bf16.gmra.mrb[0].mxu0 %v505
        %v656 = vpop.f32.mrb[0].mxu0
        %v657 = vadd.f32 0.0, %v656
        %v658 = vpop.f32.mrb[0].mxu0
        %v659 = vadd.f32 0.0, %v658
        %v660 = vpop.f32.mrb[0].mxu0
        %v661 = vadd.f32 0.0, %v660
        %v662 = vpop.f32.mrb[0].mxu0
        %v663 = vadd.f32 0.0, %v662
        %664 = vmatprep.mubr.bf16.mxu0 0
        %665 = vmatmul.mubr.bf16.gmra.mrb[0].mxu0 %v508
        %v666 = vpop.f32.mrb[0].mxu0
        %v667 = vadd.f32 0.0, %v666
        %v668 = vpop.f32.mrb[0].mxu0
        %v669 = vadd.f32 0.0, %v668
        %v670 = vpop.f32.mrb[0].mxu0
        %v671 = vadd.f32 0.0, %v670
        %v672 = vpop.f32.mrb[0].mxu0
        %v673 = vadd.f32 0.0, %v672
        %674 = vmatprep.mubr.bf16.mxu0 0
        %675 = vmatmul.mubr.bf16.gmra.mrb[0].mxu0 %v511
        %v676 = vpop.f32.mrb[0].mxu0
        %v677 = vadd.f32 0.0, %v676
        %v678 = vpop.f32.mrb[0].mxu0
        %v679 = vadd.f32 0.0, %v678
        %v680 = vpop.f32.mrb[0].mxu0
        %v681 = vadd.f32 0.0, %v680
        %v682 = vpop.f32.mrb[0].mxu0
        %v683 = vadd.f32 0.0, %v682
        %684 = vmatprep.mubr.bf16.mxu0 0
        %685 = vmatmul.mubr.bf16.gmra.mrb[0].mxu0 %v514
        %v686 = vpop.f32.mrb[0].mxu0
        %v687 = vadd.f32 0.0, %v686
        %v688 = vpop.f32.mrb[0].mxu0
        %v689 = vadd.f32 0.0, %v688
        %v690 = vpop.f32.mrb[0].mxu0
        %v691 = vadd.f32 0.0, %v690
        %v692 = vpop.f32.mrb[0].mxu0
        %v693 = vadd.f32 0.0, %v692
        %694 = vmatprep.mubr.bf16.mxu0 0
        %695 = vmatmul.mubr.bf16.gmra.mrb[0].mxu0 %v517
        %v696 = vpop.f32.mrb[0].mxu0
        %v697 = vadd.f32 0.0, %v696
        %v698 = vpop.f32.mrb[0].mxu0
        %v699 = vadd.f32 0.0, %v698
        %v700 = vpop.f32.mrb[0].mxu0
        %v701 = vadd.f32 0.0, %v700
        %v702 = vpop.f32.mrb[0].mxu0
        %v703 = vadd.f32 0.0, %v702
        %704 = vmatprep.mubr.bf16.mxu0 0
        %705 = vmatmul.mubr.bf16.gmra.mrb[0].mxu0 %v520
        %v706 = vpop.f32.mrb[0].mxu0
        %v707 = vadd.f32 0.0, %v706
        %v708 = vpop.f32.mrb[0].mxu0
        %v709 = vadd.f32 0.0, %v708
        %v710 = vpop.f32.mrb[0].mxu0
        %v711 = vadd.f32 0.0, %v710
        %v712 = vpop.f32.mrb[0].mxu0
        %v713 = vadd.f32 0.0, %v712
        %714 = vdwg.mxu0
        %715 = vmatprep.subr.bf16.mxu0 %v444
        %716 = vmatpush1.bf16.msra.mxu0 %v443
        %717 = vmatprep.subr.bf16.mxu0 %v452
        %718 = vmatpush1.bf16.msra.mxu0 %v451
        %719 = vmatprep.subr.bf16.mxu0 0
        %720 = vmatpush1.bf16.msra.mxu0 0
        %721 = vmatprep.subr.bf16.mxu0 0
        %722 = vmatpush1.bf16.msra.mxu0 0
        %723 = vmatprep.subr.bf16.mxu0 0
        %724 = vmatpush1.bf16.msra.mxu0 0
        %725 = vmatprep.subr.bf16.mxu0 0
        %726 = vmatpush1.bf16.msra.mxu0 0
        %727 = vmatprep.subr.bf16.mxu0 0
        %728 = vmatpush1.bf16.msra.mxu0 0
        %729 = vmatprep.subr.bf16.mxu0 0
        %730 = vmatpush1.bf16.msra.mxu0 0
        %731 = vmatprep.subr.bf16.mxu0 0
        %732 = vmatpush1.bf16.msra.mxu0 0
        %733 = vmatprep.subr.bf16.mxu0 0
        %734 = vmatpush1.bf16.msra.mxu0 0
        %735 = vmatprep.subr.bf16.mxu0 0
        %736 = vmatpush1.bf16.msra.mxu0 0
        %737 = vmatprep.subr.bf16.mxu0 0
        %738 = vmatpush1.bf16.msra.mxu0 0
        %739 = vmatprep.subr.bf16.mxu0 0
        %740 = vmatpush1.bf16.msra.mxu0 0
        %741 = vmatprep.subr.bf16.mxu0 0
        %742 = vmatpush1.bf16.msra.mxu0 0
        %743 = vmatprep.subr.bf16.mxu0 0
        %744 = vmatpush1.bf16.msra.mxu0 0
        %745 = vmatprep.subr.bf16.mxu0 0
        %746 = vmatpush1.bf16.msra.mxu0 0
        %747 = vmatprep.mubr.bf16.mxu0 0
        %748 = vmatmul.mubr.bf16.gmra.mrb[0].mxu0 %v475
        %v749 = vpop.f32.mrb[0].mxu0
        %v750 = vadd.f32 0.0, %v749
        %v751 = vpop.f32.mrb[0].mxu0
        %v752 = vadd.f32 0.0, %v751
        %v753 = vpop.f32.mrb[0].mxu0
        %v754 = vadd.f32 0.0, %v753
        %v755 = vpop.f32.mrb[0].mxu0
        %v756 = vadd.f32 0.0, %v755
        %757 = vmatprep.mubr.bf16.mxu0 0
        %758 = vmatmul.mubr.bf16.gmra.mrb[0].mxu0 %v478
        %v759 = vpop.f32.mrb[0].mxu0
        %v760 = vadd.f32 0.0, %v759
        %v761 = vpop.f32.mrb[0].mxu0
        %v762 = vadd.f32 0.0, %v761
        %v763 = vpop.f32.mrb[0].mxu0
        %v764 = vadd.f32 0.0, %v763
        %v765 = vpop.f32.mrb[0].mxu0
        %v766 = vadd.f32 0.0, %v765
        %767 = vmatprep.mubr.bf16.mxu0 0
        %768 = vmatmul.mubr.bf16.gmra.mrb[0].mxu0 %v481
        %v769 = vpop.f32.mrb[0].mxu0
        %v770 = vadd.f32 0.0, %v769
        %v771 = vpop.f32.mrb[0].mxu0
        %v772 = vadd.f32 0.0, %v771
        %v773 = vpop.f32.mrb[0].mxu0
        %v774 = vadd.f32 0.0, %v773
        %v775 = vpop.f32.mrb[0].mxu0
        %v776 = vadd.f32 0.0, %v775
        %777 = vmatprep.mubr.bf16.mxu0 0
        %778 = vmatmul.mubr.bf16.gmra.mrb[0].mxu0 %v484
        %v779 = vpop.f32.mrb[0].mxu0
        %v780 = vadd.f32 0.0, %v779
        %v781 = vpop.f32.mrb[0].mxu0
        %v782 = vadd.f32 0.0, %v781
        %v783 = vpop.f32.mrb[0].mxu0
        %v784 = vadd.f32 0.0, %v783
        %v785 = vpop.f32.mrb[0].mxu0
        %v786 = vadd.f32 0.0, %v785
        %787 = vmatprep.mubr.bf16.mxu0 0
        %788 = vmatmul.mubr.bf16.gmra.mrb[0].mxu0 %v487
        %v789 = vpop.f32.mrb[0].mxu0
        %v790 = vadd.f32 0.0, %v789
        %v791 = vpop.f32.mrb[0].mxu0
        %v792 = vadd.f32 0.0, %v791
        %v793 = vpop.f32.mrb[0].mxu0
        %v794 = vadd.f32 0.0, %v793
        %v795 = vpop.f32.mrb[0].mxu0
        %v796 = vadd.f32 0.0, %v795
        %797 = vmatprep.mubr.bf16.mxu0 0
        %798 = vmatmul.mubr.bf16.gmra.mrb[0].mxu0 %v490
        %v799 = vpop.f32.mrb[0].mxu0
        %v800 = vadd.f32 0.0, %v799
        %v801 = vpop.f32.mrb[0].mxu0
        %v802 = vadd.f32 0.0, %v801
        %v803 = vpop.f32.mrb[0].mxu0
        %v804 = vadd.f32 0.0, %v803
        %v805 = vpop.f32.mrb[0].mxu0
        %v806 = vadd.f32 0.0, %v805
        %807 = vmatprep.mubr.bf16.mxu0 0
        %808 = vmatmul.mubr.bf16.gmra.mrb[0].mxu0 %v493
        %v809 = vpop.f32.mrb[0].mxu0
        %v810 = vadd.f32 0.0, %v809
        %v811 = vpop.f32.mrb[0].mxu0
        %v812 = vadd.f32 0.0, %v811
        %v813 = vpop.f32.mrb[0].mxu0
        %v814 = vadd.f32 0.0, %v813
        %v815 = vpop.f32.mrb[0].mxu0
        %v816 = vadd.f32 0.0, %v815
        %817 = vmatprep.mubr.bf16.mxu0 0
        %818 = vmatmul.mubr.bf16.gmra.mrb[0].mxu0 %v496
        %v819 = vpop.f32.mrb[0].mxu0
        %v820 = vadd.f32 0.0, %v819
        %v821 = vpop.f32.mrb[0].mxu0
        %v822 = vadd.f32 0.0, %v821
        %v823 = vpop.f32.mrb[0].mxu0
        %v824 = vadd.f32 0.0, %v823
        %v825 = vpop.f32.mrb[0].mxu0
        %v826 = vadd.f32 0.0, %v825
        %827 = vmatprep.mubr.bf16.mxu0 0
        %828 = vmatmul.mubr.bf16.gmra.mrb[0].mxu0 %v499
        %v829 = vpop.f32.mrb[0].mxu0
        %v830 = vadd.f32 0.0, %v829
        %v831 = vpop.f32.mrb[0].mxu0
        %v832 = vadd.f32 0.0, %v831
        %v833 = vpop.f32.mrb[0].mxu0
        %v834 = vadd.f32 0.0, %v833
        %v835 = vpop.f32.mrb[0].mxu0
        %v836 = vadd.f32 0.0, %v835
        %837 = vmatprep.mubr.bf16.mxu0 0
        %838 = vmatmul.mubr.bf16.gmra.mrb[0].mxu0 %v502
        %v839 = vpop.f32.mrb[0].mxu0
        %v840 = vadd.f32 0.0, %v839
        %v841 = vpop.f32.mrb[0].mxu0
        %v842 = vadd.f32 0.0, %v841
        %v843 = vpop.f32.mrb[0].mxu0
        %v844 = vadd.f32 0.0, %v843
        %v845 = vpop.f32.mrb[0].mxu0
        %v846 = vadd.f32 0.0, %v845
        %847 = vmatprep.mubr.bf16.mxu0 0
        %848 = vmatmul.mubr.bf16.gmra.mrb[0].mxu0 %v505
        %v849 = vpop.f32.mrb[0].mxu0
        %v850 = vadd.f32 0.0, %v849
        %v851 = vpop.f32.mrb[0].mxu0
        %v852 = vadd.f32 0.0, %v851
        %v853 = vpop.f32.mrb[0].mxu0
        %v854 = vadd.f32 0.0, %v853
        %v855 = vpop.f32.mrb[0].mxu0
        %v856 = vadd.f32 0.0, %v855
        %857 = vmatprep.mubr.bf16.mxu0 0
        %858 = vmatmul.mubr.bf16.gmra.mrb[0].mxu0 %v508
        %v859 = vpop.f32.mrb[0].mxu0
        %v860 = vadd.f32 0.0, %v859
        %v861 = vpop.f32.mrb[0].mxu0
        %v862 = vadd.f32 0.0, %v861
        %v863 = vpop.f32.mrb[0].mxu0
        %v864 = vadd.f32 0.0, %v863
        %v865 = vpop.f32.mrb[0].mxu0
        %v866 = vadd.f32 0.0, %v865
        %867 = vmatprep.mubr.bf16.mxu0 0
        %868 = vmatmul.mubr.bf16.gmra.mrb[0].mxu0 %v511
        %v869 = vpop.f32.mrb[0].mxu0
        %v870 = vadd.f32 0.0, %v869
        %v871 = vpop.f32.mrb[0].mxu0
        %v872 = vadd.f32 0.0, %v871
        %v873 = vpop.f32.mrb[0].mxu0
        %v874 = vadd.f32 0.0, %v873
        %v875 = vpop.f32.mrb[0].mxu0
        %v876 = vadd.f32 0.0, %v875
        %877 = vmatprep.mubr.bf16.mxu0 0
        %878 = vmatmul.mubr.bf16.gmra.mrb[0].mxu0 %v514
        %v879 = vpop.f32.mrb[0].mxu0
        %v880 = vadd.f32 0.0, %v879
        %v881 = vpop.f32.mrb[0].mxu0
        %v882 = vadd.f32 0.0, %v881
        %v883 = vpop.f32.mrb[0].mxu0
        %v884 = vadd.f32 0.0, %v883
        %v885 = vpop.f32.mrb[0].mxu0
        %v886 = vadd.f32 0.0, %v885
        %887 = vmatprep.mubr.bf16.mxu0 0
        %888 = vmatmul.mubr.bf16.gmra.mrb[0].mxu0 %v517
        %v889 = vpop.f32.mrb[0].mxu0
        %v890 = vadd.f32 0.0, %v889
        %v891 = vpop.f32.mrb[0].mxu0
        %v892 = vadd.f32 0.0, %v891
        %v893 = vpop.f32.mrb[0].mxu0
        %v894 = vadd.f32 0.0, %v893
        %v895 = vpop.f32.mrb[0].mxu0
        %v896 = vadd.f32 0.0, %v895
        %897 = vmatprep.mubr.bf16.mxu0 0
        %898 = vmatmul.mubr.bf16.gmra.mrb[0].mxu0 %v520
        %v899 = vpop.f32.mrb[0].mxu0
        %v900 = vadd.f32 0.0, %v899
        %v901 = vpop.f32.mrb[0].mxu0
        %v902 = vadd.f32 0.0, %v901
        %v903 = vpop.f32.mrb[0].mxu0
        %v904 = vadd.f32 0.0, %v903
        %v905 = vpop.f32.mrb[0].mxu0
        %v906 = vadd.f32 0.0, %v905
        %907 = vdwg.mxu0
        %908 = vmatprep.subr.bf16.mxu0 %v446
        %909 = vmatpush1.bf16.msra.mxu0 %v445
        %910 = vmatprep.subr.bf16.mxu0 %v454
        %911 = vmatpush1.bf16.msra.mxu0 %v453
        %912 = vmatprep.subr.bf16.mxu0 0
        %913 = vmatpush1.bf16.msra.mxu0 0
        %914 = vmatprep.subr.bf16.mxu0 0
        %915 = vmatpush1.bf16.msra.mxu0 0
        %916 = vmatprep.subr.bf16.mxu0 0
        %917 = vmatpush1.bf16.msra.mxu0 0
        %918 = vmatprep.subr.bf16.mxu0 0
        %919 = vmatpush1.bf16.msra.mxu0 0
        %920 = vmatprep.subr.bf16.mxu0 0
        %921 = vmatpush1.bf16.msra.mxu0 0
        %922 = vmatprep.subr.bf16.mxu0 0
        %923 = vmatpush1.bf16.msra.mxu0 0
        %924 = vmatprep.subr.bf16.mxu0 0
        %925 = vmatpush1.bf16.msra.mxu0 0
        %926 = vmatprep.subr.bf16.mxu0 0
        %927 = vmatpush1.bf16.msra.mxu0 0
        %928 = vmatprep.subr.bf16.mxu0 0
        %929 = vmatpush1.bf16.msra.mxu0 0
        %930 = vmatprep.subr.bf16.mxu0 0
        %931 = vmatpush1.bf16.msra.mxu0 0
        %932 = vmatprep.subr.bf16.mxu0 0
        %933 = vmatpush1.bf16.msra.mxu0 0
        %934 = vmatprep.subr.bf16.mxu0 0
        %935 = vmatpush1.bf16.msra.mxu0 0
        %936 = vmatprep.subr.bf16.mxu0 0
        %937 = vmatpush1.bf16.msra.mxu0 0
        %938 = vmatprep.subr.bf16.mxu0 0
        %939 = vmatpush1.bf16.msra.mxu0 0
        %940 = vmatprep.mubr.bf16.mxu0 0
        %941 = vmatmul.mubr.bf16.gmra.mrb[0].mxu0 %v475
        %v942 = vpop.f32.mrb[0].mxu0
        %v943 = vadd.f32 0.0, %v942
        %v944 = vpop.f32.mrb[0].mxu0
        %v945 = vadd.f32 0.0, %v944
        %v946 = vpop.f32.mrb[0].mxu0
        %v947 = vadd.f32 0.0, %v946
        %v948 = vpop.f32.mrb[0].mxu0
        %v949 = vadd.f32 0.0, %v948
        %950 = vmatprep.mubr.bf16.mxu0 0
        %951 = vmatmul.mubr.bf16.gmra.mrb[0].mxu0 %v478
        %v952 = vpop.f32.mrb[0].mxu0
        %v953 = vadd.f32 0.0, %v952
        %v954 = vpop.f32.mrb[0].mxu0
        %v955 = vadd.f32 0.0, %v954
        %v956 = vpop.f32.mrb[0].mxu0
        %v957 = vadd.f32 0.0, %v956
        %v958 = vpop.f32.mrb[0].mxu0
        %v959 = vadd.f32 0.0, %v958
        %960 = vmatprep.mubr.bf16.mxu0 0
        %961 = vmatmul.mubr.bf16.gmra.mrb[0].mxu0 %v481
        %v962 = vpop.f32.mrb[0].mxu0
        %v963 = vadd.f32 0.0, %v962
        %v964 = vpop.f32.mrb[0].mxu0
        %v965 = vadd.f32 0.0, %v964
        %v966 = vpop.f32.mrb[0].mxu0
        %v967 = vadd.f32 0.0, %v966
        %v968 = vpop.f32.mrb[0].mxu0
        %v969 = vadd.f32 0.0, %v968
        %970 = vmatprep.mubr.bf16.mxu0 0
        %971 = vmatmul.mubr.bf16.gmra.mrb[0].mxu0 %v484
        %v972 = vpop.f32.mrb[0].mxu0
        %v973 = vadd.f32 0.0, %v972
        %v974 = vpop.f32.mrb[0].mxu0
        %v975 = vadd.f32 0.0, %v974
        %v976 = vpop.f32.mrb[0].mxu0
        %v977 = vadd.f32 0.0, %v976
        %v978 = vpop.f32.mrb[0].mxu0
        %v979 = vadd.f32 0.0, %v978
        %980 = vmatprep.mubr.bf16.mxu0 0
        %981 = vmatmul.mubr.bf16.gmra.mrb[0].mxu0 %v487
        %v982 = vpop.f32.mrb[0].mxu0
        %v983 = vadd.f32 0.0, %v982
        %v984 = vpop.f32.mrb[0].mxu0
        %v985 = vadd.f32 0.0, %v984
        %v986 = vpop.f32.mrb[0].mxu0
        %v987 = vadd.f32 0.0, %v986
        %v988 = vpop.f32.mrb[0].mxu0
        %v989 = vadd.f32 0.0, %v988
        %990 = vmatprep.mubr.bf16.mxu0 0
        %991 = vmatmul.mubr.bf16.gmra.mrb[0].mxu0 %v490
        %v992 = vpop.f32.mrb[0].mxu0
        %v993 = vadd.f32 0.0, %v992
        %v994 = vpop.f32.mrb[0].mxu0
        %v995 = vadd.f32 0.0, %v994
        %v996 = vpop.f32.mrb[0].mxu0
        %v997 = vadd.f32 0.0, %v996
        %v998 = vpop.f32.mrb[0].mxu0
        %v999 = vadd.f32 0.0, %v998
        %1000 = vmatprep.mubr.bf16.mxu0 0
        %1001 = vmatmul.mubr.bf16.gmra.mrb[0].mxu0 %v493
        %v1002 = vpop.f32.mrb[0].mxu0
        %v1003 = vadd.f32 0.0, %v1002
        %v1004 = vpop.f32.mrb[0].mxu0
        %v1005 = vadd.f32 0.0, %v1004
        %v1006 = vpop.f32.mrb[0].mxu0
        %v1007 = vadd.f32 0.0, %v1006
        %v1008 = vpop.f32.mrb[0].mxu0
        %v1009 = vadd.f32 0.0, %v1008
        %1010 = vmatprep.mubr.bf16.mxu0 0
        %1011 = vmatmul.mubr.bf16.gmra.mrb[0].mxu0 %v496
        %v1012 = vpop.f32.mrb[0].mxu0
        %v1013 = vadd.f32 0.0, %v1012
        %v1014 = vpop.f32.mrb[0].mxu0
        %v1015 = vadd.f32 0.0, %v1014
        %v1016 = vpop.f32.mrb[0].mxu0
        %v1017 = vadd.f32 0.0, %v1016
        %v1018 = vpop.f32.mrb[0].mxu0
        %v1019 = vadd.f32 0.0, %v1018
        %1020 = vmatprep.mubr.bf16.mxu0 0
        %1021 = vmatmul.mubr.bf16.gmra.mrb[0].mxu0 %v499
        %v1022 = vpop.f32.mrb[0].mxu0
        %v1023 = vadd.f32 0.0, %v1022
        %v1024 = vpop.f32.mrb[0].mxu0
        %v1025 = vadd.f32 0.0, %v1024
        %v1026 = vpop.f32.mrb[0].mxu0
        %v1027 = vadd.f32 0.0, %v1026
        %v1028 = vpop.f32.mrb[0].mxu0
        %v1029 = vadd.f32 0.0, %v1028
        %1030 = vmatprep.mubr.bf16.mxu0 0
        %1031 = vmatmul.mubr.bf16.gmra.mrb[0].mxu0 %v502
        %v1032 = vpop.f32.mrb[0].mxu0
        %v1033 = vadd.f32 0.0, %v1032
        %v1034 = vpop.f32.mrb[0].mxu0
        %v1035 = vadd.f32 0.0, %v1034
        %v1036 = vpop.f32.mrb[0].mxu0
        %v1037 = vadd.f32 0.0, %v1036
        %v1038 = vpop.f32.mrb[0].mxu0
        %v1039 = vadd.f32 0.0, %v1038
        %1040 = vmatprep.mubr.bf16.mxu0 0
        %1041 = vmatmul.mubr.bf16.gmra.mrb[0].mxu0 %v505
        %v1042 = vpop.f32.mrb[0].mxu0
        %v1043 = vadd.f32 0.0, %v1042
        %v1044 = vpop.f32.mrb[0].mxu0
        %v1045 = vadd.f32 0.0, %v1044
        %v1046 = vpop.f32.mrb[0].mxu0
        %v1047 = vadd.f32 0.0, %v1046
        %v1048 = vpop.f32.mrb[0].mxu0
        %v1049 = vadd.f32 0.0, %v1048
        %1050 = vmatprep.mubr.bf16.mxu0 0
        %1051 = vmatmul.mubr.bf16.gmra.mrb[0].mxu0 %v508
        %v1052 = vpop.f32.mrb[0].mxu0
        %v1053 = vadd.f32 0.0, %v1052
        %v1054 = vpop.f32.mrb[0].mxu0
        %v1055 = vadd.f32 0.0, %v1054
        %v1056 = vpop.f32.mrb[0].mxu0
        %v1057 = vadd.f32 0.0, %v1056
        %v1058 = vpop.f32.mrb[0].mxu0
        %v1059 = vadd.f32 0.0, %v1058
        %1060 = vmatprep.mubr.bf16.mxu0 0
        %1061 = vmatmul.mubr.bf16.gmra.mrb[0].mxu0 %v511
        %v1062 = vpop.f32.mrb[0].mxu0
        %v1063 = vadd.f32 0.0, %v1062
        %v1064 = vpop.f32.mrb[0].mxu0
        %v1065 = vadd.f32 0.0, %v1064
        %v1066 = vpop.f32.mrb[0].mxu0
        %v1067 = vadd.f32 0.0, %v1066
        %v1068 = vpop.f32.mrb[0].mxu0
        %v1069 = vadd.f32 0.0, %v1068
        %1070 = vmatprep.mubr.bf16.mxu0 0
        %1071 = vmatmul.mubr.bf16.gmra.mrb[0].mxu0 %v514
        %v1072 = vpop.f32.mrb[0].mxu0
        %v1073 = vadd.f32 0.0, %v1072
        %v1074 = vpop.f32.mrb[0].mxu0
        %v1075 = vadd.f32 0.0, %v1074
        %v1076 = vpop.f32.mrb[0].mxu0
        %v1077 = vadd.f32 0.0, %v1076
        %v1078 = vpop.f32.mrb[0].mxu0
        %v1079 = vadd.f32 0.0, %v1078
        %1080 = vmatprep.mubr.bf16.mxu0 0
        %1081 = vmatmul.mubr.bf16.gmra.mrb[0].mxu0 %v517
        %v1082 = vpop.f32.mrb[0].mxu0
        %v1083 = vadd.f32 0.0, %v1082
        %v1084 = vpop.f32.mrb[0].mxu0
        %v1085 = vadd.f32 0.0, %v1084
        %v1086 = vpop.f32.mrb[0].mxu0
        %v1087 = vadd.f32 0.0, %v1086
        %v1088 = vpop.f32.mrb[0].mxu0
        %v1089 = vadd.f32 0.0, %v1088
        %1090 = vmatprep.mubr.bf16.mxu0 0
        %1091 = vmatmul.mubr.bf16.gmra.mrb[0].mxu0 %v520
        %v1092 = vpop.f32.mrb[0].mxu0
        %v1093 = vadd.f32 0.0, %v1092
        %v1094 = vpop.f32.mrb[0].mxu0
        %v1095 = vadd.f32 0.0, %v1094
        %v1096 = vpop.f32.mrb[0].mxu0
        %v1097 = vadd.f32 0.0, %v1096
        %v1098 = vpop.f32.mrb[0].mxu0
        %v1099 = vadd.f32 0.0, %v1098
        %1100 = vdwg.mxu0
        %1101 = vmatprep.subr.bf16.mxu0 %v448
        %1102 = vmatpush1.bf16.msra.mxu0 %v447
        %1103 = vmatprep.subr.bf16.mxu0 %v456
        %1104 = vmatpush1.bf16.msra.mxu0 %v455
        %1105 = vmatprep.subr.bf16.mxu0 0
        %1106 = vmatpush1.bf16.msra.mxu0 0
        %1107 = vmatprep.subr.bf16.mxu0 0
        %1108 = vmatpush1.bf16.msra.mxu0 0
        %1109 = vmatprep.subr.bf16.mxu0 0
        %1110 = vmatpush1.bf16.msra.mxu0 0
        %1111 = vmatprep.subr.bf16.mxu0 0
        %1112 = vmatpush1.bf16.msra.mxu0 0
        %1113 = vmatprep.subr.bf16.mxu0 0
        %1114 = vmatpush1.bf16.msra.mxu0 0
        %1115 = vmatprep.subr.bf16.mxu0 0
        %1116 = vmatpush1.bf16.msra.mxu0 0
        %1117 = vmatprep.subr.bf16.mxu0 0
        %1118 = vmatpush1.bf16.msra.mxu0 0
        %1119 = vmatprep.subr.bf16.mxu0 0
        %1120 = vmatpush1.bf16.msra.mxu0 0
        %1121 = vmatprep.subr.bf16.mxu0 0
        %1122 = vmatpush1.bf16.msra.mxu0 0
        %1123 = vmatprep.subr.bf16.mxu0 0
        %1124 = vmatpush1.bf16.msra.mxu0 0
        %1125 = vmatprep.subr.bf16.mxu0 0
        %1126 = vmatpush1.bf16.msra.mxu0 0
        %1127 = vmatprep.subr.bf16.mxu0 0
        %1128 = vmatpush1.bf16.msra.mxu0 0
        %1129 = vmatprep.subr.bf16.mxu0 0
        %1130 = vmatpush1.bf16.msra.mxu0 0
        %1131 = vmatprep.subr.bf16.mxu0 0
        %1132 = vmatpush1.bf16.msra.mxu0 0
        %1133 = vmatprep.mubr.bf16.mxu0 0
        %1134 = vmatmul.mubr.bf16.gmra.mrb[0].mxu0 %v475
        %v1135 = vpop.f32.mrb[0].mxu0
        %v1136 = vadd.f32 0.0, %v1135
        %v1137 = vpop.f32.mrb[0].mxu0
        %v1138 = vadd.f32 0.0, %v1137
        %v1139 = vpop.f32.mrb[0].mxu0
        %v1140 = vadd.f32 0.0, %v1139
        %v1141 = vpop.f32.mrb[0].mxu0
        %v1142 = vadd.f32 0.0, %v1141
        %1143 = vmatprep.mubr.bf16.mxu0 0
        %1144 = vmatmul.mubr.bf16.gmra.mrb[0].mxu0 %v478
        %v1145 = vpop.f32.mrb[0].mxu0
        %v1146 = vadd.f32 0.0, %v1145
        %v1147 = vpop.f32.mrb[0].mxu0
        %v1148 = vadd.f32 0.0, %v1147
        %v1149 = vpop.f32.mrb[0].mxu0
        %v1150 = vadd.f32 0.0, %v1149
        %v1151 = vpop.f32.mrb[0].mxu0
        %v1152 = vadd.f32 0.0, %v1151
        %1153 = vmatprep.mubr.bf16.mxu0 0
        %1154 = vmatmul.mubr.bf16.gmra.mrb[0].mxu0 %v481
        %v1155 = vpop.f32.mrb[0].mxu0
        %v1156 = vadd.f32 0.0, %v1155
        %v1157 = vpop.f32.mrb[0].mxu0
        %v1158 = vadd.f32 0.0, %v1157
        %v1159 = vpop.f32.mrb[0].mxu0
        %v1160 = vadd.f32 0.0, %v1159
        %v1161 = vpop.f32.mrb[0].mxu0
        %v1162 = vadd.f32 0.0, %v1161
        %1163 = vmatprep.mubr.bf16.mxu0 0
        %1164 = vmatmul.mubr.bf16.gmra.mrb[0].mxu0 %v484
        %v1165 = vpop.f32.mrb[0].mxu0
        %v1166 = vadd.f32 0.0, %v1165
        %v1167 = vpop.f32.mrb[0].mxu0
        %v1168 = vadd.f32 0.0, %v1167
        %v1169 = vpop.f32.mrb[0].mxu0
        %v1170 = vadd.f32 0.0, %v1169
        %v1171 = vpop.f32.mrb[0].mxu0
        %v1172 = vadd.f32 0.0, %v1171
        %1173 = vmatprep.mubr.bf16.mxu0 0
        %1174 = vmatmul.mubr.bf16.gmra.mrb[0].mxu0 %v487
        %v1175 = vpop.f32.mrb[0].mxu0
        %v1176 = vadd.f32 0.0, %v1175
        %v1177 = vpop.f32.mrb[0].mxu0
        %v1178 = vadd.f32 0.0, %v1177
        %v1179 = vpop.f32.mrb[0].mxu0
        %v1180 = vadd.f32 0.0, %v1179
        %v1181 = vpop.f32.mrb[0].mxu0
        %v1182 = vadd.f32 0.0, %v1181
        %1183 = vmatprep.mubr.bf16.mxu0 0
        %1184 = vmatmul.mubr.bf16.gmra.mrb[0].mxu0 %v490
        %v1185 = vpop.f32.mrb[0].mxu0
        %v1186 = vadd.f32 0.0, %v1185
        %v1187 = vpop.f32.mrb[0].mxu0
        %v1188 = vadd.f32 0.0, %v1187
        %v1189 = vpop.f32.mrb[0].mxu0
        %v1190 = vadd.f32 0.0, %v1189
        %v1191 = vpop.f32.mrb[0].mxu0
        %v1192 = vadd.f32 0.0, %v1191
        %1193 = vmatprep.mubr.bf16.mxu0 0
        %1194 = vmatmul.mubr.bf16.gmra.mrb[0].mxu0 %v493
        %v1195 = vpop.f32.mrb[0].mxu0
        %v1196 = vadd.f32 0.0, %v1195
        %v1197 = vpop.f32.mrb[0].mxu0
        %v1198 = vadd.f32 0.0, %v1197
        %v1199 = vpop.f32.mrb[0].mxu0
        %v1200 = vadd.f32 0.0, %v1199
        %v1201 = vpop.f32.mrb[0].mxu0
        %v1202 = vadd.f32 0.0, %v1201
        %1203 = vmatprep.mubr.bf16.mxu0 0
        %1204 = vmatmul.mubr.bf16.gmra.mrb[0].mxu0 %v496
        %v1205 = vpop.f32.mrb[0].mxu0
        %v1206 = vadd.f32 0.0, %v1205
        %v1207 = vpop.f32.mrb[0].mxu0
        %v1208 = vadd.f32 0.0, %v1207
        %v1209 = vpop.f32.mrb[0].mxu0
        %v1210 = vadd.f32 0.0, %v1209
        %v1211 = vpop.f32.mrb[0].mxu0
        %v1212 = vadd.f32 0.0, %v1211
        %1213 = vmatprep.mubr.bf16.mxu0 0
        %1214 = vmatmul.mubr.bf16.gmra.mrb[0].mxu0 %v499
        %v1215 = vpop.f32.mrb[0].mxu0
        %v1216 = vadd.f32 0.0, %v1215
        %v1217 = vpop.f32.mrb[0].mxu0
        %v1218 = vadd.f32 0.0, %v1217
        %v1219 = vpop.f32.mrb[0].mxu0
        %v1220 = vadd.f32 0.0, %v1219
        %v1221 = vpop.f32.mrb[0].mxu0
        %v1222 = vadd.f32 0.0, %v1221
        %1223 = vmatprep.mubr.bf16.mxu0 0
        %1224 = vmatmul.mubr.bf16.gmra.mrb[0].mxu0 %v502
        %v1225 = vpop.f32.mrb[0].mxu0
        %v1226 = vadd.f32 0.0, %v1225
        %v1227 = vpop.f32.mrb[0].mxu0
        %v1228 = vadd.f32 0.0, %v1227
        %v1229 = vpop.f32.mrb[0].mxu0
        %v1230 = vadd.f32 0.0, %v1229
        %v1231 = vpop.f32.mrb[0].mxu0
        %v1232 = vadd.f32 0.0, %v1231
        %1233 = vmatprep.mubr.bf16.mxu0 0
        %1234 = vmatmul.mubr.bf16.gmra.mrb[0].mxu0 %v505
        %v1235 = vpop.f32.mrb[0].mxu0
        %v1236 = vadd.f32 0.0, %v1235
        %v1237 = vpop.f32.mrb[0].mxu0
        %v1238 = vadd.f32 0.0, %v1237
        %v1239 = vpop.f32.mrb[0].mxu0
        %v1240 = vadd.f32 0.0, %v1239
        %v1241 = vpop.f32.mrb[0].mxu0
        %v1242 = vadd.f32 0.0, %v1241
        %1243 = vmatprep.mubr.bf16.mxu0 0
        %1244 = vmatmul.mubr.bf16.gmra.mrb[0].mxu0 %v508
        %v1245 = vpop.f32.mrb[0].mxu0
        %v1246 = vadd.f32 0.0, %v1245
        %v1247 = vpop.f32.mrb[0].mxu0
        %v1248 = vadd.f32 0.0, %v1247
        %v1249 = vpop.f32.mrb[0].mxu0
        %v1250 = vadd.f32 0.0, %v1249
        %v1251 = vpop.f32.mrb[0].mxu0
        %v1252 = vadd.f32 0.0, %v1251
        %1253 = vmatprep.mubr.bf16.mxu0 0
        %1254 = vmatmul.mubr.bf16.gmra.mrb[0].mxu0 %v511
        %v1255 = vpop.f32.mrb[0].mxu0
        %v1256 = vadd.f32 0.0, %v1255
        %v1257 = vpop.f32.mrb[0].mxu0
        %v1258 = vadd.f32 0.0, %v1257
        %v1259 = vpop.f32.mrb[0].mxu0
        %v1260 = vadd.f32 0.0, %v1259
        %v1261 = vpop.f32.mrb[0].mxu0
        %v1262 = vadd.f32 0.0, %v1261
        %1263 = vmatprep.mubr.bf16.mxu0 0
        %1264 = vmatmul.mubr.bf16.gmra.mrb[0].mxu0 %v514
        %v1265 = vpop.f32.mrb[0].mxu0
        %v1266 = vadd.f32 0.0, %v1265
        %v1267 = vpop.f32.mrb[0].mxu0
        %v1268 = vadd.f32 0.0, %v1267
        %v1269 = vpop.f32.mrb[0].mxu0
        %v1270 = vadd.f32 0.0, %v1269
        %v1271 = vpop.f32.mrb[0].mxu0
        %v1272 = vadd.f32 0.0, %v1271
        %1273 = vmatprep.mubr.bf16.mxu0 0
        %1274 = vmatmul.mubr.bf16.gmra.mrb[0].mxu0 %v517
        %v1275 = vpop.f32.mrb[0].mxu0
        %v1276 = vadd.f32 0.0, %v1275
        %v1277 = vpop.f32.mrb[0].mxu0
        %v1278 = vadd.f32 0.0, %v1277
        %v1279 = vpop.f32.mrb[0].mxu0
        %v1280 = vadd.f32 0.0, %v1279
        %v1281 = vpop.f32.mrb[0].mxu0
        %v1282 = vadd.f32 0.0, %v1281
        %1283 = vmatprep.mubr.bf16.mxu0 0
        %1284 = vmatmul.mubr.bf16.gmra.mrb[0].mxu0 %v520
        %v1285 = vpop.f32.mrb[0].mxu0
        %v1286 = vadd.f32 0.0, %v1285
        %v1287 = vpop.f32.mrb[0].mxu0
        %v1288 = vadd.f32 0.0, %v1287
        %v1289 = vpop.f32.mrb[0].mxu0
        %v1290 = vadd.f32 0.0, %v1289
        %v1291 = vpop.f32.mrb[0].mxu0
        %v1292 = vadd.f32 0.0, %v1291
        %1293 = vdwg.mxu0
        %v1294 = vmax.f32 %v557, 0.0
        %v1295 = vmax.f32 %v559, 0.0
        %v1296 = vmax.f32 %v750, 0.0
        %v1297 = vmax.f32 %v752, 0.0
        %v1298 = vmax.f32 %v943, 0.0
        %v1299 = vmax.f32 %v945, 0.0
        %v1300 = vmax.f32 %v1136, 0.0
        %v1301 = vmax.f32 %v1138, 0.0
        %v1302 = vmax.f32 %v561, 0.0
        %v1303 = vmax.f32 %v563, 0.0
        %v1304 = vmax.f32 %v754, 0.0
        %v1305 = vmax.f32 %v756, 0.0
        %v1306 = vmax.f32 %v947, 0.0
        %v1307 = vmax.f32 %v949, 0.0
        %v1308 = vmax.f32 %v1140, 0.0
        %v1309 = vmax.f32 %v1142, 0.0
        %v1310 = vmax.f32 %v567, 0.0
        %v1311 = vmax.f32 %v569, 0.0
        %v1312 = vmax.f32 %v760, 0.0
        %v1313 = vmax.f32 %v762, 0.0
        %v1314 = vmax.f32 %v953, 0.0
        %v1315 = vmax.f32 %v955, 0.0
        %v1316 = vmax.f32 %v1146, 0.0
        %v1317 = vmax.f32 %v1148, 0.0
        %v1318 = vmax.f32 %v571, 0.0
        %v1319 = vmax.f32 %v573, 0.0
        %v1320 = vmax.f32 %v764, 0.0
        %v1321 = vmax.f32 %v766, 0.0
        %v1322 = vmax.f32 %v957, 0.0
        %v1323 = vmax.f32 %v959, 0.0
        %v1324 = vmax.f32 %v1150, 0.0
        %v1325 = vmax.f32 %v1152, 0.0
        %v1326 = vmax.f32 %v577, 0.0
        %v1327 = vmax.f32 %v579, 0.0
        %v1328 = vmax.f32 %v770, 0.0
        %v1329 = vmax.f32 %v772, 0.0
        %v1330 = vmax.f32 %v963, 0.0
        %v1331 = vmax.f32 %v965, 0.0
        %v1332 = vmax.f32 %v1156, 0.0
        %v1333 = vmax.f32 %v1158, 0.0
        %v1334 = vmax.f32 %v581, 0.0
        %v1335 = vmax.f32 %v583, 0.0
        %v1336 = vmax.f32 %v774, 0.0
        %v1337 = vmax.f32 %v776, 0.0
        %v1338 = vmax.f32 %v967, 0.0
        %v1339 = vmax.f32 %v969, 0.0
        %v1340 = vmax.f32 %v1160, 0.0
        %v1341 = vmax.f32 %v1162, 0.0
        %v1342 = vmax.f32 %v587, 0.0
        %v1343 = vmax.f32 %v589, 0.0
        %v1344 = vmax.f32 %v780, 0.0
        %v1345 = vmax.f32 %v782, 0.0
        %v1346 = vmax.f32 %v973, 0.0
        %v1347 = vmax.f32 %v975, 0.0
        %v1348 = vmax.f32 %v1166, 0.0
        %v1349 = vmax.f32 %v1168, 0.0
        %v1350 = vmax.f32 %v591, 0.0
        %v1351 = vmax.f32 %v593, 0.0
        %v1352 = vmax.f32 %v784, 0.0
        %v1353 = vmax.f32 %v786, 0.0
        %v1354 = vmax.f32 %v977, 0.0
        %v1355 = vmax.f32 %v979, 0.0
        %v1356 = vmax.f32 %v1170, 0.0
        %v1357 = vmax.f32 %v1172, 0.0
        %v1358 = vmax.f32 %v597, 0.0
        %v1359 = vmax.f32 %v599, 0.0
        %v1360 = vmax.f32 %v790, 0.0
        %v1361 = vmax.f32 %v792, 0.0
        %v1362 = vmax.f32 %v983, 0.0
        %v1363 = vmax.f32 %v985, 0.0
        %v1364 = vmax.f32 %v1176, 0.0
        %v1365 = vmax.f32 %v1178, 0.0
        %v1366 = vmax.f32 %v601, 0.0
        %v1367 = vmax.f32 %v603, 0.0
        %v1368 = vmax.f32 %v794, 0.0
        %v1369 = vmax.f32 %v796, 0.0
        %v1370 = vmax.f32 %v987, 0.0
        %v1371 = vmax.f32 %v989, 0.0
        %v1372 = vmax.f32 %v1180, 0.0
        %v1373 = vmax.f32 %v1182, 0.0
        %v1374 = vmax.f32 %v607, 0.0
        %v1375 = vmax.f32 %v609, 0.0
        %v1376 = vmax.f32 %v800, 0.0
        %v1377 = vmax.f32 %v802, 0.0
        %v1378 = vmax.f32 %v993, 0.0
        %v1379 = vmax.f32 %v995, 0.0
        %v1380 = vmax.f32 %v1186, 0.0
        %v1381 = vmax.f32 %v1188, 0.0
        %v1382 = vmax.f32 %v611, 0.0
        %v1383 = vmax.f32 %v613, 0.0
        %v1384 = vmax.f32 %v804, 0.0
        %v1385 = vmax.f32 %v806, 0.0
        %v1386 = vmax.f32 %v997, 0.0
        %v1387 = vmax.f32 %v999, 0.0
        %v1388 = vmax.f32 %v1190, 0.0
        %v1389 = vmax.f32 %v1192, 0.0
        %v1390 = vmax.f32 %v617, 0.0
        %v1391 = vmax.f32 %v619, 0.0
        %v1392 = vmax.f32 %v810, 0.0
        %v1393 = vmax.f32 %v812, 0.0
        %v1394 = vmax.f32 %v1003, 0.0
        %v1395 = vmax.f32 %v1005, 0.0
        %v1396 = vmax.f32 %v1196, 0.0
        %v1397 = vmax.f32 %v1198, 0.0
        %v1398 = vmax.f32 %v621, 0.0
        %v1399 = vmax.f32 %v623, 0.0
        %v1400 = vmax.f32 %v814, 0.0
        %v1401 = vmax.f32 %v816, 0.0
        %v1402 = vmax.f32 %v1007, 0.0
        %v1403 = vmax.f32 %v1009, 0.0
        %v1404 = vmax.f32 %v1200, 0.0
        %v1405 = vmax.f32 %v1202, 0.0
        %v1406 = vmax.f32 %v627, 0.0
        %v1407 = vmax.f32 %v629, 0.0
        %v1408 = vmax.f32 %v820, 0.0
        %v1409 = vmax.f32 %v822, 0.0
        %v1410 = vmax.f32 %v1013, 0.0
        %v1411 = vmax.f32 %v1015, 0.0
        %v1412 = vmax.f32 %v1206, 0.0
        %v1413 = vmax.f32 %v1208, 0.0
        %v1414 = vmax.f32 %v631, 0.0
        %v1415 = vmax.f32 %v633, 0.0
        %v1416 = vmax.f32 %v824, 0.0
        %v1417 = vmax.f32 %v826, 0.0
        %v1418 = vmax.f32 %v1017, 0.0
        %v1419 = vmax.f32 %v1019, 0.0
        %v1420 = vmax.f32 %v1210, 0.0
        %v1421 = vmax.f32 %v1212, 0.0
        %v1422 = vmax.f32 %v637, 0.0
        %v1423 = vmax.f32 %v639, 0.0
        %v1424 = vmax.f32 %v830, 0.0
        %v1425 = vmax.f32 %v832, 0.0
        %v1426 = vmax.f32 %v1023, 0.0
        %v1427 = vmax.f32 %v1025, 0.0
        %v1428 = vmax.f32 %v1216, 0.0
        %v1429 = vmax.f32 %v1218, 0.0
        %v1430 = vmax.f32 %v641, 0.0
        %v1431 = vmax.f32 %v643, 0.0
        %v1432 = vmax.f32 %v834, 0.0
        %v1433 = vmax.f32 %v836, 0.0
        %v1434 = vmax.f32 %v1027, 0.0
        %v1435 = vmax.f32 %v1029, 0.0
        %v1436 = vmax.f32 %v1220, 0.0
        %v1437 = vmax.f32 %v1222, 0.0
        %v1438 = vmax.f32 %v647, 0.0
        %v1439 = vmax.f32 %v649, 0.0
        %v1440 = vmax.f32 %v840, 0.0
        %v1441 = vmax.f32 %v842, 0.0
        %v1442 = vmax.f32 %v1033, 0.0
        %v1443 = vmax.f32 %v1035, 0.0
        %v1444 = vmax.f32 %v1226, 0.0
        %v1445 = vmax.f32 %v1228, 0.0
        %v1446 = vmax.f32 %v651, 0.0
        %v1447 = vmax.f32 %v653, 0.0
        %v1448 = vmax.f32 %v844, 0.0
        %v1449 = vmax.f32 %v846, 0.0
        %v1450 = vmax.f32 %v1037, 0.0
        %v1451 = vmax.f32 %v1039, 0.0
        %v1452 = vmax.f32 %v1230, 0.0
        %v1453 = vmax.f32 %v1232, 0.0
        %v1454 = vmax.f32 %v657, 0.0
        %v1455 = vmax.f32 %v659, 0.0
        %v1456 = vmax.f32 %v850, 0.0
        %v1457 = vmax.f32 %v852, 0.0
        %v1458 = vmax.f32 %v1043, 0.0
        %v1459 = vmax.f32 %v1045, 0.0
        %v1460 = vmax.f32 %v1236, 0.0
        %v1461 = vmax.f32 %v1238, 0.0
        %v1462 = vmax.f32 %v661, 0.0
        %v1463 = vmax.f32 %v663, 0.0
        %v1464 = vmax.f32 %v854, 0.0
        %v1465 = vmax.f32 %v856, 0.0
        %v1466 = vmax.f32 %v1047, 0.0
        %v1467 = vmax.f32 %v1049, 0.0
        %v1468 = vmax.f32 %v1240, 0.0
        %v1469 = vmax.f32 %v1242, 0.0
        %v1470 = vmax.f32 %v667, 0.0
        %v1471 = vmax.f32 %v669, 0.0
        %v1472 = vmax.f32 %v860, 0.0
        %v1473 = vmax.f32 %v862, 0.0
        %v1474 = vmax.f32 %v1053, 0.0
        %v1475 = vmax.f32 %v1055, 0.0
        %v1476 = vmax.f32 %v1246, 0.0
        %v1477 = vmax.f32 %v1248, 0.0
        %v1478 = vmax.f32 %v671, 0.0
        %v1479 = vmax.f32 %v673, 0.0
        %v1480 = vmax.f32 %v864, 0.0
        %v1481 = vmax.f32 %v866, 0.0
        %v1482 = vmax.f32 %v1057, 0.0
        %v1483 = vmax.f32 %v1059, 0.0
        %v1484 = vmax.f32 %v1250, 0.0
        %v1485 = vmax.f32 %v1252, 0.0
        %v1486 = vmax.f32 %v677, 0.0
        %v1487 = vmax.f32 %v679, 0.0
        %v1488 = vmax.f32 %v870, 0.0
        %v1489 = vmax.f32 %v872, 0.0
        %v1490 = vmax.f32 %v1063, 0.0
        %v1491 = vmax.f32 %v1065, 0.0
        %v1492 = vmax.f32 %v1256, 0.0
        %v1493 = vmax.f32 %v1258, 0.0
        %v1494 = vmax.f32 %v681, 0.0
        %v1495 = vmax.f32 %v683, 0.0
        %v1496 = vmax.f32 %v874, 0.0
        %v1497 = vmax.f32 %v876, 0.0
        %v1498 = vmax.f32 %v1067, 0.0
        %v1499 = vmax.f32 %v1069, 0.0
        %v1500 = vmax.f32 %v1260, 0.0
        %v1501 = vmax.f32 %v1262, 0.0
        %v1502 = vmax.f32 %v687, 0.0
        %v1503 = vmax.f32 %v689, 0.0
        %v1504 = vmax.f32 %v880, 0.0
        %v1505 = vmax.f32 %v882, 0.0
        %v1506 = vmax.f32 %v1073, 0.0
        %v1507 = vmax.f32 %v1075, 0.0
        %v1508 = vmax.f32 %v1266, 0.0
        %v1509 = vmax.f32 %v1268, 0.0
        %v1510 = vmax.f32 %v691, 0.0
        %v1511 = vmax.f32 %v693, 0.0
        %v1512 = vmax.f32 %v884, 0.0
        %v1513 = vmax.f32 %v886, 0.0
        %v1514 = vmax.f32 %v1077, 0.0
        %v1515 = vmax.f32 %v1079, 0.0
        %v1516 = vmax.f32 %v1270, 0.0
        %v1517 = vmax.f32 %v1272, 0.0
        %v1518 = vmax.f32 %v697, 0.0
        %v1519 = vmax.f32 %v699, 0.0
        %v1520 = vmax.f32 %v890, 0.0
        %v1521 = vmax.f32 %v892, 0.0
        %v1522 = vmax.f32 %v1083, 0.0
        %v1523 = vmax.f32 %v1085, 0.0
        %v1524 = vmax.f32 %v1276, 0.0
        %v1525 = vmax.f32 %v1278, 0.0
        %v1526 = vmax.f32 %v701, 0.0
        %v1527 = vmax.f32 %v703, 0.0
        %v1528 = vmax.f32 %v894, 0.0
        %v1529 = vmax.f32 %v896, 0.0
        %v1530 = vmax.f32 %v1087, 0.0
        %v1531 = vmax.f32 %v1089, 0.0
        %v1532 = vmax.f32 %v1280, 0.0
        %v1533 = vmax.f32 %v1282, 0.0
        %v1534 = vmax.f32 %v707, 0.0
        %v1535 = vmax.f32 %v709, 0.0
        %v1536 = vmax.f32 %v900, 0.0
        %v1537 = vmax.f32 %v902, 0.0
        %v1538 = vmax.f32 %v1093, 0.0
        %v1539 = vmax.f32 %v1095, 0.0
        %v1540 = vmax.f32 %v1286, 0.0
        %v1541 = vmax.f32 %v1288, 0.0
        %v1542 = vmax.f32 %v711, 0.0
        %v1543 = vmax.f32 %v713, 0.0
        %v1544 = vmax.f32 %v904, 0.0
        %v1545 = vmax.f32 %v906, 0.0
        %v1546 = vmax.f32 %v1097, 0.0
        %v1547 = vmax.f32 %v1099, 0.0
        %v1548 = vmax.f32 %v1290, 0.0
        %v1549 = vmax.f32 %v1292, 0.0
        %v1550 = vadd.f32 %v1294, %v1302
        %v1551 = vadd.f32 %v1550, %v1310
        %v1552 = vadd.f32 %v1551, %v1318
        %v1553 = vadd.f32 %v1552, %v1326
        %v1554 = vadd.f32 %v1553, %v1334
        %v1555 = vadd.f32 %v1554, %v1342
        %v1556 = vadd.f32 %v1555, %v1350
        %v1557 = vadd.f32 %v1556, %v1358
        %v1558 = vadd.f32 %v1557, %v1366
        %v1559 = vadd.f32 %v1558, %v1374
        %v1560 = vadd.f32 %v1559, %v1382
        %v1561 = vadd.f32 %v1560, %v1390
        %v1562 = vadd.f32 %v1561, %v1398
        %v1563 = vadd.f32 %v1562, %v1406
        %v1564 = vadd.f32 %v1563, %v1414
        %v1565 = vadd.f32 %v1564, %v1422
        %v1566 = vadd.f32 %v1565, %v1430
        %v1567 = vadd.f32 %v1566, %v1438
        %v1568 = vadd.f32 %v1567, %v1446
        %v1569 = vadd.f32 %v1568, %v1454
        %v1570 = vadd.f32 %v1569, %v1462
        %v1571 = vadd.f32 %v1570, %v1470
        %v1572 = vadd.f32 %v1571, %v1478
        %v1573 = vadd.f32 %v1572, %v1486
        %v1574 = vadd.f32 %v1573, %v1494
        %v1575 = vadd.f32 %v1574, %v1502
        %v1576 = vadd.f32 %v1575, %v1510
        %v1577 = vadd.f32 %v1576, %v1518
        %v1578 = vadd.f32 %v1577, %v1526
        %v1579 = vadd.f32 %v1578, %v1534
        %v1580 = vadd.f32 %v1579, %v1542
        %v1581 = vrot.slane %v1580, 4
        %v1582 = vadd.f32 %v1580, %v1581
        %v1583 = vrot.slane %v1582, 2
        %v1584 = vadd.f32 %v1582, %v1583
        %v1585 = vrot.slane %v1584, 1
        %v1586 = vadd.f32 %v1584, %v1585
        %v1587 = vadd.f32 %v1295, %v1303
        %v1588 = vadd.f32 %v1587, %v1311
        %v1589 = vadd.f32 %v1588, %v1319
        %v1590 = vadd.f32 %v1589, %v1327
        %v1591 = vadd.f32 %v1590, %v1335
        %v1592 = vadd.f32 %v1591, %v1343
        %v1593 = vadd.f32 %v1592, %v1351
        %v1594 = vadd.f32 %v1593, %v1359
        %v1595 = vadd.f32 %v1594, %v1367
        %v1596 = vadd.f32 %v1595, %v1375
        %v1597 = vadd.f32 %v1596, %v1383
        %v1598 = vadd.f32 %v1597, %v1391
        %v1599 = vadd.f32 %v1598, %v1399
        %v1600 = vadd.f32 %v1599, %v1407
        %v1601 = vadd.f32 %v1600, %v1415
        %v1602 = vadd.f32 %v1601, %v1423
        %v1603 = vadd.f32 %v1602, %v1431
        %v1604 = vadd.f32 %v1603, %v1439
        %v1605 = vadd.f32 %v1604, %v1447
        %v1606 = vadd.f32 %v1605, %v1455
        %v1607 = vadd.f32 %v1606, %v1463
        %v1608 = vadd.f32 %v1607, %v1471
        %v1609 = vadd.f32 %v1608, %v1479
        %v1610 = vadd.f32 %v1609, %v1487
        %v1611 = vadd.f32 %v1610, %v1495
        %v1612 = vadd.f32 %v1611, %v1503
        %v1613 = vadd.f32 %v1612, %v1511
        %v1614 = vadd.f32 %v1613, %v1519
        %v1615 = vadd.f32 %v1614, %v1527
        %v1616 = vadd.f32 %v1615, %v1535
        %v1617 = vadd.f32 %v1616, %v1543
        %v1618 = vrot.slane %v1617, 4
        %v1619 = vadd.f32 %v1617, %v1618
        %v1620 = vrot.slane %v1619, 2
        %v1621 = vadd.f32 %v1619, %v1620
        %v1622 = vrot.slane %v1621, 1
        %v1623 = vadd.f32 %v1621, %v1622
        %v1624 = vadd.f32 %v1296, %v1304
        %v1625 = vadd.f32 %v1624, %v1312
        %v1626 = vadd.f32 %v1625, %v1320
        %v1627 = vadd.f32 %v1626, %v1328
        %v1628 = vadd.f32 %v1627, %v1336
        %v1629 = vadd.f32 %v1628, %v1344
        %v1630 = vadd.f32 %v1629, %v1352
        %v1631 = vadd.f32 %v1630, %v1360
        %v1632 = vadd.f32 %v1631, %v1368
        %v1633 = vadd.f32 %v1632, %v1376
        %v1634 = vadd.f32 %v1633, %v1384
        %v1635 = vadd.f32 %v1634, %v1392
        %v1636 = vadd.f32 %v1635, %v1400
        %v1637 = vadd.f32 %v1636, %v1408
        %v1638 = vadd.f32 %v1637, %v1416
        %v1639 = vadd.f32 %v1638, %v1424
        %v1640 = vadd.f32 %v1639, %v1432
        %v1641 = vadd.f32 %v1640, %v1440
        %v1642 = vadd.f32 %v1641, %v1448
        %v1643 = vadd.f32 %v1642, %v1456
        %v1644 = vadd.f32 %v1643, %v1464
        %v1645 = vadd.f32 %v1644, %v1472
        %v1646 = vadd.f32 %v1645, %v1480
        %v1647 = vadd.f32 %v1646, %v1488
        %v1648 = vadd.f32 %v1647, %v1496
        %v1649 = vadd.f32 %v1648, %v1504
        %v1650 = vadd.f32 %v1649, %v1512
        %v1651 = vadd.f32 %v1650, %v1520
        %v1652 = vadd.f32 %v1651, %v1528
        %v1653 = vadd.f32 %v1652, %v1536
        %v1654 = vadd.f32 %v1653, %v1544
        %v1655 = vrot.slane %v1654, 4
        %v1656 = vadd.f32 %v1654, %v1655
        %v1657 = vrot.slane %v1656, 2
        %v1658 = vadd.f32 %v1656, %v1657
        %v1659 = vrot.slane %v1658, 1
        %v1660 = vadd.f32 %v1658, %v1659
        %v1661 = vadd.f32 %v1297, %v1305
        %v1662 = vadd.f32 %v1661, %v1313
        %v1663 = vadd.f32 %v1662, %v1321
        %v1664 = vadd.f32 %v1663, %v1329
        %v1665 = vadd.f32 %v1664, %v1337
        %v1666 = vadd.f32 %v1665, %v1345
        %v1667 = vadd.f32 %v1666, %v1353
        %v1668 = vadd.f32 %v1667, %v1361
        %v1669 = vadd.f32 %v1668, %v1369
        %v1670 = vadd.f32 %v1669, %v1377
        %v1671 = vadd.f32 %v1670, %v1385
        %v1672 = vadd.f32 %v1671, %v1393
        %v1673 = vadd.f32 %v1672, %v1401
        %v1674 = vadd.f32 %v1673, %v1409
        %v1675 = vadd.f32 %v1674, %v1417
        %v1676 = vadd.f32 %v1675, %v1425
        %v1677 = vadd.f32 %v1676, %v1433
        %v1678 = vadd.f32 %v1677, %v1441
        %v1679 = vadd.f32 %v1678, %v1449
        %v1680 = vadd.f32 %v1679, %v1457
        %v1681 = vadd.f32 %v1680, %v1465
        %v1682 = vadd.f32 %v1681, %v1473
        %v1683 = vadd.f32 %v1682, %v1481
        %v1684 = vadd.f32 %v1683, %v1489
        %v1685 = vadd.f32 %v1684, %v1497
        %v1686 = vadd.f32 %v1685, %v1505
        %v1687 = vadd.f32 %v1686, %v1513
        %v1688 = vadd.f32 %v1687, %v1521
        %v1689 = vadd.f32 %v1688, %v1529
        %v1690 = vadd.f32 %v1689, %v1537
        %v1691 = vadd.f32 %v1690, %v1545
        %v1692 = vrot.slane %v1691, 4
        %v1693 = vadd.f32 %v1691, %v1692
        %v1694 = vrot.slane %v1693, 2
        %v1695 = vadd.f32 %v1693, %v1694
        %v1696 = vrot.slane %v1695, 1
        %v1697 = vadd.f32 %v1695, %v1696
        %v1698 = vadd.f32 %v1298, %v1306
        %v1699 = vadd.f32 %v1698, %v1314
        %v1700 = vadd.f32 %v1699, %v1322
        %v1701 = vadd.f32 %v1700, %v1330
        %v1702 = vadd.f32 %v1701, %v1338
        %v1703 = vadd.f32 %v1702, %v1346
        %v1704 = vadd.f32 %v1703, %v1354
        %v1705 = vadd.f32 %v1704, %v1362
        %v1706 = vadd.f32 %v1705, %v1370
        %v1707 = vadd.f32 %v1706, %v1378
        %v1708 = vadd.f32 %v1707, %v1386
        %v1709 = vadd.f32 %v1708, %v1394
        %v1710 = vadd.f32 %v1709, %v1402
        %v1711 = vadd.f32 %v1710, %v1410
        %v1712 = vadd.f32 %v1711, %v1418
        %v1713 = vadd.f32 %v1712, %v1426
        %v1714 = vadd.f32 %v1713, %v1434
        %v1715 = vadd.f32 %v1714, %v1442
        %v1716 = vadd.f32 %v1715, %v1450
        %v1717 = vadd.f32 %v1716, %v1458
        %v1718 = vadd.f32 %v1717, %v1466
        %v1719 = vadd.f32 %v1718, %v1474
        %v1720 = vadd.f32 %v1719, %v1482
        %v1721 = vadd.f32 %v1720, %v1490
        %v1722 = vadd.f32 %v1721, %v1498
        %v1723 = vadd.f32 %v1722, %v1506
        %v1724 = vadd.f32 %v1723, %v1514
        %v1725 = vadd.f32 %v1724, %v1522
        %v1726 = vadd.f32 %v1725, %v1530
        %v1727 = vadd.f32 %v1726, %v1538
        %v1728 = vadd.f32 %v1727, %v1546
        %v1729 = vrot.slane %v1728, 4
        %v1730 = vadd.f32 %v1728, %v1729
        %v1731 = vrot.slane %v1730, 2
        %v1732 = vadd.f32 %v1730, %v1731
        %v1733 = vrot.slane %v1732, 1
        %v1734 = vadd.f32 %v1732, %v1733
        %v1735 = vadd.f32 %v1299, %v1307
        %v1736 = vadd.f32 %v1735, %v1315
        %v1737 = vadd.f32 %v1736, %v1323
        %v1738 = vadd.f32 %v1737, %v1331
        %v1739 = vadd.f32 %v1738, %v1339
        %v1740 = vadd.f32 %v1739, %v1347
        %v1741 = vadd.f32 %v1740, %v1355
        %v1742 = vadd.f32 %v1741, %v1363
        %v1743 = vadd.f32 %v1742, %v1371
        %v1744 = vadd.f32 %v1743, %v1379
        %v1745 = vadd.f32 %v1744, %v1387
        %v1746 = vadd.f32 %v1745, %v1395
        %v1747 = vadd.f32 %v1746, %v1403
        %v1748 = vadd.f32 %v1747, %v1411
        %v1749 = vadd.f32 %v1748, %v1419
        %v1750 = vadd.f32 %v1749, %v1427
        %v1751 = vadd.f32 %v1750, %v1435
        %v1752 = vadd.f32 %v1751, %v1443
        %v1753 = vadd.f32 %v1752, %v1451
        %v1754 = vadd.f32 %v1753, %v1459
        %v1755 = vadd.f32 %v1754, %v1467
        %v1756 = vadd.f32 %v1755, %v1475
        %v1757 = vadd.f32 %v1756, %v1483
        %v1758 = vadd.f32 %v1757, %v1491
        %v1759 = vadd.f32 %v1758, %v1499
        %v1760 = vadd.f32 %v1759, %v1507
        %v1761 = vadd.f32 %v1760, %v1515
        %v1762 = vadd.f32 %v1761, %v1523
        %v1763 = vadd.f32 %v1762, %v1531
        %v1764 = vadd.f32 %v1763, %v1539
        %v1765 = vadd.f32 %v1764, %v1547
        %v1766 = vrot.slane %v1765, 4
        %v1767 = vadd.f32 %v1765, %v1766
        %v1768 = vrot.slane %v1767, 2
        %v1769 = vadd.f32 %v1767, %v1768
        %v1770 = vrot.slane %v1769, 1
        %v1771 = vadd.f32 %v1769, %v1770
        %v1772 = vadd.f32 %v1300, %v1308
        %v1773 = vadd.f32 %v1772, %v1316
        %v1774 = vadd.f32 %v1773, %v1324
        %v1775 = vadd.f32 %v1774, %v1332
        %v1776 = vadd.f32 %v1775, %v1340
        %v1777 = vadd.f32 %v1776, %v1348
        %v1778 = vadd.f32 %v1777, %v1356
        %v1779 = vadd.f32 %v1778, %v1364
        %v1780 = vadd.f32 %v1779, %v1372
        %v1781 = vadd.f32 %v1780, %v1380
        %v1782 = vadd.f32 %v1781, %v1388
        %v1783 = vadd.f32 %v1782, %v1396
        %v1784 = vadd.f32 %v1783, %v1404
        %v1785 = vadd.f32 %v1784, %v1412
        %v1786 = vadd.f32 %v1785, %v1420
        %v1787 = vadd.f32 %v1786, %v1428
        %v1788 = vadd.f32 %v1787, %v1436
        %v1789 = vadd.f32 %v1788, %v1444
        %v1790 = vadd.f32 %v1789, %v1452
        %v1791 = vadd.f32 %v1790, %v1460
        %v1792 = vadd.f32 %v1791, %v1468
        %v1793 = vadd.f32 %v1792, %v1476
        %v1794 = vadd.f32 %v1793, %v1484
        %v1795 = vadd.f32 %v1794, %v1492
        %v1796 = vadd.f32 %v1795, %v1500
        %v1797 = vadd.f32 %v1796, %v1508
        %v1798 = vadd.f32 %v1797, %v1516
        %v1799 = vadd.f32 %v1798, %v1524
        %v1800 = vadd.f32 %v1799, %v1532
        %v1801 = vadd.f32 %v1800, %v1540
        %v1802 = vadd.f32 %v1801, %v1548
        %v1803 = vrot.slane %v1802, 4
        %v1804 = vadd.f32 %v1802, %v1803
        %v1805 = vrot.slane %v1804, 2
        %v1806 = vadd.f32 %v1804, %v1805
        %v1807 = vrot.slane %v1806, 1
        %v1808 = vadd.f32 %v1806, %v1807
        %v1809 = vadd.f32 %v1301, %v1309
        %v1810 = vadd.f32 %v1809, %v1317
        %v1811 = vadd.f32 %v1810, %v1325
        %v1812 = vadd.f32 %v1811, %v1333
        %v1813 = vadd.f32 %v1812, %v1341
        %v1814 = vadd.f32 %v1813, %v1349
        %v1815 = vadd.f32 %v1814, %v1357
        %v1816 = vadd.f32 %v1815, %v1365
        %v1817 = vadd.f32 %v1816, %v1373
        %v1818 = vadd.f32 %v1817, %v1381
        %v1819 = vadd.f32 %v1818, %v1389
        %v1820 = vadd.f32 %v1819, %v1397
        %v1821 = vadd.f32 %v1820, %v1405
        %v1822 = vadd.f32 %v1821, %v1413
        %v1823 = vadd.f32 %v1822, %v1421
        %v1824 = vadd.f32 %v1823, %v1429
        %v1825 = vadd.f32 %v1824, %v1437
        %v1826 = vadd.f32 %v1825, %v1445
        %v1827 = vadd.f32 %v1826, %v1453
        %v1828 = vadd.f32 %v1827, %v1461
        %v1829 = vadd.f32 %v1828, %v1469
        %v1830 = vadd.f32 %v1829, %v1477
        %v1831 = vadd.f32 %v1830, %v1485
        %v1832 = vadd.f32 %v1831, %v1493
        %v1833 = vadd.f32 %v1832, %v1501
        %v1834 = vadd.f32 %v1833, %v1509
        %v1835 = vadd.f32 %v1834, %v1517
        %v1836 = vadd.f32 %v1835, %v1525
        %v1837 = vadd.f32 %v1836, %v1533
        %v1838 = vadd.f32 %v1837, %v1541
        %v1839 = vadd.f32 %v1838, %v1549
        %v1840 = vrot.slane %v1839, 4
        %v1841 = vadd.f32 %v1839, %v1840
        %v1842 = vrot.slane %v1841, 2
        %v1843 = vadd.f32 %v1841, %v1842
        %v1844 = vrot.slane %v1843, 1
        %v1845 = vadd.f32 %v1843, %v1844
        %v1846 = vadd.f32 %v1586, 0.0
        %v1847 = vadd.f32 %v1623, 0.0
        %v1848 = vadd.f32 %v1660, 0.0
        %v1849 = vadd.f32 %v1697, 0.0
        %v1850 = vadd.f32 %v1734, 0.0
        %v1851 = vadd.f32 %v1771, 0.0
        %v1852 = vadd.f32 %v1808, 0.0
        %v1853 = vadd.f32 %v1845, 0.0
        %s1854 = scalar_lea.vmem %s247, 128
        %v1855 = vld [vmem:[%s1854] sm:$0xf]
        %v1856 = vld [vmem:[%s1854 + $0x4] sm:$0xf]
        %v1857 = vld [vmem:[%s1854 + $0x8] sm:$0xf]
        %v1858 = vld [vmem:[%s1854 + $0xc] sm:$0xf]
        %v1859 = vld [vmem:[%s1854 + $0x10] sm:$0xf]
        %v1860 = vld [vmem:[%s1854 + $0x14] sm:$0xf]
        %v1861 = vld [vmem:[%s1854 + $0x18] sm:$0xf]
        %v1862 = vld [vmem:[%s1854 + $0x1c] sm:$0xf]
        %v1863 = vld [vmem:[%s1854 + $0x20] sm:$0xf]
        %v1864 = vld [vmem:[%s1854 + $0x24] sm:$0xf]
        %v1865 = vld [vmem:[%s1854 + $0x28] sm:$0xf]
        %v1866 = vld [vmem:[%s1854 + $0x2c] sm:$0xf]
        %v1867 = vld [vmem:[%s1854 + $0x30] sm:$0xf]
        %v1868 = vld [vmem:[%s1854 + $0x34] sm:$0xf]
        %v1869 = vld [vmem:[%s1854 + $0x38] sm:$0xf]
        %v1870 = vld [vmem:[%s1854 + $0x3c] sm:$0xf]
        %v1871 = vld [vmem:[%s1854 + $0x40] sm:$0xf]
        %v1872 = vld [vmem:[%s1854 + $0x44] sm:$0xf]
        %v1873 = vld [vmem:[%s1854 + $0x48] sm:$0xf]
        %v1874 = vld [vmem:[%s1854 + $0x4c] sm:$0xf]
        %v1875 = vld [vmem:[%s1854 + $0x50] sm:$0xf]
        %v1876 = vld [vmem:[%s1854 + $0x54] sm:$0xf]
        %v1877 = vld [vmem:[%s1854 + $0x58] sm:$0xf]
        %v1878 = vld [vmem:[%s1854 + $0x5c] sm:$0xf]
        %v1879 = vld [vmem:[%s1854 + $0x60] sm:$0xf]
        %v1880 = vld [vmem:[%s1854 + $0x64] sm:$0xf]
        %v1881 = vld [vmem:[%s1854 + $0x68] sm:$0xf]
        %v1882 = vld [vmem:[%s1854 + $0x6c] sm:$0xf]
        %v1883 = vld [vmem:[%s1854 + $0x70] sm:$0xf]
        %v1884 = vld [vmem:[%s1854 + $0x74] sm:$0xf]
        %v1885 = vld [vmem:[%s1854 + $0x78] sm:$0xf]
        %v1886 = vld [vmem:[%s1854 + $0x7c] sm:$0xf]
        %v1919 = vunpack.c.l.b16 %v1855
        %v1920 = vunpack.c.l.b16 %v1856
        %v1921 = vunpack.c.l.b16 %v1857
        %v1922 = vunpack.c.l.b16 %v1858
        %v1923 = vunpack.c.l.b16 %v1859
        %v1924 = vunpack.c.l.b16 %v1860
        %v1925 = vunpack.c.l.b16 %v1861
        %v1926 = vunpack.c.l.b16 %v1862
        %v1927 = vunpack.c.l.b16 %v1863
        %v1928 = vunpack.c.l.b16 %v1864
        %v1929 = vunpack.c.l.b16 %v1865
        %v1930 = vunpack.c.l.b16 %v1866
        %v1931 = vunpack.c.l.b16 %v1867
        %v1932 = vunpack.c.l.b16 %v1868
        %v1933 = vunpack.c.l.b16 %v1869
        %v1934 = vunpack.c.l.b16 %v1870
        %v1935 = vunpack.c.l.b16 %v1871
        %v1936 = vunpack.c.l.b16 %v1872
        %v1937 = vunpack.c.l.b16 %v1873
        %v1938 = vunpack.c.l.b16 %v1874
        %v1939 = vunpack.c.l.b16 %v1875
        %v1940 = vunpack.c.l.b16 %v1876
        %v1941 = vunpack.c.l.b16 %v1877
        %v1942 = vunpack.c.l.b16 %v1878
        %v1943 = vunpack.c.l.b16 %v1879
        %v1944 = vunpack.c.l.b16 %v1880
        %v1945 = vunpack.c.l.b16 %v1881
        %v1946 = vunpack.c.l.b16 %v1882
        %v1947 = vunpack.c.l.b16 %v1883
        %v1948 = vunpack.c.l.b16 %v1884
        %v1949 = vunpack.c.l.b16 %v1885
        %v1950 = vunpack.c.l.b16 %v1886
        %v1951 = vpack.c.b16 %v1920, %v1919
        %v1952 = vpack.c.b16 %v1922, %v1921
        %v1953 = vpack.c.b16 %v1924, %v1923
        %v1954 = vpack.c.b16 %v1926, %v1925
        %v1955 = vpack.c.b16 %v1928, %v1927
        %v1956 = vpack.c.b16 %v1930, %v1929
        %v1957 = vpack.c.b16 %v1932, %v1931
        %v1958 = vpack.c.b16 %v1934, %v1933
        %v1959 = vpack.c.b16 %v1936, %v1935
        %v1960 = vpack.c.b16 %v1938, %v1937
        %v1961 = vpack.c.b16 %v1940, %v1939
        %v1962 = vpack.c.b16 %v1942, %v1941
        %v1963 = vpack.c.b16 %v1944, %v1943
        %v1964 = vpack.c.b16 %v1946, %v1945
        %v1965 = vpack.c.b16 %v1948, %v1947
        %v1966 = vpack.c.b16 %v1950, %v1949
        %v1968 = vsel %vm473, %v1951, 0
        %v1971 = vsel %vm473, %v1952, 0
        %v1974 = vsel %vm473, %v1953, 0
        %v1977 = vsel %vm473, %v1954, 0
        %v1980 = vsel %vm473, %v1955, 0
        %v1983 = vsel %vm473, %v1956, 0
        %v1986 = vsel %vm473, %v1957, 0
        %v1989 = vsel %vm473, %v1958, 0
        %v1992 = vsel %vm473, %v1959, 0
        %v1995 = vsel %vm473, %v1960, 0
        %v1998 = vsel %vm473, %v1961, 0
        %v2001 = vsel %vm473, %v1962, 0
        %v2004 = vsel %vm473, %v1963, 0
        %v2007 = vsel %vm473, %v1964, 0
        %v2010 = vsel %vm473, %v1965, 0
        %v2013 = vsel %vm473, %v1966, 0
        %2015 = vmatprep.subr.bf16.mxu0 %v442
        %2016 = vmatpush1.bf16.msra.mxu0 %v441
        %2017 = vmatprep.subr.bf16.mxu0 %v450
        %2018 = vmatpush1.bf16.msra.mxu0 %v449
        %2019 = vmatprep.subr.bf16.mxu0 0
        %2020 = vmatpush1.bf16.msra.mxu0 0
        %2021 = vmatprep.subr.bf16.mxu0 0
        %2022 = vmatpush1.bf16.msra.mxu0 0
        %2023 = vmatprep.subr.bf16.mxu0 0
        %2024 = vmatpush1.bf16.msra.mxu0 0
        %2025 = vmatprep.subr.bf16.mxu0 0
        %2026 = vmatpush1.bf16.msra.mxu0 0
        %2027 = vmatprep.subr.bf16.mxu0 0
        %2028 = vmatpush1.bf16.msra.mxu0 0
        %2029 = vmatprep.subr.bf16.mxu0 0
        %2030 = vmatpush1.bf16.msra.mxu0 0
        %2031 = vmatprep.subr.bf16.mxu0 0
        %2032 = vmatpush1.bf16.msra.mxu0 0
        %2033 = vmatprep.subr.bf16.mxu0 0
        %2034 = vmatpush1.bf16.msra.mxu0 0
        %2035 = vmatprep.subr.bf16.mxu0 0
        %2036 = vmatpush1.bf16.msra.mxu0 0
        %2037 = vmatprep.subr.bf16.mxu0 0
        %2038 = vmatpush1.bf16.msra.mxu0 0
        %2039 = vmatprep.subr.bf16.mxu0 0
        %2040 = vmatpush1.bf16.msra.mxu0 0
        %2041 = vmatprep.subr.bf16.mxu0 0
        %2042 = vmatpush1.bf16.msra.mxu0 0
        %2043 = vmatprep.subr.bf16.mxu0 0
        %2044 = vmatpush1.bf16.msra.mxu0 0
        %2045 = vmatprep.subr.bf16.mxu0 0
        %2046 = vmatpush1.bf16.msra.mxu0 0
        %2047 = vmatprep.mubr.bf16.mxu0 0
        %2048 = vmatmul.mubr.bf16.gmra.mrb[0].mxu0 %v1968
        %v2049 = vpop.f32.mrb[0].mxu0
        %v2050 = vadd.f32 0.0, %v2049
        %v2051 = vpop.f32.mrb[0].mxu0
        %v2052 = vadd.f32 0.0, %v2051
        %v2053 = vpop.f32.mrb[0].mxu0
        %v2054 = vadd.f32 0.0, %v2053
        %v2055 = vpop.f32.mrb[0].mxu0
        %v2056 = vadd.f32 0.0, %v2055
        %2057 = vmatprep.mubr.bf16.mxu0 0
        %2058 = vmatmul.mubr.bf16.gmra.mrb[0].mxu0 %v1971
        %v2059 = vpop.f32.mrb[0].mxu0
        %v2060 = vadd.f32 0.0, %v2059
        %v2061 = vpop.f32.mrb[0].mxu0
        %v2062 = vadd.f32 0.0, %v2061
        %v2063 = vpop.f32.mrb[0].mxu0
        %v2064 = vadd.f32 0.0, %v2063
        %v2065 = vpop.f32.mrb[0].mxu0
        %v2066 = vadd.f32 0.0, %v2065
        %2067 = vmatprep.mubr.bf16.mxu0 0
        %2068 = vmatmul.mubr.bf16.gmra.mrb[0].mxu0 %v1974
        %v2069 = vpop.f32.mrb[0].mxu0
        %v2070 = vadd.f32 0.0, %v2069
        %v2071 = vpop.f32.mrb[0].mxu0
        %v2072 = vadd.f32 0.0, %v2071
        %v2073 = vpop.f32.mrb[0].mxu0
        %v2074 = vadd.f32 0.0, %v2073
        %v2075 = vpop.f32.mrb[0].mxu0
        %v2076 = vadd.f32 0.0, %v2075
        %2077 = vmatprep.mubr.bf16.mxu0 0
        %2078 = vmatmul.mubr.bf16.gmra.mrb[0].mxu0 %v1977
        %v2079 = vpop.f32.mrb[0].mxu0
        %v2080 = vadd.f32 0.0, %v2079
        %v2081 = vpop.f32.mrb[0].mxu0
        %v2082 = vadd.f32 0.0, %v2081
        %v2083 = vpop.f32.mrb[0].mxu0
        %v2084 = vadd.f32 0.0, %v2083
        %v2085 = vpop.f32.mrb[0].mxu0
        %v2086 = vadd.f32 0.0, %v2085
        %2087 = vmatprep.mubr.bf16.mxu0 0
        %2088 = vmatmul.mubr.bf16.gmra.mrb[0].mxu0 %v1980
        %v2089 = vpop.f32.mrb[0].mxu0
        %v2090 = vadd.f32 0.0, %v2089
        %v2091 = vpop.f32.mrb[0].mxu0
        %v2092 = vadd.f32 0.0, %v2091
        %v2093 = vpop.f32.mrb[0].mxu0
        %v2094 = vadd.f32 0.0, %v2093
        %v2095 = vpop.f32.mrb[0].mxu0
        %v2096 = vadd.f32 0.0, %v2095
        %2097 = vmatprep.mubr.bf16.mxu0 0
        %2098 = vmatmul.mubr.bf16.gmra.mrb[0].mxu0 %v1983
        %v2099 = vpop.f32.mrb[0].mxu0
        %v2100 = vadd.f32 0.0, %v2099
        %v2101 = vpop.f32.mrb[0].mxu0
        %v2102 = vadd.f32 0.0, %v2101
        %v2103 = vpop.f32.mrb[0].mxu0
        %v2104 = vadd.f32 0.0, %v2103
        %v2105 = vpop.f32.mrb[0].mxu0
        %v2106 = vadd.f32 0.0, %v2105
        %2107 = vmatprep.mubr.bf16.mxu0 0
        %2108 = vmatmul.mubr.bf16.gmra.mrb[0].mxu0 %v1986
        %v2109 = vpop.f32.mrb[0].mxu0
        %v2110 = vadd.f32 0.0, %v2109
        %v2111 = vpop.f32.mrb[0].mxu0
        %v2112 = vadd.f32 0.0, %v2111
        %v2113 = vpop.f32.mrb[0].mxu0
        %v2114 = vadd.f32 0.0, %v2113
        %v2115 = vpop.f32.mrb[0].mxu0
        %v2116 = vadd.f32 0.0, %v2115
        %2117 = vmatprep.mubr.bf16.mxu0 0
        %2118 = vmatmul.mubr.bf16.gmra.mrb[0].mxu0 %v1989
        %v2119 = vpop.f32.mrb[0].mxu0
        %v2120 = vadd.f32 0.0, %v2119
        %v2121 = vpop.f32.mrb[0].mxu0
        %v2122 = vadd.f32 0.0, %v2121
        %v2123 = vpop.f32.mrb[0].mxu0
        %v2124 = vadd.f32 0.0, %v2123
        %v2125 = vpop.f32.mrb[0].mxu0
        %v2126 = vadd.f32 0.0, %v2125
        %2127 = vmatprep.mubr.bf16.mxu0 0
        %2128 = vmatmul.mubr.bf16.gmra.mrb[0].mxu0 %v1992
        %v2129 = vpop.f32.mrb[0].mxu0
        %v2130 = vadd.f32 0.0, %v2129
        %v2131 = vpop.f32.mrb[0].mxu0
        %v2132 = vadd.f32 0.0, %v2131
        %v2133 = vpop.f32.mrb[0].mxu0
        %v2134 = vadd.f32 0.0, %v2133
        %v2135 = vpop.f32.mrb[0].mxu0
        %v2136 = vadd.f32 0.0, %v2135
        %2137 = vmatprep.mubr.bf16.mxu0 0
        %2138 = vmatmul.mubr.bf16.gmra.mrb[0].mxu0 %v1995
        %v2139 = vpop.f32.mrb[0].mxu0
        %v2140 = vadd.f32 0.0, %v2139
        %v2141 = vpop.f32.mrb[0].mxu0
        %v2142 = vadd.f32 0.0, %v2141
        %v2143 = vpop.f32.mrb[0].mxu0
        %v2144 = vadd.f32 0.0, %v2143
        %v2145 = vpop.f32.mrb[0].mxu0
        %v2146 = vadd.f32 0.0, %v2145
        %2147 = vmatprep.mubr.bf16.mxu0 0
        %2148 = vmatmul.mubr.bf16.gmra.mrb[0].mxu0 %v1998
        %v2149 = vpop.f32.mrb[0].mxu0
        %v2150 = vadd.f32 0.0, %v2149
        %v2151 = vpop.f32.mrb[0].mxu0
        %v2152 = vadd.f32 0.0, %v2151
        %v2153 = vpop.f32.mrb[0].mxu0
        %v2154 = vadd.f32 0.0, %v2153
        %v2155 = vpop.f32.mrb[0].mxu0
        %v2156 = vadd.f32 0.0, %v2155
        %2157 = vmatprep.mubr.bf16.mxu0 0
        %2158 = vmatmul.mubr.bf16.gmra.mrb[0].mxu0 %v2001
        %v2159 = vpop.f32.mrb[0].mxu0
        %v2160 = vadd.f32 0.0, %v2159
        %v2161 = vpop.f32.mrb[0].mxu0
        %v2162 = vadd.f32 0.0, %v2161
        %v2163 = vpop.f32.mrb[0].mxu0
        %v2164 = vadd.f32 0.0, %v2163
        %v2165 = vpop.f32.mrb[0].mxu0
        %v2166 = vadd.f32 0.0, %v2165
        %2167 = vmatprep.mubr.bf16.mxu0 0
        %2168 = vmatmul.mubr.bf16.gmra.mrb[0].mxu0 %v2004
        %v2169 = vpop.f32.mrb[0].mxu0
        %v2170 = vadd.f32 0.0, %v2169
        %v2171 = vpop.f32.mrb[0].mxu0
        %v2172 = vadd.f32 0.0, %v2171
        %v2173 = vpop.f32.mrb[0].mxu0
        %v2174 = vadd.f32 0.0, %v2173
        %v2175 = vpop.f32.mrb[0].mxu0
        %v2176 = vadd.f32 0.0, %v2175
        %2177 = vmatprep.mubr.bf16.mxu0 0
        %2178 = vmatmul.mubr.bf16.gmra.mrb[0].mxu0 %v2007
        %v2179 = vpop.f32.mrb[0].mxu0
        %v2180 = vadd.f32 0.0, %v2179
        %v2181 = vpop.f32.mrb[0].mxu0
        %v2182 = vadd.f32 0.0, %v2181
        %v2183 = vpop.f32.mrb[0].mxu0
        %v2184 = vadd.f32 0.0, %v2183
        %v2185 = vpop.f32.mrb[0].mxu0
        %v2186 = vadd.f32 0.0, %v2185
        %2187 = vmatprep.mubr.bf16.mxu0 0
        %2188 = vmatmul.mubr.bf16.gmra.mrb[0].mxu0 %v2010
        %v2189 = vpop.f32.mrb[0].mxu0
        %v2190 = vadd.f32 0.0, %v2189
        %v2191 = vpop.f32.mrb[0].mxu0
        %v2192 = vadd.f32 0.0, %v2191
        %v2193 = vpop.f32.mrb[0].mxu0
        %v2194 = vadd.f32 0.0, %v2193
        %v2195 = vpop.f32.mrb[0].mxu0
        %v2196 = vadd.f32 0.0, %v2195
        %2197 = vmatprep.mubr.bf16.mxu0 0
        %2198 = vmatmul.mubr.bf16.gmra.mrb[0].mxu0 %v2013
        %v2199 = vpop.f32.mrb[0].mxu0
        %v2200 = vadd.f32 0.0, %v2199
        %v2201 = vpop.f32.mrb[0].mxu0
        %v2202 = vadd.f32 0.0, %v2201
        %v2203 = vpop.f32.mrb[0].mxu0
        %v2204 = vadd.f32 0.0, %v2203
        %v2205 = vpop.f32.mrb[0].mxu0
        %v2206 = vadd.f32 0.0, %v2205
        %2207 = vdwg.mxu0
        %2208 = vmatprep.subr.bf16.mxu0 %v444
        %2209 = vmatpush1.bf16.msra.mxu0 %v443
        %2210 = vmatprep.subr.bf16.mxu0 %v452
        %2211 = vmatpush1.bf16.msra.mxu0 %v451
        %2212 = vmatprep.subr.bf16.mxu0 0
        %2213 = vmatpush1.bf16.msra.mxu0 0
        %2214 = vmatprep.subr.bf16.mxu0 0
        %2215 = vmatpush1.bf16.msra.mxu0 0
        %2216 = vmatprep.subr.bf16.mxu0 0
        %2217 = vmatpush1.bf16.msra.mxu0 0
        %2218 = vmatprep.subr.bf16.mxu0 0
        %2219 = vmatpush1.bf16.msra.mxu0 0
        %2220 = vmatprep.subr.bf16.mxu0 0
        %2221 = vmatpush1.bf16.msra.mxu0 0
        %2222 = vmatprep.subr.bf16.mxu0 0
        %2223 = vmatpush1.bf16.msra.mxu0 0
        %2224 = vmatprep.subr.bf16.mxu0 0
        %2225 = vmatpush1.bf16.msra.mxu0 0
        %2226 = vmatprep.subr.bf16.mxu0 0
        %2227 = vmatpush1.bf16.msra.mxu0 0
        %2228 = vmatprep.subr.bf16.mxu0 0
        %2229 = vmatpush1.bf16.msra.mxu0 0
        %2230 = vmatprep.subr.bf16.mxu0 0
        %2231 = vmatpush1.bf16.msra.mxu0 0
        %2232 = vmatprep.subr.bf16.mxu0 0
        %2233 = vmatpush1.bf16.msra.mxu0 0
        %2234 = vmatprep.subr.bf16.mxu0 0
        %2235 = vmatpush1.bf16.msra.mxu0 0
        %2236 = vmatprep.subr.bf16.mxu0 0
        %2237 = vmatpush1.bf16.msra.mxu0 0
        %2238 = vmatprep.subr.bf16.mxu0 0
        %2239 = vmatpush1.bf16.msra.mxu0 0
        %2240 = vmatprep.mubr.bf16.mxu0 0
        %2241 = vmatmul.mubr.bf16.gmra.mrb[0].mxu0 %v1968
        %v2242 = vpop.f32.mrb[0].mxu0
        %v2243 = vadd.f32 0.0, %v2242
        %v2244 = vpop.f32.mrb[0].mxu0
        %v2245 = vadd.f32 0.0, %v2244
        %v2246 = vpop.f32.mrb[0].mxu0
        %v2247 = vadd.f32 0.0, %v2246
        %v2248 = vpop.f32.mrb[0].mxu0
        %v2249 = vadd.f32 0.0, %v2248
        %2250 = vmatprep.mubr.bf16.mxu0 0
        %2251 = vmatmul.mubr.bf16.gmra.mrb[0].mxu0 %v1971
        %v2252 = vpop.f32.mrb[0].mxu0
        %v2253 = vadd.f32 0.0, %v2252
        %v2254 = vpop.f32.mrb[0].mxu0
        %v2255 = vadd.f32 0.0, %v2254
        %v2256 = vpop.f32.mrb[0].mxu0
        %v2257 = vadd.f32 0.0, %v2256
        %v2258 = vpop.f32.mrb[0].mxu0
        %v2259 = vadd.f32 0.0, %v2258
        %2260 = vmatprep.mubr.bf16.mxu0 0
        %2261 = vmatmul.mubr.bf16.gmra.mrb[0].mxu0 %v1974
        %v2262 = vpop.f32.mrb[0].mxu0
        %v2263 = vadd.f32 0.0, %v2262
        %v2264 = vpop.f32.mrb[0].mxu0
        %v2265 = vadd.f32 0.0, %v2264
        %v2266 = vpop.f32.mrb[0].mxu0
        %v2267 = vadd.f32 0.0, %v2266
        %v2268 = vpop.f32.mrb[0].mxu0
        %v2269 = vadd.f32 0.0, %v2268
        %2270 = vmatprep.mubr.bf16.mxu0 0
        %2271 = vmatmul.mubr.bf16.gmra.mrb[0].mxu0 %v1977
        %v2272 = vpop.f32.mrb[0].mxu0
        %v2273 = vadd.f32 0.0, %v2272
        %v2274 = vpop.f32.mrb[0].mxu0
        %v2275 = vadd.f32 0.0, %v2274
        %v2276 = vpop.f32.mrb[0].mxu0
        %v2277 = vadd.f32 0.0, %v2276
        %v2278 = vpop.f32.mrb[0].mxu0
        %v2279 = vadd.f32 0.0, %v2278
        %2280 = vmatprep.mubr.bf16.mxu0 0
        %2281 = vmatmul.mubr.bf16.gmra.mrb[0].mxu0 %v1980
        %v2282 = vpop.f32.mrb[0].mxu0
        %v2283 = vadd.f32 0.0, %v2282
        %v2284 = vpop.f32.mrb[0].mxu0
        %v2285 = vadd.f32 0.0, %v2284
        %v2286 = vpop.f32.mrb[0].mxu0
        %v2287 = vadd.f32 0.0, %v2286
        %v2288 = vpop.f32.mrb[0].mxu0
        %v2289 = vadd.f32 0.0, %v2288
        %2290 = vmatprep.mubr.bf16.mxu0 0
        %2291 = vmatmul.mubr.bf16.gmra.mrb[0].mxu0 %v1983
        %v2292 = vpop.f32.mrb[0].mxu0
        %v2293 = vadd.f32 0.0, %v2292
        %v2294 = vpop.f32.mrb[0].mxu0
        %v2295 = vadd.f32 0.0, %v2294
        %v2296 = vpop.f32.mrb[0].mxu0
        %v2297 = vadd.f32 0.0, %v2296
        %v2298 = vpop.f32.mrb[0].mxu0
        %v2299 = vadd.f32 0.0, %v2298
        %2300 = vmatprep.mubr.bf16.mxu0 0
        %2301 = vmatmul.mubr.bf16.gmra.mrb[0].mxu0 %v1986
        %v2302 = vpop.f32.mrb[0].mxu0
        %v2303 = vadd.f32 0.0, %v2302
        %v2304 = vpop.f32.mrb[0].mxu0
        %v2305 = vadd.f32 0.0, %v2304
        %v2306 = vpop.f32.mrb[0].mxu0
        %v2307 = vadd.f32 0.0, %v2306
        %v2308 = vpop.f32.mrb[0].mxu0
        %v2309 = vadd.f32 0.0, %v2308
        %2310 = vmatprep.mubr.bf16.mxu0 0
        %2311 = vmatmul.mubr.bf16.gmra.mrb[0].mxu0 %v1989
        %v2312 = vpop.f32.mrb[0].mxu0
        %v2313 = vadd.f32 0.0, %v2312
        %v2314 = vpop.f32.mrb[0].mxu0
        %v2315 = vadd.f32 0.0, %v2314
        %v2316 = vpop.f32.mrb[0].mxu0
        %v2317 = vadd.f32 0.0, %v2316
        %v2318 = vpop.f32.mrb[0].mxu0
        %v2319 = vadd.f32 0.0, %v2318
        %2320 = vmatprep.mubr.bf16.mxu0 0
        %2321 = vmatmul.mubr.bf16.gmra.mrb[0].mxu0 %v1992
        %v2322 = vpop.f32.mrb[0].mxu0
        %v2323 = vadd.f32 0.0, %v2322
        %v2324 = vpop.f32.mrb[0].mxu0
        %v2325 = vadd.f32 0.0, %v2324
        %v2326 = vpop.f32.mrb[0].mxu0
        %v2327 = vadd.f32 0.0, %v2326
        %v2328 = vpop.f32.mrb[0].mxu0
        %v2329 = vadd.f32 0.0, %v2328
        %2330 = vmatprep.mubr.bf16.mxu0 0
        %2331 = vmatmul.mubr.bf16.gmra.mrb[0].mxu0 %v1995
        %v2332 = vpop.f32.mrb[0].mxu0
        %v2333 = vadd.f32 0.0, %v2332
        %v2334 = vpop.f32.mrb[0].mxu0
        %v2335 = vadd.f32 0.0, %v2334
        %v2336 = vpop.f32.mrb[0].mxu0
        %v2337 = vadd.f32 0.0, %v2336
        %v2338 = vpop.f32.mrb[0].mxu0
        %v2339 = vadd.f32 0.0, %v2338
        %2340 = vmatprep.mubr.bf16.mxu0 0
        %2341 = vmatmul.mubr.bf16.gmra.mrb[0].mxu0 %v1998
        %v2342 = vpop.f32.mrb[0].mxu0
        %v2343 = vadd.f32 0.0, %v2342
        %v2344 = vpop.f32.mrb[0].mxu0
        %v2345 = vadd.f32 0.0, %v2344
        %v2346 = vpop.f32.mrb[0].mxu0
        %v2347 = vadd.f32 0.0, %v2346
        %v2348 = vpop.f32.mrb[0].mxu0
        %v2349 = vadd.f32 0.0, %v2348
        %2350 = vmatprep.mubr.bf16.mxu0 0
        %2351 = vmatmul.mubr.bf16.gmra.mrb[0].mxu0 %v2001
        %v2352 = vpop.f32.mrb[0].mxu0
        %v2353 = vadd.f32 0.0, %v2352
        %v2354 = vpop.f32.mrb[0].mxu0
        %v2355 = vadd.f32 0.0, %v2354
        %v2356 = vpop.f32.mrb[0].mxu0
        %v2357 = vadd.f32 0.0, %v2356
        %v2358 = vpop.f32.mrb[0].mxu0
        %v2359 = vadd.f32 0.0, %v2358
        %2360 = vmatprep.mubr.bf16.mxu0 0
        %2361 = vmatmul.mubr.bf16.gmra.mrb[0].mxu0 %v2004
        %v2362 = vpop.f32.mrb[0].mxu0
        %v2363 = vadd.f32 0.0, %v2362
        %v2364 = vpop.f32.mrb[0].mxu0
        %v2365 = vadd.f32 0.0, %v2364
        %v2366 = vpop.f32.mrb[0].mxu0
        %v2367 = vadd.f32 0.0, %v2366
        %v2368 = vpop.f32.mrb[0].mxu0
        %v2369 = vadd.f32 0.0, %v2368
        %2370 = vmatprep.mubr.bf16.mxu0 0
        %2371 = vmatmul.mubr.bf16.gmra.mrb[0].mxu0 %v2007
        %v2372 = vpop.f32.mrb[0].mxu0
        %v2373 = vadd.f32 0.0, %v2372
        %v2374 = vpop.f32.mrb[0].mxu0
        %v2375 = vadd.f32 0.0, %v2374
        %v2376 = vpop.f32.mrb[0].mxu0
        %v2377 = vadd.f32 0.0, %v2376
        %v2378 = vpop.f32.mrb[0].mxu0
        %v2379 = vadd.f32 0.0, %v2378
        %2380 = vmatprep.mubr.bf16.mxu0 0
        %2381 = vmatmul.mubr.bf16.gmra.mrb[0].mxu0 %v2010
        %v2382 = vpop.f32.mrb[0].mxu0
        %v2383 = vadd.f32 0.0, %v2382
        %v2384 = vpop.f32.mrb[0].mxu0
        %v2385 = vadd.f32 0.0, %v2384
        %v2386 = vpop.f32.mrb[0].mxu0
        %v2387 = vadd.f32 0.0, %v2386
        %v2388 = vpop.f32.mrb[0].mxu0
        %v2389 = vadd.f32 0.0, %v2388
        %2390 = vmatprep.mubr.bf16.mxu0 0
        %2391 = vmatmul.mubr.bf16.gmra.mrb[0].mxu0 %v2013
        %v2392 = vpop.f32.mrb[0].mxu0
        %v2393 = vadd.f32 0.0, %v2392
        %v2394 = vpop.f32.mrb[0].mxu0
        %v2395 = vadd.f32 0.0, %v2394
        %v2396 = vpop.f32.mrb[0].mxu0
        %v2397 = vadd.f32 0.0, %v2396
        %v2398 = vpop.f32.mrb[0].mxu0
        %v2399 = vadd.f32 0.0, %v2398
        %2400 = vdwg.mxu0
        %2401 = vmatprep.subr.bf16.mxu0 %v446
        %2402 = vmatpush1.bf16.msra.mxu0 %v445
        %2403 = vmatprep.subr.bf16.mxu0 %v454
        %2404 = vmatpush1.bf16.msra.mxu0 %v453
        %2405 = vmatprep.subr.bf16.mxu0 0
        %2406 = vmatpush1.bf16.msra.mxu0 0
        %2407 = vmatprep.subr.bf16.mxu0 0
        %2408 = vmatpush1.bf16.msra.mxu0 0
        %2409 = vmatprep.subr.bf16.mxu0 0
        %2410 = vmatpush1.bf16.msra.mxu0 0
        %2411 = vmatprep.subr.bf16.mxu0 0
        %2412 = vmatpush1.bf16.msra.mxu0 0
        %2413 = vmatprep.subr.bf16.mxu0 0
        %2414 = vmatpush1.bf16.msra.mxu0 0
        %2415 = vmatprep.subr.bf16.mxu0 0
        %2416 = vmatpush1.bf16.msra.mxu0 0
        %2417 = vmatprep.subr.bf16.mxu0 0
        %2418 = vmatpush1.bf16.msra.mxu0 0
        %2419 = vmatprep.subr.bf16.mxu0 0
        %2420 = vmatpush1.bf16.msra.mxu0 0
        %2421 = vmatprep.subr.bf16.mxu0 0
        %2422 = vmatpush1.bf16.msra.mxu0 0
        %2423 = vmatprep.subr.bf16.mxu0 0
        %2424 = vmatpush1.bf16.msra.mxu0 0
        %2425 = vmatprep.subr.bf16.mxu0 0
        %2426 = vmatpush1.bf16.msra.mxu0 0
        %2427 = vmatprep.subr.bf16.mxu0 0
        %2428 = vmatpush1.bf16.msra.mxu0 0
        %2429 = vmatprep.subr.bf16.mxu0 0
        %2430 = vmatpush1.bf16.msra.mxu0 0
        %2431 = vmatprep.subr.bf16.mxu0 0
        %2432 = vmatpush1.bf16.msra.mxu0 0
        %2433 = vmatprep.mubr.bf16.mxu0 0
        %2434 = vmatmul.mubr.bf16.gmra.mrb[0].mxu0 %v1968
        %v2435 = vpop.f32.mrb[0].mxu0
        %v2436 = vadd.f32 0.0, %v2435
        %v2437 = vpop.f32.mrb[0].mxu0
        %v2438 = vadd.f32 0.0, %v2437
        %v2439 = vpop.f32.mrb[0].mxu0
        %v2440 = vadd.f32 0.0, %v2439
        %v2441 = vpop.f32.mrb[0].mxu0
        %v2442 = vadd.f32 0.0, %v2441
        %2443 = vmatprep.mubr.bf16.mxu0 0
        %2444 = vmatmul.mubr.bf16.gmra.mrb[0].mxu0 %v1971
        %v2445 = vpop.f32.mrb[0].mxu0
        %v2446 = vadd.f32 0.0, %v2445
        %v2447 = vpop.f32.mrb[0].mxu0
        %v2448 = vadd.f32 0.0, %v2447
        %v2449 = vpop.f32.mrb[0].mxu0
        %v2450 = vadd.f32 0.0, %v2449
        %v2451 = vpop.f32.mrb[0].mxu0
        %v2452 = vadd.f32 0.0, %v2451
        %2453 = vmatprep.mubr.bf16.mxu0 0
        %2454 = vmatmul.mubr.bf16.gmra.mrb[0].mxu0 %v1974
        %v2455 = vpop.f32.mrb[0].mxu0
        %v2456 = vadd.f32 0.0, %v2455
        %v2457 = vpop.f32.mrb[0].mxu0
        %v2458 = vadd.f32 0.0, %v2457
        %v2459 = vpop.f32.mrb[0].mxu0
        %v2460 = vadd.f32 0.0, %v2459
        %v2461 = vpop.f32.mrb[0].mxu0
        %v2462 = vadd.f32 0.0, %v2461
        %2463 = vmatprep.mubr.bf16.mxu0 0
        %2464 = vmatmul.mubr.bf16.gmra.mrb[0].mxu0 %v1977
        %v2465 = vpop.f32.mrb[0].mxu0
        %v2466 = vadd.f32 0.0, %v2465
        %v2467 = vpop.f32.mrb[0].mxu0
        %v2468 = vadd.f32 0.0, %v2467
        %v2469 = vpop.f32.mrb[0].mxu0
        %v2470 = vadd.f32 0.0, %v2469
        %v2471 = vpop.f32.mrb[0].mxu0
        %v2472 = vadd.f32 0.0, %v2471
        %2473 = vmatprep.mubr.bf16.mxu0 0
        %2474 = vmatmul.mubr.bf16.gmra.mrb[0].mxu0 %v1980
        %v2475 = vpop.f32.mrb[0].mxu0
        %v2476 = vadd.f32 0.0, %v2475
        %v2477 = vpop.f32.mrb[0].mxu0
        %v2478 = vadd.f32 0.0, %v2477
        %v2479 = vpop.f32.mrb[0].mxu0
        %v2480 = vadd.f32 0.0, %v2479
        %v2481 = vpop.f32.mrb[0].mxu0
        %v2482 = vadd.f32 0.0, %v2481
        %2483 = vmatprep.mubr.bf16.mxu0 0
        %2484 = vmatmul.mubr.bf16.gmra.mrb[0].mxu0 %v1983
        %v2485 = vpop.f32.mrb[0].mxu0
        %v2486 = vadd.f32 0.0, %v2485
        %v2487 = vpop.f32.mrb[0].mxu0
        %v2488 = vadd.f32 0.0, %v2487
        %v2489 = vpop.f32.mrb[0].mxu0
        %v2490 = vadd.f32 0.0, %v2489
        %v2491 = vpop.f32.mrb[0].mxu0
        %v2492 = vadd.f32 0.0, %v2491
        %2493 = vmatprep.mubr.bf16.mxu0 0
        %2494 = vmatmul.mubr.bf16.gmra.mrb[0].mxu0 %v1986
        %v2495 = vpop.f32.mrb[0].mxu0
        %v2496 = vadd.f32 0.0, %v2495
        %v2497 = vpop.f32.mrb[0].mxu0
        %v2498 = vadd.f32 0.0, %v2497
        %v2499 = vpop.f32.mrb[0].mxu0
        %v2500 = vadd.f32 0.0, %v2499
        %v2501 = vpop.f32.mrb[0].mxu0
        %v2502 = vadd.f32 0.0, %v2501
        %2503 = vmatprep.mubr.bf16.mxu0 0
        %2504 = vmatmul.mubr.bf16.gmra.mrb[0].mxu0 %v1989
        %v2505 = vpop.f32.mrb[0].mxu0
        %v2506 = vadd.f32 0.0, %v2505
        %v2507 = vpop.f32.mrb[0].mxu0
        %v2508 = vadd.f32 0.0, %v2507
        %v2509 = vpop.f32.mrb[0].mxu0
        %v2510 = vadd.f32 0.0, %v2509
        %v2511 = vpop.f32.mrb[0].mxu0
        %v2512 = vadd.f32 0.0, %v2511
        %2513 = vmatprep.mubr.bf16.mxu0 0
        %2514 = vmatmul.mubr.bf16.gmra.mrb[0].mxu0 %v1992
        %v2515 = vpop.f32.mrb[0].mxu0
        %v2516 = vadd.f32 0.0, %v2515
        %v2517 = vpop.f32.mrb[0].mxu0
        %v2518 = vadd.f32 0.0, %v2517
        %v2519 = vpop.f32.mrb[0].mxu0
        %v2520 = vadd.f32 0.0, %v2519
        %v2521 = vpop.f32.mrb[0].mxu0
        %v2522 = vadd.f32 0.0, %v2521
        %2523 = vmatprep.mubr.bf16.mxu0 0
        %2524 = vmatmul.mubr.bf16.gmra.mrb[0].mxu0 %v1995
        %v2525 = vpop.f32.mrb[0].mxu0
        %v2526 = vadd.f32 0.0, %v2525
        %v2527 = vpop.f32.mrb[0].mxu0
        %v2528 = vadd.f32 0.0, %v2527
        %v2529 = vpop.f32.mrb[0].mxu0
        %v2530 = vadd.f32 0.0, %v2529
        %v2531 = vpop.f32.mrb[0].mxu0
        %v2532 = vadd.f32 0.0, %v2531
        %2533 = vmatprep.mubr.bf16.mxu0 0
        %2534 = vmatmul.mubr.bf16.gmra.mrb[0].mxu0 %v1998
        %v2535 = vpop.f32.mrb[0].mxu0
        %v2536 = vadd.f32 0.0, %v2535
        %v2537 = vpop.f32.mrb[0].mxu0
        %v2538 = vadd.f32 0.0, %v2537
        %v2539 = vpop.f32.mrb[0].mxu0
        %v2540 = vadd.f32 0.0, %v2539
        %v2541 = vpop.f32.mrb[0].mxu0
        %v2542 = vadd.f32 0.0, %v2541
        %2543 = vmatprep.mubr.bf16.mxu0 0
        %2544 = vmatmul.mubr.bf16.gmra.mrb[0].mxu0 %v2001
        %v2545 = vpop.f32.mrb[0].mxu0
        %v2546 = vadd.f32 0.0, %v2545
        %v2547 = vpop.f32.mrb[0].mxu0
        %v2548 = vadd.f32 0.0, %v2547
        %v2549 = vpop.f32.mrb[0].mxu0
        %v2550 = vadd.f32 0.0, %v2549
        %v2551 = vpop.f32.mrb[0].mxu0
        %v2552 = vadd.f32 0.0, %v2551
        %2553 = vmatprep.mubr.bf16.mxu0 0
        %2554 = vmatmul.mubr.bf16.gmra.mrb[0].mxu0 %v2004
        %v2555 = vpop.f32.mrb[0].mxu0
        %v2556 = vadd.f32 0.0, %v2555
        %v2557 = vpop.f32.mrb[0].mxu0
        %v2558 = vadd.f32 0.0, %v2557
        %v2559 = vpop.f32.mrb[0].mxu0
        %v2560 = vadd.f32 0.0, %v2559
        %v2561 = vpop.f32.mrb[0].mxu0
        %v2562 = vadd.f32 0.0, %v2561
        %2563 = vmatprep.mubr.bf16.mxu0 0
        %2564 = vmatmul.mubr.bf16.gmra.mrb[0].mxu0 %v2007
        %v2565 = vpop.f32.mrb[0].mxu0
        %v2566 = vadd.f32 0.0, %v2565
        %v2567 = vpop.f32.mrb[0].mxu0
        %v2568 = vadd.f32 0.0, %v2567
        %v2569 = vpop.f32.mrb[0].mxu0
        %v2570 = vadd.f32 0.0, %v2569
        %v2571 = vpop.f32.mrb[0].mxu0
        %v2572 = vadd.f32 0.0, %v2571
        %2573 = vmatprep.mubr.bf16.mxu0 0
        %2574 = vmatmul.mubr.bf16.gmra.mrb[0].mxu0 %v2010
        %v2575 = vpop.f32.mrb[0].mxu0
        %v2576 = vadd.f32 0.0, %v2575
        %v2577 = vpop.f32.mrb[0].mxu0
        %v2578 = vadd.f32 0.0, %v2577
        %v2579 = vpop.f32.mrb[0].mxu0
        %v2580 = vadd.f32 0.0, %v2579
        %v2581 = vpop.f32.mrb[0].mxu0
        %v2582 = vadd.f32 0.0, %v2581
        %2583 = vmatprep.mubr.bf16.mxu0 0
        %2584 = vmatmul.mubr.bf16.gmra.mrb[0].mxu0 %v2013
        %v2585 = vpop.f32.mrb[0].mxu0
        %v2586 = vadd.f32 0.0, %v2585
        %v2587 = vpop.f32.mrb[0].mxu0
        %v2588 = vadd.f32 0.0, %v2587
        %v2589 = vpop.f32.mrb[0].mxu0
        %v2590 = vadd.f32 0.0, %v2589
        %v2591 = vpop.f32.mrb[0].mxu0
        %v2592 = vadd.f32 0.0, %v2591
        %2593 = vdwg.mxu0
        %2594 = vmatprep.subr.bf16.mxu0 %v448
        %2595 = vmatpush1.bf16.msra.mxu0 %v447
        %2596 = vmatprep.subr.bf16.mxu0 %v456
        %2597 = vmatpush1.bf16.msra.mxu0 %v455
        %2598 = vmatprep.subr.bf16.mxu0 0
        %2599 = vmatpush1.bf16.msra.mxu0 0
        %2600 = vmatprep.subr.bf16.mxu0 0
        %2601 = vmatpush1.bf16.msra.mxu0 0
        %2602 = vmatprep.subr.bf16.mxu0 0
        %2603 = vmatpush1.bf16.msra.mxu0 0
        %2604 = vmatprep.subr.bf16.mxu0 0
        %2605 = vmatpush1.bf16.msra.mxu0 0
        %2606 = vmatprep.subr.bf16.mxu0 0
        %2607 = vmatpush1.bf16.msra.mxu0 0
        %2608 = vmatprep.subr.bf16.mxu0 0
        %2609 = vmatpush1.bf16.msra.mxu0 0
        %2610 = vmatprep.subr.bf16.mxu0 0
        %2611 = vmatpush1.bf16.msra.mxu0 0
        %2612 = vmatprep.subr.bf16.mxu0 0
        %2613 = vmatpush1.bf16.msra.mxu0 0
        %2614 = vmatprep.subr.bf16.mxu0 0
        %2615 = vmatpush1.bf16.msra.mxu0 0
        %2616 = vmatprep.subr.bf16.mxu0 0
        %2617 = vmatpush1.bf16.msra.mxu0 0
        %2618 = vmatprep.subr.bf16.mxu0 0
        %2619 = vmatpush1.bf16.msra.mxu0 0
        %2620 = vmatprep.subr.bf16.mxu0 0
        %2621 = vmatpush1.bf16.msra.mxu0 0
        %2622 = vmatprep.subr.bf16.mxu0 0
        %2623 = vmatpush1.bf16.msra.mxu0 0
        %2624 = vmatprep.subr.bf16.mxu0 0
        %2625 = vmatpush1.bf16.msra.mxu0 0
        %2626 = vmatprep.mubr.bf16.mxu0 0
        %2627 = vmatmul.mubr.bf16.gmra.mrb[0].mxu0 %v1968
        %v2628 = vpop.f32.mrb[0].mxu0
        %v2629 = vadd.f32 0.0, %v2628
        %v2630 = vpop.f32.mrb[0].mxu0
        %v2631 = vadd.f32 0.0, %v2630
        %v2632 = vpop.f32.mrb[0].mxu0
        %v2633 = vadd.f32 0.0, %v2632
        %v2634 = vpop.f32.mrb[0].mxu0
        %v2635 = vadd.f32 0.0, %v2634
        %2636 = vmatprep.mubr.bf16.mxu0 0
        %2637 = vmatmul.mubr.bf16.gmra.mrb[0].mxu0 %v1971
        %v2638 = vpop.f32.mrb[0].mxu0
        %v2639 = vadd.f32 0.0, %v2638
        %v2640 = vpop.f32.mrb[0].mxu0
        %v2641 = vadd.f32 0.0, %v2640
        %v2642 = vpop.f32.mrb[0].mxu0
        %v2643 = vadd.f32 0.0, %v2642
        %v2644 = vpop.f32.mrb[0].mxu0
        %v2645 = vadd.f32 0.0, %v2644
        %2646 = vmatprep.mubr.bf16.mxu0 0
        %2647 = vmatmul.mubr.bf16.gmra.mrb[0].mxu0 %v1974
        %v2648 = vpop.f32.mrb[0].mxu0
        %v2649 = vadd.f32 0.0, %v2648
        %v2650 = vpop.f32.mrb[0].mxu0
        %v2651 = vadd.f32 0.0, %v2650
        %v2652 = vpop.f32.mrb[0].mxu0
        %v2653 = vadd.f32 0.0, %v2652
        %v2654 = vpop.f32.mrb[0].mxu0
        %v2655 = vadd.f32 0.0, %v2654
        %2656 = vmatprep.mubr.bf16.mxu0 0
        %2657 = vmatmul.mubr.bf16.gmra.mrb[0].mxu0 %v1977
        %v2658 = vpop.f32.mrb[0].mxu0
        %v2659 = vadd.f32 0.0, %v2658
        %v2660 = vpop.f32.mrb[0].mxu0
        %v2661 = vadd.f32 0.0, %v2660
        %v2662 = vpop.f32.mrb[0].mxu0
        %v2663 = vadd.f32 0.0, %v2662
        %v2664 = vpop.f32.mrb[0].mxu0
        %v2665 = vadd.f32 0.0, %v2664
        %2666 = vmatprep.mubr.bf16.mxu0 0
        %2667 = vmatmul.mubr.bf16.gmra.mrb[0].mxu0 %v1980
        %v2668 = vpop.f32.mrb[0].mxu0
        %v2669 = vadd.f32 0.0, %v2668
        %v2670 = vpop.f32.mrb[0].mxu0
        %v2671 = vadd.f32 0.0, %v2670
        %v2672 = vpop.f32.mrb[0].mxu0
        %v2673 = vadd.f32 0.0, %v2672
        %v2674 = vpop.f32.mrb[0].mxu0
        %v2675 = vadd.f32 0.0, %v2674
        %2676 = vmatprep.mubr.bf16.mxu0 0
        %2677 = vmatmul.mubr.bf16.gmra.mrb[0].mxu0 %v1983
        %v2678 = vpop.f32.mrb[0].mxu0
        %v2679 = vadd.f32 0.0, %v2678
        %v2680 = vpop.f32.mrb[0].mxu0
        %v2681 = vadd.f32 0.0, %v2680
        %v2682 = vpop.f32.mrb[0].mxu0
        %v2683 = vadd.f32 0.0, %v2682
        %v2684 = vpop.f32.mrb[0].mxu0
        %v2685 = vadd.f32 0.0, %v2684
        %2686 = vmatprep.mubr.bf16.mxu0 0
        %2687 = vmatmul.mubr.bf16.gmra.mrb[0].mxu0 %v1986
        %v2688 = vpop.f32.mrb[0].mxu0
        %v2689 = vadd.f32 0.0, %v2688
        %v2690 = vpop.f32.mrb[0].mxu0
        %v2691 = vadd.f32 0.0, %v2690
        %v2692 = vpop.f32.mrb[0].mxu0
        %v2693 = vadd.f32 0.0, %v2692
        %v2694 = vpop.f32.mrb[0].mxu0
        %v2695 = vadd.f32 0.0, %v2694
        %2696 = vmatprep.mubr.bf16.mxu0 0
        %2697 = vmatmul.mubr.bf16.gmra.mrb[0].mxu0 %v1989
        %v2698 = vpop.f32.mrb[0].mxu0
        %v2699 = vadd.f32 0.0, %v2698
        %v2700 = vpop.f32.mrb[0].mxu0
        %v2701 = vadd.f32 0.0, %v2700
        %v2702 = vpop.f32.mrb[0].mxu0
        %v2703 = vadd.f32 0.0, %v2702
        %v2704 = vpop.f32.mrb[0].mxu0
        %v2705 = vadd.f32 0.0, %v2704
        %2706 = vmatprep.mubr.bf16.mxu0 0
        %2707 = vmatmul.mubr.bf16.gmra.mrb[0].mxu0 %v1992
        %v2708 = vpop.f32.mrb[0].mxu0
        %v2709 = vadd.f32 0.0, %v2708
        %v2710 = vpop.f32.mrb[0].mxu0
        %v2711 = vadd.f32 0.0, %v2710
        %v2712 = vpop.f32.mrb[0].mxu0
        %v2713 = vadd.f32 0.0, %v2712
        %v2714 = vpop.f32.mrb[0].mxu0
        %v2715 = vadd.f32 0.0, %v2714
        %2716 = vmatprep.mubr.bf16.mxu0 0
        %2717 = vmatmul.mubr.bf16.gmra.mrb[0].mxu0 %v1995
        %v2718 = vpop.f32.mrb[0].mxu0
        %v2719 = vadd.f32 0.0, %v2718
        %v2720 = vpop.f32.mrb[0].mxu0
        %v2721 = vadd.f32 0.0, %v2720
        %v2722 = vpop.f32.mrb[0].mxu0
        %v2723 = vadd.f32 0.0, %v2722
        %v2724 = vpop.f32.mrb[0].mxu0
        %v2725 = vadd.f32 0.0, %v2724
        %2726 = vmatprep.mubr.bf16.mxu0 0
        %2727 = vmatmul.mubr.bf16.gmra.mrb[0].mxu0 %v1998
        %v2728 = vpop.f32.mrb[0].mxu0
        %v2729 = vadd.f32 0.0, %v2728
        %v2730 = vpop.f32.mrb[0].mxu0
        %v2731 = vadd.f32 0.0, %v2730
        %v2732 = vpop.f32.mrb[0].mxu0
        %v2733 = vadd.f32 0.0, %v2732
        %v2734 = vpop.f32.mrb[0].mxu0
        %v2735 = vadd.f32 0.0, %v2734
        %2736 = vmatprep.mubr.bf16.mxu0 0
        %2737 = vmatmul.mubr.bf16.gmra.mrb[0].mxu0 %v2001
        %v2738 = vpop.f32.mrb[0].mxu0
        %v2739 = vadd.f32 0.0, %v2738
        %v2740 = vpop.f32.mrb[0].mxu0
        %v2741 = vadd.f32 0.0, %v2740
        %v2742 = vpop.f32.mrb[0].mxu0
        %v2743 = vadd.f32 0.0, %v2742
        %v2744 = vpop.f32.mrb[0].mxu0
        %v2745 = vadd.f32 0.0, %v2744
        %2746 = vmatprep.mubr.bf16.mxu0 0
        %2747 = vmatmul.mubr.bf16.gmra.mrb[0].mxu0 %v2004
        %v2748 = vpop.f32.mrb[0].mxu0
        %v2749 = vadd.f32 0.0, %v2748
        %v2750 = vpop.f32.mrb[0].mxu0
        %v2751 = vadd.f32 0.0, %v2750
        %v2752 = vpop.f32.mrb[0].mxu0
        %v2753 = vadd.f32 0.0, %v2752
        %v2754 = vpop.f32.mrb[0].mxu0
        %v2755 = vadd.f32 0.0, %v2754
        %2756 = vmatprep.mubr.bf16.mxu0 0
        %2757 = vmatmul.mubr.bf16.gmra.mrb[0].mxu0 %v2007
        %v2758 = vpop.f32.mrb[0].mxu0
        %v2759 = vadd.f32 0.0, %v2758
        %v2760 = vpop.f32.mrb[0].mxu0
        %v2761 = vadd.f32 0.0, %v2760
        %v2762 = vpop.f32.mrb[0].mxu0
        %v2763 = vadd.f32 0.0, %v2762
        %v2764 = vpop.f32.mrb[0].mxu0
        %v2765 = vadd.f32 0.0, %v2764
        %2766 = vmatprep.mubr.bf16.mxu0 0
        %2767 = vmatmul.mubr.bf16.gmra.mrb[0].mxu0 %v2010
        %v2768 = vpop.f32.mrb[0].mxu0
        %v2769 = vadd.f32 0.0, %v2768
        %v2770 = vpop.f32.mrb[0].mxu0
        %v2771 = vadd.f32 0.0, %v2770
        %v2772 = vpop.f32.mrb[0].mxu0
        %v2773 = vadd.f32 0.0, %v2772
        %v2774 = vpop.f32.mrb[0].mxu0
        %v2775 = vadd.f32 0.0, %v2774
        %2776 = vmatprep.mubr.bf16.mxu0 0
        %2777 = vmatmul.mubr.bf16.gmra.mrb[0].mxu0 %v2013
        %v2778 = vpop.f32.mrb[0].mxu0
        %v2779 = vadd.f32 0.0, %v2778
        %v2780 = vpop.f32.mrb[0].mxu0
        %v2781 = vadd.f32 0.0, %v2780
        %v2782 = vpop.f32.mrb[0].mxu0
        %v2783 = vadd.f32 0.0, %v2782
        %v2784 = vpop.f32.mrb[0].mxu0
        %v2785 = vadd.f32 0.0, %v2784
        %2786 = vdwg.mxu0
        %v2787 = vmax.f32 %v2050, 0.0
        %v2788 = vmax.f32 %v2052, 0.0
        %v2789 = vmax.f32 %v2243, 0.0
        %v2790 = vmax.f32 %v2245, 0.0
        %v2791 = vmax.f32 %v2436, 0.0
        %v2792 = vmax.f32 %v2438, 0.0
        %v2793 = vmax.f32 %v2629, 0.0
        %v2794 = vmax.f32 %v2631, 0.0
        %v2795 = vmax.f32 %v2054, 0.0
        %v2796 = vmax.f32 %v2056, 0.0
        %v2797 = vmax.f32 %v2247, 0.0
        %v2798 = vmax.f32 %v2249, 0.0
        %v2799 = vmax.f32 %v2440, 0.0
        %v2800 = vmax.f32 %v2442, 0.0
        %v2801 = vmax.f32 %v2633, 0.0
        %v2802 = vmax.f32 %v2635, 0.0
        %v2803 = vmax.f32 %v2060, 0.0
        %v2804 = vmax.f32 %v2062, 0.0
        %v2805 = vmax.f32 %v2253, 0.0
        %v2806 = vmax.f32 %v2255, 0.0
        %v2807 = vmax.f32 %v2446, 0.0
        %v2808 = vmax.f32 %v2448, 0.0
        %v2809 = vmax.f32 %v2639, 0.0
        %v2810 = vmax.f32 %v2641, 0.0
        %v2811 = vmax.f32 %v2064, 0.0
        %v2812 = vmax.f32 %v2066, 0.0
        %v2813 = vmax.f32 %v2257, 0.0
        %v2814 = vmax.f32 %v2259, 0.0
        %v2815 = vmax.f32 %v2450, 0.0
        %v2816 = vmax.f32 %v2452, 0.0
        %v2817 = vmax.f32 %v2643, 0.0
        %v2818 = vmax.f32 %v2645, 0.0
        %v2819 = vmax.f32 %v2070, 0.0
        %v2820 = vmax.f32 %v2072, 0.0
        %v2821 = vmax.f32 %v2263, 0.0
        %v2822 = vmax.f32 %v2265, 0.0
        %v2823 = vmax.f32 %v2456, 0.0
        %v2824 = vmax.f32 %v2458, 0.0
        %v2825 = vmax.f32 %v2649, 0.0
        %v2826 = vmax.f32 %v2651, 0.0
        %v2827 = vmax.f32 %v2074, 0.0
        %v2828 = vmax.f32 %v2076, 0.0
        %v2829 = vmax.f32 %v2267, 0.0
        %v2830 = vmax.f32 %v2269, 0.0
        %v2831 = vmax.f32 %v2460, 0.0
        %v2832 = vmax.f32 %v2462, 0.0
        %v2833 = vmax.f32 %v2653, 0.0
        %v2834 = vmax.f32 %v2655, 0.0
        %v2835 = vmax.f32 %v2080, 0.0
        %v2836 = vmax.f32 %v2082, 0.0
        %v2837 = vmax.f32 %v2273, 0.0
        %v2838 = vmax.f32 %v2275, 0.0
        %v2839 = vmax.f32 %v2466, 0.0
        %v2840 = vmax.f32 %v2468, 0.0
        %v2841 = vmax.f32 %v2659, 0.0
        %v2842 = vmax.f32 %v2661, 0.0
        %v2843 = vmax.f32 %v2084, 0.0
        %v2844 = vmax.f32 %v2086, 0.0
        %v2845 = vmax.f32 %v2277, 0.0
        %v2846 = vmax.f32 %v2279, 0.0
        %v2847 = vmax.f32 %v2470, 0.0
        %v2848 = vmax.f32 %v2472, 0.0
        %v2849 = vmax.f32 %v2663, 0.0
        %v2850 = vmax.f32 %v2665, 0.0
        %v2851 = vmax.f32 %v2090, 0.0
        %v2852 = vmax.f32 %v2092, 0.0
        %v2853 = vmax.f32 %v2283, 0.0
        %v2854 = vmax.f32 %v2285, 0.0
        %v2855 = vmax.f32 %v2476, 0.0
        %v2856 = vmax.f32 %v2478, 0.0
        %v2857 = vmax.f32 %v2669, 0.0
        %v2858 = vmax.f32 %v2671, 0.0
        %v2859 = vmax.f32 %v2094, 0.0
        %v2860 = vmax.f32 %v2096, 0.0
        %v2861 = vmax.f32 %v2287, 0.0
        %v2862 = vmax.f32 %v2289, 0.0
        %v2863 = vmax.f32 %v2480, 0.0
        %v2864 = vmax.f32 %v2482, 0.0
        %v2865 = vmax.f32 %v2673, 0.0
        %v2866 = vmax.f32 %v2675, 0.0
        %v2867 = vmax.f32 %v2100, 0.0
        %v2868 = vmax.f32 %v2102, 0.0
        %v2869 = vmax.f32 %v2293, 0.0
        %v2870 = vmax.f32 %v2295, 0.0
        %v2871 = vmax.f32 %v2486, 0.0
        %v2872 = vmax.f32 %v2488, 0.0
        %v2873 = vmax.f32 %v2679, 0.0
        %v2874 = vmax.f32 %v2681, 0.0
        %v2875 = vmax.f32 %v2104, 0.0
        %v2876 = vmax.f32 %v2106, 0.0
        %v2877 = vmax.f32 %v2297, 0.0
        %v2878 = vmax.f32 %v2299, 0.0
        %v2879 = vmax.f32 %v2490, 0.0
        %v2880 = vmax.f32 %v2492, 0.0
        %v2881 = vmax.f32 %v2683, 0.0
        %v2882 = vmax.f32 %v2685, 0.0
        %v2883 = vmax.f32 %v2110, 0.0
        %v2884 = vmax.f32 %v2112, 0.0
        %v2885 = vmax.f32 %v2303, 0.0
        %v2886 = vmax.f32 %v2305, 0.0
        %v2887 = vmax.f32 %v2496, 0.0
        %v2888 = vmax.f32 %v2498, 0.0
        %v2889 = vmax.f32 %v2689, 0.0
        %v2890 = vmax.f32 %v2691, 0.0
        %v2891 = vmax.f32 %v2114, 0.0
        %v2892 = vmax.f32 %v2116, 0.0
        %v2893 = vmax.f32 %v2307, 0.0
        %v2894 = vmax.f32 %v2309, 0.0
        %v2895 = vmax.f32 %v2500, 0.0
        %v2896 = vmax.f32 %v2502, 0.0
        %v2897 = vmax.f32 %v2693, 0.0
        %v2898 = vmax.f32 %v2695, 0.0
        %v2899 = vmax.f32 %v2120, 0.0
        %v2900 = vmax.f32 %v2122, 0.0
        %v2901 = vmax.f32 %v2313, 0.0
        %v2902 = vmax.f32 %v2315, 0.0
        %v2903 = vmax.f32 %v2506, 0.0
        %v2904 = vmax.f32 %v2508, 0.0
        %v2905 = vmax.f32 %v2699, 0.0
        %v2906 = vmax.f32 %v2701, 0.0
        %v2907 = vmax.f32 %v2124, 0.0
        %v2908 = vmax.f32 %v2126, 0.0
        %v2909 = vmax.f32 %v2317, 0.0
        %v2910 = vmax.f32 %v2319, 0.0
        %v2911 = vmax.f32 %v2510, 0.0
        %v2912 = vmax.f32 %v2512, 0.0
        %v2913 = vmax.f32 %v2703, 0.0
        %v2914 = vmax.f32 %v2705, 0.0
        %v2915 = vmax.f32 %v2130, 0.0
        %v2916 = vmax.f32 %v2132, 0.0
        %v2917 = vmax.f32 %v2323, 0.0
        %v2918 = vmax.f32 %v2325, 0.0
        %v2919 = vmax.f32 %v2516, 0.0
        %v2920 = vmax.f32 %v2518, 0.0
        %v2921 = vmax.f32 %v2709, 0.0
        %v2922 = vmax.f32 %v2711, 0.0
        %v2923 = vmax.f32 %v2134, 0.0
        %v2924 = vmax.f32 %v2136, 0.0
        %v2925 = vmax.f32 %v2327, 0.0
        %v2926 = vmax.f32 %v2329, 0.0
        %v2927 = vmax.f32 %v2520, 0.0
        %v2928 = vmax.f32 %v2522, 0.0
        %v2929 = vmax.f32 %v2713, 0.0
        %v2930 = vmax.f32 %v2715, 0.0
        %v2931 = vmax.f32 %v2140, 0.0
        %v2932 = vmax.f32 %v2142, 0.0
        %v2933 = vmax.f32 %v2333, 0.0
        %v2934 = vmax.f32 %v2335, 0.0
        %v2935 = vmax.f32 %v2526, 0.0
        %v2936 = vmax.f32 %v2528, 0.0
        %v2937 = vmax.f32 %v2719, 0.0
        %v2938 = vmax.f32 %v2721, 0.0
        %v2939 = vmax.f32 %v2144, 0.0
        %v2940 = vmax.f32 %v2146, 0.0
        %v2941 = vmax.f32 %v2337, 0.0
        %v2942 = vmax.f32 %v2339, 0.0
        %v2943 = vmax.f32 %v2530, 0.0
        %v2944 = vmax.f32 %v2532, 0.0
        %v2945 = vmax.f32 %v2723, 0.0
        %v2946 = vmax.f32 %v2725, 0.0
        %v2947 = vmax.f32 %v2150, 0.0
        %v2948 = vmax.f32 %v2152, 0.0
        %v2949 = vmax.f32 %v2343, 0.0
        %v2950 = vmax.f32 %v2345, 0.0
        %v2951 = vmax.f32 %v2536, 0.0
        %v2952 = vmax.f32 %v2538, 0.0
        %v2953 = vmax.f32 %v2729, 0.0
        %v2954 = vmax.f32 %v2731, 0.0
        %v2955 = vmax.f32 %v2154, 0.0
        %v2956 = vmax.f32 %v2156, 0.0
        %v2957 = vmax.f32 %v2347, 0.0
        %v2958 = vmax.f32 %v2349, 0.0
        %v2959 = vmax.f32 %v2540, 0.0
        %v2960 = vmax.f32 %v2542, 0.0
        %v2961 = vmax.f32 %v2733, 0.0
        %v2962 = vmax.f32 %v2735, 0.0
        %v2963 = vmax.f32 %v2160, 0.0
        %v2964 = vmax.f32 %v2162, 0.0
        %v2965 = vmax.f32 %v2353, 0.0
        %v2966 = vmax.f32 %v2355, 0.0
        %v2967 = vmax.f32 %v2546, 0.0
        %v2968 = vmax.f32 %v2548, 0.0
        %v2969 = vmax.f32 %v2739, 0.0
        %v2970 = vmax.f32 %v2741, 0.0
        %v2971 = vmax.f32 %v2164, 0.0
        %v2972 = vmax.f32 %v2166, 0.0
        %v2973 = vmax.f32 %v2357, 0.0
        %v2974 = vmax.f32 %v2359, 0.0
        %v2975 = vmax.f32 %v2550, 0.0
        %v2976 = vmax.f32 %v2552, 0.0
        %v2977 = vmax.f32 %v2743, 0.0
        %v2978 = vmax.f32 %v2745, 0.0
        %v2979 = vmax.f32 %v2170, 0.0
        %v2980 = vmax.f32 %v2172, 0.0
        %v2981 = vmax.f32 %v2363, 0.0
        %v2982 = vmax.f32 %v2365, 0.0
        %v2983 = vmax.f32 %v2556, 0.0
        %v2984 = vmax.f32 %v2558, 0.0
        %v2985 = vmax.f32 %v2749, 0.0
        %v2986 = vmax.f32 %v2751, 0.0
        %v2987 = vmax.f32 %v2174, 0.0
        %v2988 = vmax.f32 %v2176, 0.0
        %v2989 = vmax.f32 %v2367, 0.0
        %v2990 = vmax.f32 %v2369, 0.0
        %v2991 = vmax.f32 %v2560, 0.0
        %v2992 = vmax.f32 %v2562, 0.0
        %v2993 = vmax.f32 %v2753, 0.0
        %v2994 = vmax.f32 %v2755, 0.0
        %v2995 = vmax.f32 %v2180, 0.0
        %v2996 = vmax.f32 %v2182, 0.0
        %v2997 = vmax.f32 %v2373, 0.0
        %v2998 = vmax.f32 %v2375, 0.0
        %v2999 = vmax.f32 %v2566, 0.0
        %v3000 = vmax.f32 %v2568, 0.0
        %v3001 = vmax.f32 %v2759, 0.0
        %v3002 = vmax.f32 %v2761, 0.0
        %v3003 = vmax.f32 %v2184, 0.0
        %v3004 = vmax.f32 %v2186, 0.0
        %v3005 = vmax.f32 %v2377, 0.0
        %v3006 = vmax.f32 %v2379, 0.0
        %v3007 = vmax.f32 %v2570, 0.0
        %v3008 = vmax.f32 %v2572, 0.0
        %v3009 = vmax.f32 %v2763, 0.0
        %v3010 = vmax.f32 %v2765, 0.0
        %v3011 = vmax.f32 %v2190, 0.0
        %v3012 = vmax.f32 %v2192, 0.0
        %v3013 = vmax.f32 %v2383, 0.0
        %v3014 = vmax.f32 %v2385, 0.0
        %v3015 = vmax.f32 %v2576, 0.0
        %v3016 = vmax.f32 %v2578, 0.0
        %v3017 = vmax.f32 %v2769, 0.0
        %v3018 = vmax.f32 %v2771, 0.0
        %v3019 = vmax.f32 %v2194, 0.0
        %v3020 = vmax.f32 %v2196, 0.0
        %v3021 = vmax.f32 %v2387, 0.0
        %v3022 = vmax.f32 %v2389, 0.0
        %v3023 = vmax.f32 %v2580, 0.0
        %v3024 = vmax.f32 %v2582, 0.0
        %v3025 = vmax.f32 %v2773, 0.0
        %v3026 = vmax.f32 %v2775, 0.0
        %v3027 = vmax.f32 %v2200, 0.0
        %v3028 = vmax.f32 %v2202, 0.0
        %v3029 = vmax.f32 %v2393, 0.0
        %v3030 = vmax.f32 %v2395, 0.0
        %v3031 = vmax.f32 %v2586, 0.0
        %v3032 = vmax.f32 %v2588, 0.0
        %v3033 = vmax.f32 %v2779, 0.0
        %v3034 = vmax.f32 %v2781, 0.0
        %v3035 = vmax.f32 %v2204, 0.0
        %v3036 = vmax.f32 %v2206, 0.0
        %v3037 = vmax.f32 %v2397, 0.0
        %v3038 = vmax.f32 %v2399, 0.0
        %v3039 = vmax.f32 %v2590, 0.0
        %v3040 = vmax.f32 %v2592, 0.0
        %v3041 = vmax.f32 %v2783, 0.0
        %v3042 = vmax.f32 %v2785, 0.0
        %v3043 = vadd.f32 %v2787, %v2795
        %v3044 = vadd.f32 %v3043, %v2803
        %v3045 = vadd.f32 %v3044, %v2811
        %v3046 = vadd.f32 %v3045, %v2819
        %v3047 = vadd.f32 %v3046, %v2827
        %v3048 = vadd.f32 %v3047, %v2835
        %v3049 = vadd.f32 %v3048, %v2843
        %v3050 = vadd.f32 %v3049, %v2851
        %v3051 = vadd.f32 %v3050, %v2859
        %v3052 = vadd.f32 %v3051, %v2867
        %v3053 = vadd.f32 %v3052, %v2875
        %v3054 = vadd.f32 %v3053, %v2883
        %v3055 = vadd.f32 %v3054, %v2891
        %v3056 = vadd.f32 %v3055, %v2899
        %v3057 = vadd.f32 %v3056, %v2907
        %v3058 = vadd.f32 %v3057, %v2915
        %v3059 = vadd.f32 %v3058, %v2923
        %v3060 = vadd.f32 %v3059, %v2931
        %v3061 = vadd.f32 %v3060, %v2939
        %v3062 = vadd.f32 %v3061, %v2947
        %v3063 = vadd.f32 %v3062, %v2955
        %v3064 = vadd.f32 %v3063, %v2963
        %v3065 = vadd.f32 %v3064, %v2971
        %v3066 = vadd.f32 %v3065, %v2979
        %v3067 = vadd.f32 %v3066, %v2987
        %v3068 = vadd.f32 %v3067, %v2995
        %v3069 = vadd.f32 %v3068, %v3003
        %v3070 = vadd.f32 %v3069, %v3011
        %v3071 = vadd.f32 %v3070, %v3019
        %v3072 = vadd.f32 %v3071, %v3027
        %v3073 = vadd.f32 %v3072, %v3035
        %v3074 = vrot.slane %v3073, 4
        %v3075 = vadd.f32 %v3073, %v3074
        %v3076 = vrot.slane %v3075, 2
        %v3077 = vadd.f32 %v3075, %v3076
        %v3078 = vrot.slane %v3077, 1
        %v3079 = vadd.f32 %v3077, %v3078
        %v3080 = vadd.f32 %v2788, %v2796
        %v3081 = vadd.f32 %v3080, %v2804
        %v3082 = vadd.f32 %v3081, %v2812
        %v3083 = vadd.f32 %v3082, %v2820
        %v3084 = vadd.f32 %v3083, %v2828
        %v3085 = vadd.f32 %v3084, %v2836
        %v3086 = vadd.f32 %v3085, %v2844
        %v3087 = vadd.f32 %v3086, %v2852
        %v3088 = vadd.f32 %v3087, %v2860
        %v3089 = vadd.f32 %v3088, %v2868
        %v3090 = vadd.f32 %v3089, %v2876
        %v3091 = vadd.f32 %v3090, %v2884
        %v3092 = vadd.f32 %v3091, %v2892
        %v3093 = vadd.f32 %v3092, %v2900
        %v3094 = vadd.f32 %v3093, %v2908
        %v3095 = vadd.f32 %v3094, %v2916
        %v3096 = vadd.f32 %v3095, %v2924
        %v3097 = vadd.f32 %v3096, %v2932
        %v3098 = vadd.f32 %v3097, %v2940
        %v3099 = vadd.f32 %v3098, %v2948
        %v3100 = vadd.f32 %v3099, %v2956
        %v3101 = vadd.f32 %v3100, %v2964
        %v3102 = vadd.f32 %v3101, %v2972
        %v3103 = vadd.f32 %v3102, %v2980
        %v3104 = vadd.f32 %v3103, %v2988
        %v3105 = vadd.f32 %v3104, %v2996
        %v3106 = vadd.f32 %v3105, %v3004
        %v3107 = vadd.f32 %v3106, %v3012
        %v3108 = vadd.f32 %v3107, %v3020
        %v3109 = vadd.f32 %v3108, %v3028
        %v3110 = vadd.f32 %v3109, %v3036
        %v3111 = vrot.slane %v3110, 4
        %v3112 = vadd.f32 %v3110, %v3111
        %v3113 = vrot.slane %v3112, 2
        %v3114 = vadd.f32 %v3112, %v3113
        %v3115 = vrot.slane %v3114, 1
        %v3116 = vadd.f32 %v3114, %v3115
        %v3117 = vadd.f32 %v2789, %v2797
        %v3118 = vadd.f32 %v3117, %v2805
        %v3119 = vadd.f32 %v3118, %v2813
        %v3120 = vadd.f32 %v3119, %v2821
        %v3121 = vadd.f32 %v3120, %v2829
        %v3122 = vadd.f32 %v3121, %v2837
        %v3123 = vadd.f32 %v3122, %v2845
        %v3124 = vadd.f32 %v3123, %v2853
        %v3125 = vadd.f32 %v3124, %v2861
        %v3126 = vadd.f32 %v3125, %v2869
        %v3127 = vadd.f32 %v3126, %v2877
        %v3128 = vadd.f32 %v3127, %v2885
        %v3129 = vadd.f32 %v3128, %v2893
        %v3130 = vadd.f32 %v3129, %v2901
        %v3131 = vadd.f32 %v3130, %v2909
        %v3132 = vadd.f32 %v3131, %v2917
        %v3133 = vadd.f32 %v3132, %v2925
        %v3134 = vadd.f32 %v3133, %v2933
        %v3135 = vadd.f32 %v3134, %v2941
        %v3136 = vadd.f32 %v3135, %v2949
        %v3137 = vadd.f32 %v3136, %v2957
        %v3138 = vadd.f32 %v3137, %v2965
        %v3139 = vadd.f32 %v3138, %v2973
        %v3140 = vadd.f32 %v3139, %v2981
        %v3141 = vadd.f32 %v3140, %v2989
        %v3142 = vadd.f32 %v3141, %v2997
        %v3143 = vadd.f32 %v3142, %v3005
        %v3144 = vadd.f32 %v3143, %v3013
        %v3145 = vadd.f32 %v3144, %v3021
        %v3146 = vadd.f32 %v3145, %v3029
        %v3147 = vadd.f32 %v3146, %v3037
        %v3148 = vrot.slane %v3147, 4
        %v3149 = vadd.f32 %v3147, %v3148
        %v3150 = vrot.slane %v3149, 2
        %v3151 = vadd.f32 %v3149, %v3150
        %v3152 = vrot.slane %v3151, 1
        %v3153 = vadd.f32 %v3151, %v3152
        %v3154 = vadd.f32 %v2790, %v2798
        %v3155 = vadd.f32 %v3154, %v2806
        %v3156 = vadd.f32 %v3155, %v2814
        %v3157 = vadd.f32 %v3156, %v2822
        %v3158 = vadd.f32 %v3157, %v2830
        %v3159 = vadd.f32 %v3158, %v2838
        %v3160 = vadd.f32 %v3159, %v2846
        %v3161 = vadd.f32 %v3160, %v2854
        %v3162 = vadd.f32 %v3161, %v2862
        %v3163 = vadd.f32 %v3162, %v2870
        %v3164 = vadd.f32 %v3163, %v2878
        %v3165 = vadd.f32 %v3164, %v2886
        %v3166 = vadd.f32 %v3165, %v2894
        %v3167 = vadd.f32 %v3166, %v2902
        %v3168 = vadd.f32 %v3167, %v2910
        %v3169 = vadd.f32 %v3168, %v2918
        %v3170 = vadd.f32 %v3169, %v2926
        %v3171 = vadd.f32 %v3170, %v2934
        %v3172 = vadd.f32 %v3171, %v2942
        %v3173 = vadd.f32 %v3172, %v2950
        %v3174 = vadd.f32 %v3173, %v2958
        %v3175 = vadd.f32 %v3174, %v2966
        %v3176 = vadd.f32 %v3175, %v2974
        %v3177 = vadd.f32 %v3176, %v2982
        %v3178 = vadd.f32 %v3177, %v2990
        %v3179 = vadd.f32 %v3178, %v2998
        %v3180 = vadd.f32 %v3179, %v3006
        %v3181 = vadd.f32 %v3180, %v3014
        %v3182 = vadd.f32 %v3181, %v3022
        %v3183 = vadd.f32 %v3182, %v3030
        %v3184 = vadd.f32 %v3183, %v3038
        %v3185 = vrot.slane %v3184, 4
        %v3186 = vadd.f32 %v3184, %v3185
        %v3187 = vrot.slane %v3186, 2
        %v3188 = vadd.f32 %v3186, %v3187
        %v3189 = vrot.slane %v3188, 1
        %v3190 = vadd.f32 %v3188, %v3189
        %v3191 = vadd.f32 %v2791, %v2799
        %v3192 = vadd.f32 %v3191, %v2807
        %v3193 = vadd.f32 %v3192, %v2815
        %v3194 = vadd.f32 %v3193, %v2823
        %v3195 = vadd.f32 %v3194, %v2831
        %v3196 = vadd.f32 %v3195, %v2839
        %v3197 = vadd.f32 %v3196, %v2847
        %v3198 = vadd.f32 %v3197, %v2855
        %v3199 = vadd.f32 %v3198, %v2863
        %v3200 = vadd.f32 %v3199, %v2871
        %v3201 = vadd.f32 %v3200, %v2879
        %v3202 = vadd.f32 %v3201, %v2887
        %v3203 = vadd.f32 %v3202, %v2895
        %v3204 = vadd.f32 %v3203, %v2903
        %v3205 = vadd.f32 %v3204, %v2911
        %v3206 = vadd.f32 %v3205, %v2919
        %v3207 = vadd.f32 %v3206, %v2927
        %v3208 = vadd.f32 %v3207, %v2935
        %v3209 = vadd.f32 %v3208, %v2943
        %v3210 = vadd.f32 %v3209, %v2951
        %v3211 = vadd.f32 %v3210, %v2959
        %v3212 = vadd.f32 %v3211, %v2967
        %v3213 = vadd.f32 %v3212, %v2975
        %v3214 = vadd.f32 %v3213, %v2983
        %v3215 = vadd.f32 %v3214, %v2991
        %v3216 = vadd.f32 %v3215, %v2999
        %v3217 = vadd.f32 %v3216, %v3007
        %v3218 = vadd.f32 %v3217, %v3015
        %v3219 = vadd.f32 %v3218, %v3023
        %v3220 = vadd.f32 %v3219, %v3031
        %v3221 = vadd.f32 %v3220, %v3039
        %v3222 = vrot.slane %v3221, 4
        %v3223 = vadd.f32 %v3221, %v3222
        %v3224 = vrot.slane %v3223, 2
        %v3225 = vadd.f32 %v3223, %v3224
        %v3226 = vrot.slane %v3225, 1
        %v3227 = vadd.f32 %v3225, %v3226
        %v3228 = vadd.f32 %v2792, %v2800
        %v3229 = vadd.f32 %v3228, %v2808
        %v3230 = vadd.f32 %v3229, %v2816
        %v3231 = vadd.f32 %v3230, %v2824
        %v3232 = vadd.f32 %v3231, %v2832
        %v3233 = vadd.f32 %v3232, %v2840
        %v3234 = vadd.f32 %v3233, %v2848
        %v3235 = vadd.f32 %v3234, %v2856
        %v3236 = vadd.f32 %v3235, %v2864
        %v3237 = vadd.f32 %v3236, %v2872
        %v3238 = vadd.f32 %v3237, %v2880
        %v3239 = vadd.f32 %v3238, %v2888
        %v3240 = vadd.f32 %v3239, %v2896
        %v3241 = vadd.f32 %v3240, %v2904
        %v3242 = vadd.f32 %v3241, %v2912
        %v3243 = vadd.f32 %v3242, %v2920
        %v3244 = vadd.f32 %v3243, %v2928
        %v3245 = vadd.f32 %v3244, %v2936
        %v3246 = vadd.f32 %v3245, %v2944
        %v3247 = vadd.f32 %v3246, %v2952
        %v3248 = vadd.f32 %v3247, %v2960
        %v3249 = vadd.f32 %v3248, %v2968
        %v3250 = vadd.f32 %v3249, %v2976
        %v3251 = vadd.f32 %v3250, %v2984
        %v3252 = vadd.f32 %v3251, %v2992
        %v3253 = vadd.f32 %v3252, %v3000
        %v3254 = vadd.f32 %v3253, %v3008
        %v3255 = vadd.f32 %v3254, %v3016
        %v3256 = vadd.f32 %v3255, %v3024
        %v3257 = vadd.f32 %v3256, %v3032
        %v3258 = vadd.f32 %v3257, %v3040
        %v3259 = vrot.slane %v3258, 4
        %v3260 = vadd.f32 %v3258, %v3259
        %v3261 = vrot.slane %v3260, 2
        %v3262 = vadd.f32 %v3260, %v3261
        %v3263 = vrot.slane %v3262, 1
        %v3264 = vadd.f32 %v3262, %v3263
        %v3265 = vadd.f32 %v2793, %v2801
        %v3266 = vadd.f32 %v3265, %v2809
        %v3267 = vadd.f32 %v3266, %v2817
        %v3268 = vadd.f32 %v3267, %v2825
        %v3269 = vadd.f32 %v3268, %v2833
        %v3270 = vadd.f32 %v3269, %v2841
        %v3271 = vadd.f32 %v3270, %v2849
        %v3272 = vadd.f32 %v3271, %v2857
        %v3273 = vadd.f32 %v3272, %v2865
        %v3274 = vadd.f32 %v3273, %v2873
        %v3275 = vadd.f32 %v3274, %v2881
        %v3276 = vadd.f32 %v3275, %v2889
        %v3277 = vadd.f32 %v3276, %v2897
        %v3278 = vadd.f32 %v3277, %v2905
        %v3279 = vadd.f32 %v3278, %v2913
        %v3280 = vadd.f32 %v3279, %v2921
        %v3281 = vadd.f32 %v3280, %v2929
        %v3282 = vadd.f32 %v3281, %v2937
        %v3283 = vadd.f32 %v3282, %v2945
        %v3284 = vadd.f32 %v3283, %v2953
        %v3285 = vadd.f32 %v3284, %v2961
        %v3286 = vadd.f32 %v3285, %v2969
        %v3287 = vadd.f32 %v3286, %v2977
        %v3288 = vadd.f32 %v3287, %v2985
        %v3289 = vadd.f32 %v3288, %v2993
        %v3290 = vadd.f32 %v3289, %v3001
        %v3291 = vadd.f32 %v3290, %v3009
        %v3292 = vadd.f32 %v3291, %v3017
        %v3293 = vadd.f32 %v3292, %v3025
        %v3294 = vadd.f32 %v3293, %v3033
        %v3295 = vadd.f32 %v3294, %v3041
        %v3296 = vrot.slane %v3295, 4
        %v3297 = vadd.f32 %v3295, %v3296
        %v3298 = vrot.slane %v3297, 2
        %v3299 = vadd.f32 %v3297, %v3298
        %v3300 = vrot.slane %v3299, 1
        %v3301 = vadd.f32 %v3299, %v3300
        %v3302 = vadd.f32 %v2794, %v2802
        %v3303 = vadd.f32 %v3302, %v2810
        %v3304 = vadd.f32 %v3303, %v2818
        %v3305 = vadd.f32 %v3304, %v2826
        %v3306 = vadd.f32 %v3305, %v2834
        %v3307 = vadd.f32 %v3306, %v2842
        %v3308 = vadd.f32 %v3307, %v2850
        %v3309 = vadd.f32 %v3308, %v2858
        %v3310 = vadd.f32 %v3309, %v2866
        %v3311 = vadd.f32 %v3310, %v2874
        %v3312 = vadd.f32 %v3311, %v2882
        %v3313 = vadd.f32 %v3312, %v2890
        %v3314 = vadd.f32 %v3313, %v2898
        %v3315 = vadd.f32 %v3314, %v2906
        %v3316 = vadd.f32 %v3315, %v2914
        %v3317 = vadd.f32 %v3316, %v2922
        %v3318 = vadd.f32 %v3317, %v2930
        %v3319 = vadd.f32 %v3318, %v2938
        %v3320 = vadd.f32 %v3319, %v2946
        %v3321 = vadd.f32 %v3320, %v2954
        %v3322 = vadd.f32 %v3321, %v2962
        %v3323 = vadd.f32 %v3322, %v2970
        %v3324 = vadd.f32 %v3323, %v2978
        %v3325 = vadd.f32 %v3324, %v2986
        %v3326 = vadd.f32 %v3325, %v2994
        %v3327 = vadd.f32 %v3326, %v3002
        %v3328 = vadd.f32 %v3327, %v3010
        %v3329 = vadd.f32 %v3328, %v3018
        %v3330 = vadd.f32 %v3329, %v3026
        %v3331 = vadd.f32 %v3330, %v3034
        %v3332 = vadd.f32 %v3331, %v3042
        %v3333 = vrot.slane %v3332, 4
        %v3334 = vadd.f32 %v3332, %v3333
        %v3335 = vrot.slane %v3334, 2
        %v3336 = vadd.f32 %v3334, %v3335
        %v3337 = vrot.slane %v3336, 1
        %v3338 = vadd.f32 %v3336, %v3337
        %v3339 = vadd.f32 %v1846, %v3079
        %v3340 = vadd.f32 %v1847, %v3116
        %v3341 = vadd.f32 %v1848, %v3153
        %v3342 = vadd.f32 %v1849, %v3190
        %v3343 = vadd.f32 %v1850, %v3227
        %v3344 = vadd.f32 %v1851, %v3264
        %v3345 = vadd.f32 %v1852, %v3301
        %v3346 = vadd.f32 %v1853, %v3338
        %v3347 = vld [vmem:[%s257] sm:$0xff]
        %v3356 = vcombine.low %v3339, %v3340
        %v3357 = vcombine.low %v3341, %v3342
        %v3358 = vcombine.low %v3343, %v3344
        %v3359 = vcombine.low %v3345, %v3346
        %v3361 = vunpack.c.l.s4 1966171168
        %v3362 = vunpack.c.0.s8 %v3361
        %v3363 = vlaneseq
        %v3364 = vshrl.u32 %v3363, 7
        %v3365 = vsub.s32 %v3362, %v3364
        %v3366 = vrot.slane %v3356, %v3365
        %v3368 = vunpack.c.l.s4 1966171168
        %v3369 = vunpack.c.0.s8 %v3368
        %v3370 = vlaneseq
        %v3371 = vshrl.u32 %v3370, 7
        %v3372 = vsub.s32 %v3369, %v3371
        %v3373 = vrot.slane %v3357, %v3372
        %v3375 = vunpack.c.l.s4 1966171168
        %v3376 = vunpack.c.0.s8 %v3375
        %v3377 = vlaneseq
        %v3378 = vshrl.u32 %v3377, 7
        %v3379 = vsub.s32 %v3376, %v3378
        %v3380 = vrot.slane %v3358, %v3379
        %v3382 = vunpack.c.l.s4 1966171168
        %v3383 = vunpack.c.0.s8 %v3382
        %v3384 = vlaneseq
        %v3385 = vshrl.u32 %v3384, 7
        %v3386 = vsub.s32 %v3383, %v3385
        %v3387 = vrot.slane %v3359, %v3386
        %v3388 = vcombine.low %v3366, %v3373
        %v3389 = vcombine.low %v3380, %v3387
        %v3391 = vunpack.c.l.s4 1966171168
        %v3392 = vunpack.c.0.s8 %v3391
        %v3393 = vlaneseq
        %v3394 = vshrl.u32 %v3393, 7
        %v3395 = vsub.s32 %v3392, %v3394
        %v3396 = vrot.slane %v3388, %v3395
        %v3398 = vunpack.c.l.s4 1966171168
        %v3399 = vunpack.c.0.s8 %v3398
        %v3400 = vlaneseq
        %v3401 = vshrl.u32 %v3400, 7
        %v3402 = vsub.s32 %v3399, %v3401
        %v3403 = vrot.slane %v3389, %v3402
        %v3404 = vcombine.low %v3396, %v3403
        %v3406 = vadd.f32 %v3347, %v3404
        %3407 = vst [vmem:[%s257] sm:$0xff] %v3406
        %p3408 = scmp.eq.s32.totalorder %s20, 3
        // Predicated region
        $region56: #{encoder_cnn_forward.2} parent=46 // pred_check
          %p3409 = pneg %p3408
        $region57: #{encoder_cnn_forward.2} parent=46 // pred_check_branch
          %3411 = sbr.rel (%p3409) target = $region59
        $region58: #{encoder_cnn_forward.2} parent=46 // pred_region
          %v3412 = vld [vmem:[%s257] sm:$0xff]
          %v3413 = vmul.f32 %v3412, 0.00049382716
          %3414 = vst [vmem:[%s257] sm:$0xff] %v3413
        $region59: #{encoder_cnn_forward.2} parent=46 // pred_fallthru
          _
        %s3415 = smul.u32 8, %s19
        %p3416 = scmp.lt.s32.totalorder %s18, 3
        %s3417 = scalar_select %p3416, %s18, 3
        %p3418 = scmp.lt.s32.totalorder %s3415, 15
        %s3419 = scalar_select %p3418, %s3415, 15
        %s3420 = smul.addr %s3417, 16
        %s3421 = sadd.s32 %s3419, %s3420
        %s3422 = scalar_lea.vmem %s2, %s3421
        // Predicated region
        $region60: #{encoder_cnn_forward.2} parent=46 // pred_check
          %p3423 = pneg %p106
        $region61: #{encoder_cnn_forward.2} parent=46 // pred_check_branch
          %3425 = sbr.rel (%p3423) target = $region63
        $region62: #{encoder_cnn_forward.2} parent=46 // pred_region
          %s3426 = smul.u32 8, %s19
        $region63: #{encoder_cnn_forward.2} parent=46 // pred_fallthru
          _
      $region47: #{encoder_cnn_forward.2} parent=5 // pred_fallthru
        _
      %p3427 = scmp.le.s32.totalorder 2, %s8
      // Predicated region
      $region64: #{encoder_cnn_forward.2} parent=5 // pred_check
        %p3428 = pneg %p3427
      $region65: #{encoder_cnn_forward.2} parent=5 // pred_check_branch
        %3430 = sbr.rel (%p3428) target = $region67
      $region66: #{encoder_cnn_forward.2} parent=5 // pred_region
        %s3431 = ssub.s32 %s8, 2
        // Predicated region
        $region68: #{encoder_cnn_forward.2} parent=66 // pred_check
          %p3432 = pneg %p112
        $region69: #{encoder_cnn_forward.2} parent=66 // pred_check_branch
          %3434 = sbr.rel (%p3432) target = $region71
        $region70: #{encoder_cnn_forward.2} parent=66 // pred_region
          %s3435 = smul.u32 8, %s22
          %p3436 = scmp.lt.s32.totalorder %s21, 3
          %s3437 = scalar_select %p3436, %s21, 3
          %p3438 = scmp.lt.s32.totalorder %s3435, 15
          %s3439 = scalar_select %p3438, %s3435, 15
          %s3440 = smul.addr %s3437, 16
          %s3441 = sadd.s32 %s3439, %s3440
          %s3442 = scalar_lea.vmem %s2, %s3441
        $region71: #{encoder_cnn_forward.2} parent=66 // pred_fallthru
          _
      $region67: #{encoder_cnn_forward.2} parent=5 // pred_fallthru
        _
    $region6: #{encoder_cnn_forward.2} parent=1 // loop_footer
      %s12 = sadd.s32 1, %s8
    $region7: #{encoder_cnn_forward.2} parent=1 // loop_footer_branch
      %7 = sbr.rel target = $region3
    $region8: #{encoder_cnn_forward.2} parent=1 // loop_exit
      _

// kernel: encoder_cnn_forward.3
$region0: #{encoder_cnn_forward.3}
  #allocation0 [shape = 'u32[]', space=smem, size = 0x4, offset = 0x4, fixed_abs, tag = 'smem constant byte address 0x4 - core index']
  #allocation1 [shape = 'u32[144,128]{1,0:T(1,128)}', space=vmem, size = 0x12000, scoped, tag = 'internal scratch']
  %s0 = inlined_call_operand.vmem [shape: f32[4,2048], index: 0, kind: input, shape index: {}]
  %s1 = inlined_call_operand.vmem [shape: bf16[2048,128], index: 1, kind: input, shape index: {}]
  %s2 = inlined_call_operand.vmem [shape: f32[1,128], index: 2, kind: input, shape index: {}]
  %s3 = inlined_call_operand.vmem [shape: f32[1,128], index: 3, kind: input, shape index: {}]
  %s4 = inlined_call_operand.vmem [shape: f32[1,128], index: 4, kind: input, shape index: {}]
  %s5 = inlined_call_operand.hbm [shape: f32[4,128], index: 5, kind: output, shape index: {}]
  %s6 = sld [smem:[#allocation0]]
  $region30: #{encoder_cnn_forward.3} parent=0
    _
  %s8 = ssub.s32 1, %s6
  %s9 = scalar_select 0, %s8, %s6
  $region1: #{encoder_cnn_forward.3} parent=0
    #allocation2 [shape = 'u8[2048]{0}', space=vmem, size = 0x800, scoped, tag = 'output window, operand 0, single buffered']
    #allocation3 [shape = 's32[1]{0}', space=sflag, size = 0x4, scoped, tag = 'scoped memory for encoder_cnn_forward.3']
    %10 = vsyncpa [#allocation3], 0
    // Predicated region
    $region2: #{encoder_cnn_forward.3} parent=1 // pred_check
      _
    $region3: #{encoder_cnn_forward.3} parent=1 // pred_check_branch
      %12 = sbr.rel (0) target = $region5
    $region4: #{encoder_cnn_forward.3} parent=1 // pred_region
      _
    $region5: #{encoder_cnn_forward.3} parent=1 // pred_fallthru
      _
    // Predicated region
    $region6: #{encoder_cnn_forward.3} parent=1 // pred_check
      _
    $region7: #{encoder_cnn_forward.3} parent=1 // pred_check_branch
      %14 = sbr.rel (0) target = $region9
    $region8: #{encoder_cnn_forward.3} parent=1 // pred_region
      _
    $region9: #{encoder_cnn_forward.3} parent=1 // pred_fallthru
      _
    // Predicated region
    $region10: #{encoder_cnn_forward.3} parent=1 // pred_check
      _
    $region11: #{encoder_cnn_forward.3} parent=1 // pred_check_branch
      %16 = sbr.rel (0) target = $region13
    $region12: #{encoder_cnn_forward.3} parent=1 // pred_region
      _
    $region13: #{encoder_cnn_forward.3} parent=1 // pred_fallthru
      _
    // Predicated region
    $region14: #{encoder_cnn_forward.3} parent=1 // pred_check
      _
    $region15: #{encoder_cnn_forward.3} parent=1 // pred_check_branch
      %18 = sbr.rel (0) target = $region17
    $region16: #{encoder_cnn_forward.3} parent=1 // pred_region
      _
    $region17: #{encoder_cnn_forward.3} parent=1 // pred_fallthru
      _
    // Predicated region
    $region18: #{encoder_cnn_forward.3} parent=1 // pred_check
      _
    $region19: #{encoder_cnn_forward.3} parent=1 // pred_check_branch
      %20 = sbr.rel (0) target = $region21
    $region20: #{encoder_cnn_forward.3} parent=1 // pred_region
      _
    $region21: #{encoder_cnn_forward.3} parent=1 // pred_fallthru
      _
    %v22 = vld [vmem:[%s0] sm:$0xff]
    %v23 = vld [vmem:[%s0 + $0x8] sm:$0xff]
    %v24 = vld [vmem:[%s0 + $0x10] sm:$0xff]
    %v25 = vld [vmem:[%s0 + $0x18] sm:$0xff]
    %v26 = vld [vmem:[%s0 + $0x20] sm:$0xff]
    %v27 = vld [vmem:[%s0 + $0x28] sm:$0xff]
    %v28 = vld [vmem:[%s0 + $0x30] sm:$0xff]
    %v29 = vld [vmem:[%s0 + $0x38] sm:$0xff]
    %v38 = vcombine.high %v22, %v22
    %v39 = vcombine.high %v23, %v23
    %v40 = vcombine.high %v24, %v24
    %v41 = vcombine.high %v25, %v25
    %v42 = vcombine.high %v26, %v26
    %v43 = vcombine.high %v27, %v27
    %v44 = vcombine.high %v28, %v28
    %v45 = vcombine.high %v29, %v29
    %v54 = vpack.c.bf16 %v22, %v22
    %v55 = vpack.c.bf16 %v38, %v38
    %v56 = vpack.c.bf16 %v23, %v23
    %v57 = vpack.c.bf16 %v39, %v39
    %v58 = vpack.c.bf16 %v24, %v24
    %v59 = vpack.c.bf16 %v40, %v40
    %v60 = vpack.c.bf16 %v25, %v25
    %v61 = vpack.c.bf16 %v41, %v41
    %v62 = vpack.c.bf16 %v26, %v26
    %v63 = vpack.c.bf16 %v42, %v42
    %v64 = vpack.c.bf16 %v27, %v27
    %v65 = vpack.c.bf16 %v43, %v43
    %v66 = vpack.c.bf16 %v28, %v28
    %v67 = vpack.c.bf16 %v44, %v44
    %v68 = vpack.c.bf16 %v29, %v29
    %v69 = vpack.c.bf16 %v45, %v45
    %v70 = vld [vmem:[%s1] sm:$0xf]
    %v71 = vld [vmem:[%s1 + $0x4] sm:$0xf]
    %v72 = vld [vmem:[%s1 + $0x8] sm:$0xf]
    %v73 = vld [vmem:[%s1 + $0xc] sm:$0xf]
    %v74 = vld [vmem:[%s1 + $0x10] sm:$0xf]
    %v75 = vld [vmem:[%s1 + $0x14] sm:$0xf]
    %v76 = vld [vmem:[%s1 + $0x18] sm:$0xf]
    %v77 = vld [vmem:[%s1 + $0x1c] sm:$0xf]
    %v78 = vld [vmem:[%s1 + $0x20] sm:$0xf]
    %v79 = vld [vmem:[%s1 + $0x24] sm:$0xf]
    %v80 = vld [vmem:[%s1 + $0x28] sm:$0xf]
    %v81 = vld [vmem:[%s1 + $0x2c] sm:$0xf]
    %v82 = vld [vmem:[%s1 + $0x30] sm:$0xf]
    %v83 = vld [vmem:[%s1 + $0x34] sm:$0xf]
    %v84 = vld [vmem:[%s1 + $0x38] sm:$0xf]
    %v85 = vld [vmem:[%s1 + $0x3c] sm:$0xf]
    %v86 = vld [vmem:[%s1 + $0x40] sm:$0xf]
    %v87 = vld [vmem:[%s1 + $0x44] sm:$0xf]
    %v88 = vld [vmem:[%s1 + $0x48] sm:$0xf]
    %v89 = vld [vmem:[%s1 + $0x4c] sm:$0xf]
    %v90 = vld [vmem:[%s1 + $0x50] sm:$0xf]
    %v91 = vld [vmem:[%s1 + $0x54] sm:$0xf]
    %v92 = vld [vmem:[%s1 + $0x58] sm:$0xf]
    %v93 = vld [vmem:[%s1 + $0x5c] sm:$0xf]
    %v94 = vld [vmem:[%s1 + $0x60] sm:$0xf]
    %v95 = vld [vmem:[%s1 + $0x64] sm:$0xf]
    %v96 = vld [vmem:[%s1 + $0x68] sm:$0xf]
    %v97 = vld [vmem:[%s1 + $0x6c] sm:$0xf]
    %v98 = vld [vmem:[%s1 + $0x70] sm:$0xf]
    %v99 = vld [vmem:[%s1 + $0x74] sm:$0xf]
    %v100 = vld [vmem:[%s1 + $0x78] sm:$0xf]
    %v101 = vld [vmem:[%s1 + $0x7c] sm:$0xf]
    %v102 = vld [vmem:[%s1 + $0x80] sm:$0xf]
    %v103 = vld [vmem:[%s1 + $0x84] sm:$0xf]
    %v104 = vld [vmem:[%s1 + $0x88] sm:$0xf]
    %v105 = vld [vmem:[%s1 + $0x8c] sm:$0xf]
    %v106 = vld [vmem:[%s1 + $0x90] sm:$0xf]
    %v107 = vld [vmem:[%s1 + $0x94] sm:$0xf]
    %v108 = vld [vmem:[%s1 + $0x98] sm:$0xf]
    %v109 = vld [vmem:[%s1 + $0x9c] sm:$0xf]
    %v110 = vld [vmem:[%s1 + $0xa0] sm:$0xf]
    %v111 = vld [vmem:[%s1 + $0xa4] sm:$0xf]
    %v112 = vld [vmem:[%s1 + $0xa8] sm:$0xf]
    %v113 = vld [vmem:[%s1 + $0xac] sm:$0xf]
    %v114 = vld [vmem:[%s1 + $0xb0] sm:$0xf]
    %v115 = vld [vmem:[%s1 + $0xb4] sm:$0xf]
    %v116 = vld [vmem:[%s1 + $0xb8] sm:$0xf]
    %v117 = vld [vmem:[%s1 + $0xbc] sm:$0xf]
    %v118 = vld [vmem:[%s1 + $0xc0] sm:$0xf]
    %v119 = vld [vmem:[%s1 + $0xc4] sm:$0xf]
    %v120 = vld [vmem:[%s1 + $0xc8] sm:$0xf]
    %v121 = vld [vmem:[%s1 + $0xcc] sm:$0xf]
    %v122 = vld [vmem:[%s1 + $0xd0] sm:$0xf]
    %v123 = vld [vmem:[%s1 + $0xd4] sm:$0xf]
    %v124 = vld [vmem:[%s1 + $0xd8] sm:$0xf]
    %v125 = vld [vmem:[%s1 + $0xdc] sm:$0xf]
    %v126 = vld [vmem:[%s1 + $0xe0] sm:$0xf]
    %v127 = vld [vmem:[%s1 + $0xe4] sm:$0xf]
    %v128 = vld [vmem:[%s1 + $0xe8] sm:$0xf]
    %v129 = vld [vmem:[%s1 + $0xec] sm:$0xf]
    %v130 = vld [vmem:[%s1 + $0xf0] sm:$0xf]
    %v131 = vld [vmem:[%s1 + $0xf4] sm:$0xf]
    %v132 = vld [vmem:[%s1 + $0xf8] sm:$0xf]
    %v133 = vld [vmem:[%s1 + $0xfc] sm:$0xf]
    %v134 = vld [vmem:[%s1 + $0x100] sm:$0xf]
    %v135 = vld [vmem:[%s1 + $0x104] sm:$0xf]
    %v136 = vld [vmem:[%s1 + $0x108] sm:$0xf]
    %v137 = vld [vmem:[%s1 + $0x10c] sm:$0xf]
    %v138 = vld [vmem:[%s1 + $0x110] sm:$0xf]
    %v139 = vld [vmem:[%s1 + $0x114] sm:$0xf]
    %v140 = vld [vmem:[%s1 + $0x118] sm:$0xf]
    %v141 = vld [vmem:[%s1 + $0x11c] sm:$0xf]
    %v142 = vld [vmem:[%s1 + $0x120] sm:$0xf]
    %v143 = vld [vmem:[%s1 + $0x124] sm:$0xf]
    %v144 = vld [vmem:[%s1 + $0x128] sm:$0xf]
    %v145 = vld [vmem:[%s1 + $0x12c] sm:$0xf]
    %v146 = vld [vmem:[%s1 + $0x130] sm:$0xf]
    %v147 = vld [vmem:[%s1 + $0x134] sm:$0xf]
    %v148 = vld [vmem:[%s1 + $0x138] sm:$0xf]
    %v149 = vld [vmem:[%s1 + $0x13c] sm:$0xf]
    %v150 = vld [vmem:[%s1 + $0x140] sm:$0xf]
    %v151 = vld [vmem:[%s1 + $0x144] sm:$0xf]
    %v152 = vld [vmem:[%s1 + $0x148] sm:$0xf]
    %v153 = vld [vmem:[%s1 + $0x14c] sm:$0xf]
    %v154 = vld [vmem:[%s1 + $0x150] sm:$0xf]
    %v155 = vld [vmem:[%s1 + $0x154] sm:$0xf]
    %v156 = vld [vmem:[%s1 + $0x158] sm:$0xf]
    %v157 = vld [vmem:[%s1 + $0x15c] sm:$0xf]
    %v158 = vld [vmem:[%s1 + $0x160] sm:$0xf]
    %v159 = vld [vmem:[%s1 + $0x164] sm:$0xf]
    %v160 = vld [vmem:[%s1 + $0x168] sm:$0xf]
    %v161 = vld [vmem:[%s1 + $0x16c] sm:$0xf]
    %v162 = vld [vmem:[%s1 + $0x170] sm:$0xf]
    %v163 = vld [vmem:[%s1 + $0x174] sm:$0xf]
    %v164 = vld [vmem:[%s1 + $0x178] sm:$0xf]
    %v165 = vld [vmem:[%s1 + $0x17c] sm:$0xf]
    %v166 = vld [vmem:[%s1 + $0x180] sm:$0xf]
    %v167 = vld [vmem:[%s1 + $0x184] sm:$0xf]
    %v168 = vld [vmem:[%s1 + $0x188] sm:$0xf]
    %v169 = vld [vmem:[%s1 + $0x18c] sm:$0xf]
    %v170 = vld [vmem:[%s1 + $0x190] sm:$0xf]
    %v171 = vld [vmem:[%s1 + $0x194] sm:$0xf]
    %v172 = vld [vmem:[%s1 + $0x198] sm:$0xf]
    %v173 = vld [vmem:[%s1 + $0x19c] sm:$0xf]
    %v174 = vld [vmem:[%s1 + $0x1a0] sm:$0xf]
    %v175 = vld [vmem:[%s1 + $0x1a4] sm:$0xf]
    %v176 = vld [vmem:[%s1 + $0x1a8] sm:$0xf]
    %v177 = vld [vmem:[%s1 + $0x1ac] sm:$0xf]
    %v178 = vld [vmem:[%s1 + $0x1b0] sm:$0xf]
    %v179 = vld [vmem:[%s1 + $0x1b4] sm:$0xf]
    %v180 = vld [vmem:[%s1 + $0x1b8] sm:$0xf]
    %v181 = vld [vmem:[%s1 + $0x1bc] sm:$0xf]
    %v182 = vld [vmem:[%s1 + $0x1c0] sm:$0xf]
    %v183 = vld [vmem:[%s1 + $0x1c4] sm:$0xf]
    %v184 = vld [vmem:[%s1 + $0x1c8] sm:$0xf]
    %v185 = vld [vmem:[%s1 + $0x1cc] sm:$0xf]
    %v186 = vld [vmem:[%s1 + $0x1d0] sm:$0xf]
    %v187 = vld [vmem:[%s1 + $0x1d4] sm:$0xf]
    %v188 = vld [vmem:[%s1 + $0x1d8] sm:$0xf]
    %v189 = vld [vmem:[%s1 + $0x1dc] sm:$0xf]
    %v190 = vld [vmem:[%s1 + $0x1e0] sm:$0xf]
    %v191 = vld [vmem:[%s1 + $0x1e4] sm:$0xf]
    %v192 = vld [vmem:[%s1 + $0x1e8] sm:$0xf]
    %v193 = vld [vmem:[%s1 + $0x1ec] sm:$0xf]
    %v194 = vld [vmem:[%s1 + $0x1f0] sm:$0xf]
    %v195 = vld [vmem:[%s1 + $0x1f4] sm:$0xf]
    %v196 = vld [vmem:[%s1 + $0x1f8] sm:$0xf]
    %v197 = vld [vmem:[%s1 + $0x1fc] sm:$0xf]
    %v198 = vld [vmem:[%s1 + $0x200] sm:$0xf]
    %v199 = vld [vmem:[%s1 + $0x204] sm:$0xf]
    %v200 = vld [vmem:[%s1 + $0x208] sm:$0xf]
    %v201 = vld [vmem:[%s1 + $0x20c] sm:$0xf]
    %v202 = vld [vmem:[%s1 + $0x210] sm:$0xf]
    %v203 = vld [vmem:[%s1 + $0x214] sm:$0xf]
    %v204 = vld [vmem:[%s1 + $0x218] sm:$0xf]
    %v205 = vld [vmem:[%s1 + $0x21c] sm:$0xf]
    %v206 = vld [vmem:[%s1 + $0x220] sm:$0xf]
    %v207 = vld [vmem:[%s1 + $0x224] sm:$0xf]
    %v208 = vld [vmem:[%s1 + $0x228] sm:$0xf]
    %v209 = vld [vmem:[%s1 + $0x22c] sm:$0xf]
    %v210 = vld [vmem:[%s1 + $0x230] sm:$0xf]
    %v211 = vld [vmem:[%s1 + $0x234] sm:$0xf]
    %v212 = vld [vmem:[%s1 + $0x238] sm:$0xf]
    %v213 = vld [vmem:[%s1 + $0x23c] sm:$0xf]
    %v214 = vld [vmem:[%s1 + $0x240] sm:$0xf]
    %v215 = vld [vmem:[%s1 + $0x244] sm:$0xf]
    %v216 = vld [vmem:[%s1 + $0x248] sm:$0xf]
    %v217 = vld [vmem:[%s1 + $0x24c] sm:$0xf]
    %v218 = vld [vmem:[%s1 + $0x250] sm:$0xf]
    %v219 = vld [vmem:[%s1 + $0x254] sm:$0xf]
    %v220 = vld [vmem:[%s1 + $0x258] sm:$0xf]
    %v221 = vld [vmem:[%s1 + $0x25c] sm:$0xf]
    %v222 = vld [vmem:[%s1 + $0x260] sm:$0xf]
    %v223 = vld [vmem:[%s1 + $0x264] sm:$0xf]
    %v224 = vld [vmem:[%s1 + $0x268] sm:$0xf]
    %v225 = vld [vmem:[%s1 + $0x26c] sm:$0xf]
    %v226 = vld [vmem:[%s1 + $0x270] sm:$0xf]
    %v227 = vld [vmem:[%s1 + $0x274] sm:$0xf]
    %v228 = vld [vmem:[%s1 + $0x278] sm:$0xf]
    %v229 = vld [vmem:[%s1 + $0x27c] sm:$0xf]
    %v230 = vld [vmem:[%s1 + $0x280] sm:$0xf]
    %v231 = vld [vmem:[%s1 + $0x284] sm:$0xf]
    %v232 = vld [vmem:[%s1 + $0x288] sm:$0xf]
    %v233 = vld [vmem:[%s1 + $0x28c] sm:$0xf]
    %v234 = vld [vmem:[%s1 + $0x290] sm:$0xf]
    %v235 = vld [vmem:[%s1 + $0x294] sm:$0xf]
    %v236 = vld [vmem:[%s1 + $0x298] sm:$0xf]
    %v237 = vld [vmem:[%s1 + $0x29c] sm:$0xf]
    %v238 = vld [vmem:[%s1 + $0x2a0] sm:$0xf]
    %v239 = vld [vmem:[%s1 + $0x2a4] sm:$0xf]
    %v240 = vld [vmem:[%s1 + $0x2a8] sm:$0xf]
    %v241 = vld [vmem:[%s1 + $0x2ac] sm:$0xf]
    %v242 = vld [vmem:[%s1 + $0x2b0] sm:$0xf]
    %v243 = vld [vmem:[%s1 + $0x2b4] sm:$0xf]
    %v244 = vld [vmem:[%s1 + $0x2b8] sm:$0xf]
    %v245 = vld [vmem:[%s1 + $0x2bc] sm:$0xf]
    %v246 = vld [vmem:[%s1 + $0x2c0] sm:$0xf]
    %v247 = vld [vmem:[%s1 + $0x2c4] sm:$0xf]
    %v248 = vld [vmem:[%s1 + $0x2c8] sm:$0xf]
    %v249 = vld [vmem:[%s1 + $0x2cc] sm:$0xf]
    %v250 = vld [vmem:[%s1 + $0x2d0] sm:$0xf]
    %v251 = vld [vmem:[%s1 + $0x2d4] sm:$0xf]
    %v252 = vld [vmem:[%s1 + $0x2d8] sm:$0xf]
    %v253 = vld [vmem:[%s1 + $0x2dc] sm:$0xf]
    %v254 = vld [vmem:[%s1 + $0x2e0] sm:$0xf]
    %v255 = vld [vmem:[%s1 + $0x2e4] sm:$0xf]
    %v256 = vld [vmem:[%s1 + $0x2e8] sm:$0xf]
    %v257 = vld [vmem:[%s1 + $0x2ec] sm:$0xf]
    %v258 = vld [vmem:[%s1 + $0x2f0] sm:$0xf]
    %v259 = vld [vmem:[%s1 + $0x2f4] sm:$0xf]
    %v260 = vld [vmem:[%s1 + $0x2f8] sm:$0xf]
    %v261 = vld [vmem:[%s1 + $0x2fc] sm:$0xf]
    %v262 = vld [vmem:[%s1 + $0x300] sm:$0xf]
    %v263 = vld [vmem:[%s1 + $0x304] sm:$0xf]
    %v264 = vld [vmem:[%s1 + $0x308] sm:$0xf]
    %v265 = vld [vmem:[%s1 + $0x30c] sm:$0xf]
    %v266 = vld [vmem:[%s1 + $0x310] sm:$0xf]
    %v267 = vld [vmem:[%s1 + $0x314] sm:$0xf]
    %v268 = vld [vmem:[%s1 + $0x318] sm:$0xf]
    %v269 = vld [vmem:[%s1 + $0x31c] sm:$0xf]
    %v270 = vld [vmem:[%s1 + $0x320] sm:$0xf]
    %v271 = vld [vmem:[%s1 + $0x324] sm:$0xf]
    %v272 = vld [vmem:[%s1 + $0x328] sm:$0xf]
    %v273 = vld [vmem:[%s1 + $0x32c] sm:$0xf]
    %v274 = vld [vmem:[%s1 + $0x330] sm:$0xf]
    %v275 = vld [vmem:[%s1 + $0x334] sm:$0xf]
    %v276 = vld [vmem:[%s1 + $0x338] sm:$0xf]
    %v277 = vld [vmem:[%s1 + $0x33c] sm:$0xf]
    %v278 = vld [vmem:[%s1 + $0x340] sm:$0xf]
    %v279 = vld [vmem:[%s1 + $0x344] sm:$0xf]
    %v280 = vld [vmem:[%s1 + $0x348] sm:$0xf]
    %v281 = vld [vmem:[%s1 + $0x34c] sm:$0xf]
    %v282 = vld [vmem:[%s1 + $0x350] sm:$0xf]
    %v283 = vld [vmem:[%s1 + $0x354] sm:$0xf]
    %v284 = vld [vmem:[%s1 + $0x358] sm:$0xf]
    %v285 = vld [vmem:[%s1 + $0x35c] sm:$0xf]
    %v286 = vld [vmem:[%s1 + $0x360] sm:$0xf]
    %v287 = vld [vmem:[%s1 + $0x364] sm:$0xf]
    %v288 = vld [vmem:[%s1 + $0x368] sm:$0xf]
    %v289 = vld [vmem:[%s1 + $0x36c] sm:$0xf]
    %v290 = vld [vmem:[%s1 + $0x370] sm:$0xf]
    %v291 = vld [vmem:[%s1 + $0x374] sm:$0xf]
    %v292 = vld [vmem:[%s1 + $0x378] sm:$0xf]
    %v293 = vld [vmem:[%s1 + $0x37c] sm:$0xf]
    %v294 = vld [vmem:[%s1 + $0x380] sm:$0xf]
    %v295 = vld [vmem:[%s1 + $0x384] sm:$0xf]
    %v296 = vld [vmem:[%s1 + $0x388] sm:$0xf]
    %v297 = vld [vmem:[%s1 + $0x38c] sm:$0xf]
    %v298 = vld [vmem:[%s1 + $0x390] sm:$0xf]
    %v299 = vld [vmem:[%s1 + $0x394] sm:$0xf]
    %v300 = vld [vmem:[%s1 + $0x398] sm:$0xf]
    %v301 = vld [vmem:[%s1 + $0x39c] sm:$0xf]
    %v302 = vld [vmem:[%s1 + $0x3a0] sm:$0xf]
    %v303 = vld [vmem:[%s1 + $0x3a4] sm:$0xf]
    %v304 = vld [vmem:[%s1 + $0x3a8] sm:$0xf]
    %v305 = vld [vmem:[%s1 + $0x3ac] sm:$0xf]
    %v306 = vld [vmem:[%s1 + $0x3b0] sm:$0xf]
    %v307 = vld [vmem:[%s1 + $0x3b4] sm:$0xf]
    %v308 = vld [vmem:[%s1 + $0x3b8] sm:$0xf]
    %v309 = vld [vmem:[%s1 + $0x3bc] sm:$0xf]
    %v310 = vld [vmem:[%s1 + $0x3c0] sm:$0xf]
    %v311 = vld [vmem:[%s1 + $0x3c4] sm:$0xf]
    %v312 = vld [vmem:[%s1 + $0x3c8] sm:$0xf]
    %v313 = vld [vmem:[%s1 + $0x3cc] sm:$0xf]
    %v314 = vld [vmem:[%s1 + $0x3d0] sm:$0xf]
    %v315 = vld [vmem:[%s1 + $0x3d4] sm:$0xf]
    %v316 = vld [vmem:[%s1 + $0x3d8] sm:$0xf]
    %v317 = vld [vmem:[%s1 + $0x3dc] sm:$0xf]
    %v318 = vld [vmem:[%s1 + $0x3e0] sm:$0xf]
    %v319 = vld [vmem:[%s1 + $0x3e4] sm:$0xf]
    %v320 = vld [vmem:[%s1 + $0x3e8] sm:$0xf]
    %v321 = vld [vmem:[%s1 + $0x3ec] sm:$0xf]
    %v322 = vld [vmem:[%s1 + $0x3f0] sm:$0xf]
    %v323 = vld [vmem:[%s1 + $0x3f4] sm:$0xf]
    %v324 = vld [vmem:[%s1 + $0x3f8] sm:$0xf]
    %v325 = vld [vmem:[%s1 + $0x3fc] sm:$0xf]
    %v326 = vld [vmem:[%s2] sm:$0x1]
    %v328 = vlaneseq
    %v329 = vshrl.u32 %v328, 7
    %v330 = vsub.s32 0, %v329
    %v331 = vrot.slane %v326, %v330
    %v589 = vunpack.c.l.b16 %v70
    %v590 = vunpack.c.l.b16 %v71
    %v591 = vunpack.c.l.b16 %v72
    %v592 = vunpack.c.l.b16 %v73
    %v593 = vunpack.c.l.b16 %v74
    %v594 = vunpack.c.l.b16 %v75
    %v595 = vunpack.c.l.b16 %v76
    %v596 = vunpack.c.l.b16 %v77
    %v597 = vunpack.c.l.b16 %v78
    %v598 = vunpack.c.l.b16 %v79
    %v599 = vunpack.c.l.b16 %v80
    %v600 = vunpack.c.l.b16 %v81
    %v601 = vunpack.c.l.b16 %v82
    %v602 = vunpack.c.l.b16 %v83
    %v603 = vunpack.c.l.b16 %v84
    %v604 = vunpack.c.l.b16 %v85
    %v605 = vunpack.c.l.b16 %v86
    %v606 = vunpack.c.l.b16 %v87
    %v607 = vunpack.c.l.b16 %v88
    %v608 = vunpack.c.l.b16 %v89
    %v609 = vunpack.c.l.b16 %v90
    %v610 = vunpack.c.l.b16 %v91
    %v611 = vunpack.c.l.b16 %v92
    %v612 = vunpack.c.l.b16 %v93
    %v613 = vunpack.c.l.b16 %v94
    %v614 = vunpack.c.l.b16 %v95
    %v615 = vunpack.c.l.b16 %v96
    %v616 = vunpack.c.l.b16 %v97
    %v617 = vunpack.c.l.b16 %v98
    %v618 = vunpack.c.l.b16 %v99
    %v619 = vunpack.c.l.b16 %v100
    %v620 = vunpack.c.l.b16 %v101
    %v621 = vunpack.c.l.b16 %v102
    %v622 = vunpack.c.l.b16 %v103
    %v623 = vunpack.c.l.b16 %v104
    %v624 = vunpack.c.l.b16 %v105
    %v625 = vunpack.c.l.b16 %v106
    %v626 = vunpack.c.l.b16 %v107
    %v627 = vunpack.c.l.b16 %v108
    %v628 = vunpack.c.l.b16 %v109
    %v629 = vunpack.c.l.b16 %v110
    %v630 = vunpack.c.l.b16 %v111
    %v631 = vunpack.c.l.b16 %v112
    %v632 = vunpack.c.l.b16 %v113
    %v633 = vunpack.c.l.b16 %v114
    %v634 = vunpack.c.l.b16 %v115
    %v635 = vunpack.c.l.b16 %v116
    %v636 = vunpack.c.l.b16 %v117
    %v637 = vunpack.c.l.b16 %v118
    %v638 = vunpack.c.l.b16 %v119
    %v639 = vunpack.c.l.b16 %v120
    %v640 = vunpack.c.l.b16 %v121
    %v641 = vunpack.c.l.b16 %v122
    %v642 = vunpack.c.l.b16 %v123
    %v643 = vunpack.c.l.b16 %v124
    %v644 = vunpack.c.l.b16 %v125
    %v645 = vunpack.c.l.b16 %v126
    %v646 = vunpack.c.l.b16 %v127
    %v647 = vunpack.c.l.b16 %v128
    %v648 = vunpack.c.l.b16 %v129
    %v649 = vunpack.c.l.b16 %v130
    %v650 = vunpack.c.l.b16 %v131
    %v651 = vunpack.c.l.b16 %v132
    %v652 = vunpack.c.l.b16 %v133
    %v653 = vunpack.c.l.b16 %v134
    %v654 = vunpack.c.l.b16 %v135
    %v655 = vunpack.c.l.b16 %v136
    %v656 = vunpack.c.l.b16 %v137
    %v657 = vunpack.c.l.b16 %v138
    %v658 = vunpack.c.l.b16 %v139
    %v659 = vunpack.c.l.b16 %v140
    %v660 = vunpack.c.l.b16 %v141
    %v661 = vunpack.c.l.b16 %v142
    %v662 = vunpack.c.l.b16 %v143
    %v663 = vunpack.c.l.b16 %v144
    %v664 = vunpack.c.l.b16 %v145
    %v665 = vunpack.c.l.b16 %v146
    %v666 = vunpack.c.l.b16 %v147
    %v667 = vunpack.c.l.b16 %v148
    %v668 = vunpack.c.l.b16 %v149
    %v669 = vunpack.c.l.b16 %v150
    %v670 = vunpack.c.l.b16 %v151
    %v671 = vunpack.c.l.b16 %v152
    %v672 = vunpack.c.l.b16 %v153
    %v673 = vunpack.c.l.b16 %v154
    %v674 = vunpack.c.l.b16 %v155
    %v675 = vunpack.c.l.b16 %v156
    %v676 = vunpack.c.l.b16 %v157
    %v677 = vunpack.c.l.b16 %v158
    %v678 = vunpack.c.l.b16 %v159
    %v679 = vunpack.c.l.b16 %v160
    %v680 = vunpack.c.l.b16 %v161
    %v681 = vunpack.c.l.b16 %v162
    %v682 = vunpack.c.l.b16 %v163
    %v683 = vunpack.c.l.b16 %v164
    %v684 = vunpack.c.l.b16 %v165
    %v685 = vunpack.c.l.b16 %v166
    %v686 = vunpack.c.l.b16 %v167
    %v687 = vunpack.c.l.b16 %v168
    %v688 = vunpack.c.l.b16 %v169
    %v689 = vunpack.c.l.b16 %v170
    %v690 = vunpack.c.l.b16 %v171
    %v691 = vunpack.c.l.b16 %v172
    %v692 = vunpack.c.l.b16 %v173
    %v693 = vunpack.c.l.b16 %v174
    %v694 = vunpack.c.l.b16 %v175
    %v695 = vunpack.c.l.b16 %v176
    %v696 = vunpack.c.l.b16 %v177
    %v697 = vunpack.c.l.b16 %v178
    %v698 = vunpack.c.l.b16 %v179
    %v699 = vunpack.c.l.b16 %v180
    %v700 = vunpack.c.l.b16 %v181
    %v701 = vunpack.c.l.b16 %v182
    %v702 = vunpack.c.l.b16 %v183
    %v703 = vunpack.c.l.b16 %v184
    %v704 = vunpack.c.l.b16 %v185
    %v705 = vunpack.c.l.b16 %v186
    %v706 = vunpack.c.l.b16 %v187
    %v707 = vunpack.c.l.b16 %v188
    %v708 = vunpack.c.l.b16 %v189
    %v709 = vunpack.c.l.b16 %v190
    %v710 = vunpack.c.l.b16 %v191
    %v711 = vunpack.c.l.b16 %v192
    %v712 = vunpack.c.l.b16 %v193
    %v713 = vunpack.c.l.b16 %v194
    %v714 = vunpack.c.l.b16 %v195
    %v715 = vunpack.c.l.b16 %v196
    %v716 = vunpack.c.l.b16 %v197
    %v717 = vunpack.c.l.b16 %v198
    %v718 = vunpack.c.l.b16 %v199
    %v719 = vunpack.c.l.b16 %v200
    %v720 = vunpack.c.l.b16 %v201
    %v721 = vunpack.c.l.b16 %v202
    %v722 = vunpack.c.l.b16 %v203
    %v723 = vunpack.c.l.b16 %v204
    %v724 = vunpack.c.l.b16 %v205
    %v725 = vunpack.c.l.b16 %v206
    %v726 = vunpack.c.l.b16 %v207
    %v727 = vunpack.c.l.b16 %v208
    %v728 = vunpack.c.l.b16 %v209
    %v729 = vunpack.c.l.b16 %v210
    %v730 = vunpack.c.l.b16 %v211
    %v731 = vunpack.c.l.b16 %v212
    %v732 = vunpack.c.l.b16 %v213
    %v733 = vunpack.c.l.b16 %v214
    %v734 = vunpack.c.l.b16 %v215
    %v735 = vunpack.c.l.b16 %v216
    %v736 = vunpack.c.l.b16 %v217
    %v737 = vunpack.c.l.b16 %v218
    %v738 = vunpack.c.l.b16 %v219
    %v739 = vunpack.c.l.b16 %v220
    %v740 = vunpack.c.l.b16 %v221
    %v741 = vunpack.c.l.b16 %v222
    %v742 = vunpack.c.l.b16 %v223
    %v743 = vunpack.c.l.b16 %v224
    %v744 = vunpack.c.l.b16 %v225
    %v745 = vunpack.c.l.b16 %v226
    %v746 = vunpack.c.l.b16 %v227
    %v747 = vunpack.c.l.b16 %v228
    %v748 = vunpack.c.l.b16 %v229
    %v749 = vunpack.c.l.b16 %v230
    %v750 = vunpack.c.l.b16 %v231
    %v751 = vunpack.c.l.b16 %v232
    %v752 = vunpack.c.l.b16 %v233
    %v753 = vunpack.c.l.b16 %v234
    %v754 = vunpack.c.l.b16 %v235
    %v755 = vunpack.c.l.b16 %v236
    %v756 = vunpack.c.l.b16 %v237
    %v757 = vunpack.c.l.b16 %v238
    %v758 = vunpack.c.l.b16 %v239
    %v759 = vunpack.c.l.b16 %v240
    %v760 = vunpack.c.l.b16 %v241
    %v761 = vunpack.c.l.b16 %v242
    %v762 = vunpack.c.l.b16 %v243
    %v763 = vunpack.c.l.b16 %v244
    %v764 = vunpack.c.l.b16 %v245
    %v765 = vunpack.c.l.b16 %v246
    %v766 = vunpack.c.l.b16 %v247
    %v767 = vunpack.c.l.b16 %v248
    %v768 = vunpack.c.l.b16 %v249
    %v769 = vunpack.c.l.b16 %v250
    %v770 = vunpack.c.l.b16 %v251
    %v771 = vunpack.c.l.b16 %v252
    %v772 = vunpack.c.l.b16 %v253
    %v773 = vunpack.c.l.b16 %v254
    %v774 = vunpack.c.l.b16 %v255
    %v775 = vunpack.c.l.b16 %v256
    %v776 = vunpack.c.l.b16 %v257
    %v777 = vunpack.c.l.b16 %v258
    %v778 = vunpack.c.l.b16 %v259
    %v779 = vunpack.c.l.b16 %v260
    %v780 = vunpack.c.l.b16 %v261
    %v781 = vunpack.c.l.b16 %v262
    %v782 = vunpack.c.l.b16 %v263
    %v783 = vunpack.c.l.b16 %v264
    %v784 = vunpack.c.l.b16 %v265
    %v785 = vunpack.c.l.b16 %v266
    %v786 = vunpack.c.l.b16 %v267
    %v787 = vunpack.c.l.b16 %v268
    %v788 = vunpack.c.l.b16 %v269
    %v789 = vunpack.c.l.b16 %v270
    %v790 = vunpack.c.l.b16 %v271
    %v791 = vunpack.c.l.b16 %v272
    %v792 = vunpack.c.l.b16 %v273
    %v793 = vunpack.c.l.b16 %v274
    %v794 = vunpack.c.l.b16 %v275
    %v795 = vunpack.c.l.b16 %v276
    %v796 = vunpack.c.l.b16 %v277
    %v797 = vunpack.c.l.b16 %v278
    %v798 = vunpack.c.l.b16 %v279
    %v799 = vunpack.c.l.b16 %v280
    %v800 = vunpack.c.l.b16 %v281
    %v801 = vunpack.c.l.b16 %v282
    %v802 = vunpack.c.l.b16 %v283
    %v803 = vunpack.c.l.b16 %v284
    %v804 = vunpack.c.l.b16 %v285
    %v805 = vunpack.c.l.b16 %v286
    %v806 = vunpack.c.l.b16 %v287
    %v807 = vunpack.c.l.b16 %v288
    %v808 = vunpack.c.l.b16 %v289
    %v809 = vunpack.c.l.b16 %v290
    %v810 = vunpack.c.l.b16 %v291
    %v811 = vunpack.c.l.b16 %v292
    %v812 = vunpack.c.l.b16 %v293
    %v813 = vunpack.c.l.b16 %v294
    %v814 = vunpack.c.l.b16 %v295
    %v815 = vunpack.c.l.b16 %v296
    %v816 = vunpack.c.l.b16 %v297
    %v817 = vunpack.c.l.b16 %v298
    %v818 = vunpack.c.l.b16 %v299
    %v819 = vunpack.c.l.b16 %v300
    %v820 = vunpack.c.l.b16 %v301
    %v821 = vunpack.c.l.b16 %v302
    %v822 = vunpack.c.l.b16 %v303
    %v823 = vunpack.c.l.b16 %v304
    %v824 = vunpack.c.l.b16 %v305
    %v825 = vunpack.c.l.b16 %v306
    %v826 = vunpack.c.l.b16 %v307
    %v827 = vunpack.c.l.b16 %v308
    %v828 = vunpack.c.l.b16 %v309
    %v829 = vunpack.c.l.b16 %v310
    %v830 = vunpack.c.l.b16 %v311
    %v831 = vunpack.c.l.b16 %v312
    %v832 = vunpack.c.l.b16 %v313
    %v833 = vunpack.c.l.b16 %v314
    %v834 = vunpack.c.l.b16 %v315
    %v835 = vunpack.c.l.b16 %v316
    %v836 = vunpack.c.l.b16 %v317
    %v837 = vunpack.c.l.b16 %v318
    %v838 = vunpack.c.l.b16 %v319
    %v839 = vunpack.c.l.b16 %v320
    %v840 = vunpack.c.l.b16 %v321
    %v841 = vunpack.c.l.b16 %v322
    %v842 = vunpack.c.l.b16 %v323
    %v843 = vunpack.c.l.b16 %v324
    %v844 = vunpack.c.l.b16 %v325
    %v845 = vpack.c.b16 %v590, %v589
    %v846 = vpack.c.b16 %v592, %v591
    %v847 = vpack.c.b16 %v594, %v593
    %v848 = vpack.c.b16 %v596, %v595
    %v849 = vpack.c.b16 %v598, %v597
    %v850 = vpack.c.b16 %v600, %v599
    %v851 = vpack.c.b16 %v602, %v601
    %v852 = vpack.c.b16 %v604, %v603
    %v853 = vpack.c.b16 %v606, %v605
    %v854 = vpack.c.b16 %v608, %v607
    %v855 = vpack.c.b16 %v610, %v609
    %v856 = vpack.c.b16 %v612, %v611
    %v857 = vpack.c.b16 %v614, %v613
    %v858 = vpack.c.b16 %v616, %v615
    %v859 = vpack.c.b16 %v618, %v617
    %v860 = vpack.c.b16 %v620, %v619
    %v861 = vpack.c.b16 %v622, %v621
    %v862 = vpack.c.b16 %v624, %v623
    %v863 = vpack.c.b16 %v626, %v625
    %v864 = vpack.c.b16 %v628, %v627
    %v865 = vpack.c.b16 %v630, %v629
    %v866 = vpack.c.b16 %v632, %v631
    %v867 = vpack.c.b16 %v634, %v633
    %v868 = vpack.c.b16 %v636, %v635
    %v869 = vpack.c.b16 %v638, %v637
    %v870 = vpack.c.b16 %v640, %v639
    %v871 = vpack.c.b16 %v642, %v641
    %v872 = vpack.c.b16 %v644, %v643
    %v873 = vpack.c.b16 %v646, %v645
    %v874 = vpack.c.b16 %v648, %v647
    %v875 = vpack.c.b16 %v650, %v649
    %v876 = vpack.c.b16 %v652, %v651
    %v877 = vpack.c.b16 %v654, %v653
    %v878 = vpack.c.b16 %v656, %v655
    %v879 = vpack.c.b16 %v658, %v657
    %v880 = vpack.c.b16 %v660, %v659
    %v881 = vpack.c.b16 %v662, %v661
    %v882 = vpack.c.b16 %v664, %v663
    %v883 = vpack.c.b16 %v666, %v665
    %v884 = vpack.c.b16 %v668, %v667
    %v885 = vpack.c.b16 %v670, %v669
    %v886 = vpack.c.b16 %v672, %v671
    %v887 = vpack.c.b16 %v674, %v673
    %v888 = vpack.c.b16 %v676, %v675
    %v889 = vpack.c.b16 %v678, %v677
    %v890 = vpack.c.b16 %v680, %v679
    %v891 = vpack.c.b16 %v682, %v681
    %v892 = vpack.c.b16 %v684, %v683
    %v893 = vpack.c.b16 %v686, %v685
    %v894 = vpack.c.b16 %v688, %v687
    %v895 = vpack.c.b16 %v690, %v689
    %v896 = vpack.c.b16 %v692, %v691
    %v897 = vpack.c.b16 %v694, %v693
    %v898 = vpack.c.b16 %v696, %v695
    %v899 = vpack.c.b16 %v698, %v697
    %v900 = vpack.c.b16 %v700, %v699
    %v901 = vpack.c.b16 %v702, %v701
    %v902 = vpack.c.b16 %v704, %v703
    %v903 = vpack.c.b16 %v706, %v705
    %v904 = vpack.c.b16 %v708, %v707
    %v905 = vpack.c.b16 %v710, %v709
    %v906 = vpack.c.b16 %v712, %v711
    %v907 = vpack.c.b16 %v714, %v713
    %v908 = vpack.c.b16 %v716, %v715
    %v909 = vpack.c.b16 %v718, %v717
    %v910 = vpack.c.b16 %v720, %v719
    %v911 = vpack.c.b16 %v722, %v721
    %v912 = vpack.c.b16 %v724, %v723
    %v913 = vpack.c.b16 %v726, %v725
    %v914 = vpack.c.b16 %v728, %v727
    %v915 = vpack.c.b16 %v730, %v729
    %v916 = vpack.c.b16 %v732, %v731
    %v917 = vpack.c.b16 %v734, %v733
    %v918 = vpack.c.b16 %v736, %v735
    %v919 = vpack.c.b16 %v738, %v737
    %v920 = vpack.c.b16 %v740, %v739
    %v921 = vpack.c.b16 %v742, %v741
    %v922 = vpack.c.b16 %v744, %v743
    %v923 = vpack.c.b16 %v746, %v745
    %v924 = vpack.c.b16 %v748, %v747
    %v925 = vpack.c.b16 %v750, %v749
    %v926 = vpack.c.b16 %v752, %v751
    %v927 = vpack.c.b16 %v754, %v753
    %v928 = vpack.c.b16 %v756, %v755
    %v929 = vpack.c.b16 %v758, %v757
    %v930 = vpack.c.b16 %v760, %v759
    %v931 = vpack.c.b16 %v762, %v761
    %v932 = vpack.c.b16 %v764, %v763
    %v933 = vpack.c.b16 %v766, %v765
    %v934 = vpack.c.b16 %v768, %v767
    %v935 = vpack.c.b16 %v770, %v769
    %v936 = vpack.c.b16 %v772, %v771
    %v937 = vpack.c.b16 %v774, %v773
    %v938 = vpack.c.b16 %v776, %v775
    %v939 = vpack.c.b16 %v778, %v777
    %v940 = vpack.c.b16 %v780, %v779
    %v941 = vpack.c.b16 %v782, %v781
    %v942 = vpack.c.b16 %v784, %v783
    %v943 = vpack.c.b16 %v786, %v785
    %v944 = vpack.c.b16 %v788, %v787
    %v945 = vpack.c.b16 %v790, %v789
    %v946 = vpack.c.b16 %v792, %v791
    %v947 = vpack.c.b16 %v794, %v793
    %v948 = vpack.c.b16 %v796, %v795
    %v949 = vpack.c.b16 %v798, %v797
    %v950 = vpack.c.b16 %v800, %v799
    %v951 = vpack.c.b16 %v802, %v801
    %v952 = vpack.c.b16 %v804, %v803
    %v953 = vpack.c.b16 %v806, %v805
    %v954 = vpack.c.b16 %v808, %v807
    %v955 = vpack.c.b16 %v810, %v809
    %v956 = vpack.c.b16 %v812, %v811
    %v957 = vpack.c.b16 %v814, %v813
    %v958 = vpack.c.b16 %v816, %v815
    %v959 = vpack.c.b16 %v818, %v817
    %v960 = vpack.c.b16 %v820, %v819
    %v961 = vpack.c.b16 %v822, %v821
    %v962 = vpack.c.b16 %v824, %v823
    %v963 = vpack.c.b16 %v826, %v825
    %v964 = vpack.c.b16 %v828, %v827
    %v965 = vpack.c.b16 %v830, %v829
    %v966 = vpack.c.b16 %v832, %v831
    %v967 = vpack.c.b16 %v834, %v833
    %v968 = vpack.c.b16 %v836, %v835
    %v969 = vpack.c.b16 %v838, %v837
    %v970 = vpack.c.b16 %v840, %v839
    %v971 = vpack.c.b16 %v842, %v841
    %v972 = vpack.c.b16 %v844, %v843
    %1101 = vmatprep.subr.bf16.mxu0 0
    %1102 = vmatpush1.bf16.msra.mxu0 %v845
    %1103 = vmatprep.subr.bf16.mxu0 0
    %1104 = vmatpush1.bf16.msra.mxu0 %v846
    %1105 = vmatprep.subr.bf16.mxu0 0
    %1106 = vmatpush1.bf16.msra.mxu0 %v847
    %1107 = vmatprep.subr.bf16.mxu0 0
    %1108 = vmatpush1.bf16.msra.mxu0 %v848
    %1109 = vmatprep.subr.bf16.mxu0 0
    %1110 = vmatpush1.bf16.msra.mxu0 %v849
    %1111 = vmatprep.subr.bf16.mxu0 0
    %1112 = vmatpush1.bf16.msra.mxu0 %v850
    %1113 = vmatprep.subr.bf16.mxu0 0
    %1114 = vmatpush1.bf16.msra.mxu0 %v851
    %1115 = vmatprep.subr.bf16.mxu0 0
    %1116 = vmatpush1.bf16.msra.mxu0 %v852
    %1117 = vmatprep.subr.bf16.mxu0 0
    %1118 = vmatpush1.bf16.msra.mxu0 %v853
    %1119 = vmatprep.subr.bf16.mxu0 0
    %1120 = vmatpush1.bf16.msra.mxu0 %v854
    %1121 = vmatprep.subr.bf16.mxu0 0
    %1122 = vmatpush1.bf16.msra.mxu0 %v855
    %1123 = vmatprep.subr.bf16.mxu0 0
    %1124 = vmatpush1.bf16.msra.mxu0 %v856
    %1125 = vmatprep.subr.bf16.mxu0 0
    %1126 = vmatpush1.bf16.msra.mxu0 %v857
    %1127 = vmatprep.subr.bf16.mxu0 0
    %1128 = vmatpush1.bf16.msra.mxu0 %v858
    %1129 = vmatprep.subr.bf16.mxu0 0
    %1130 = vmatpush1.bf16.msra.mxu0 %v859
    %1131 = vmatprep.subr.bf16.mxu0 0
    %1132 = vmatpush1.bf16.msra.mxu0 %v860
    %1133 = vmatprep.mubr.bf16.mxu0 %v55
    %1134 = vmatmul.mubr.bf16.gmra.mrb[0].mxu0 %v54
    %v1135 = vpop.f32.mrb[0].mxu0
    %v1136 = vadd.f32 %v331, %v1135
    %v1137 = vpop.f32.mrb[0].mxu0
    %v1138 = vpop.f32.mrb[0].mxu0
    %v1139 = vpop.f32.mrb[0].mxu0
    %1140 = vdwg.mxu0
    %1141 = vmatprep.subr.bf16.mxu0 0
    %1142 = vmatpush1.bf16.msra.mxu0 %v861
    %1143 = vmatprep.subr.bf16.mxu0 0
    %1144 = vmatpush1.bf16.msra.mxu0 %v862
    %1145 = vmatprep.subr.bf16.mxu0 0
    %1146 = vmatpush1.bf16.msra.mxu0 %v863
    %1147 = vmatprep.subr.bf16.mxu0 0
    %1148 = vmatpush1.bf16.msra.mxu0 %v864
    %1149 = vmatprep.subr.bf16.mxu0 0
    %1150 = vmatpush1.bf16.msra.mxu0 %v865
    %1151 = vmatprep.subr.bf16.mxu0 0
    %1152 = vmatpush1.bf16.msra.mxu0 %v866
    %1153 = vmatprep.subr.bf16.mxu0 0
    %1154 = vmatpush1.bf16.msra.mxu0 %v867
    %1155 = vmatprep.subr.bf16.mxu0 0
    %1156 = vmatpush1.bf16.msra.mxu0 %v868
    %1157 = vmatprep.subr.bf16.mxu0 0
    %1158 = vmatpush1.bf16.msra.mxu0 %v869
    %1159 = vmatprep.subr.bf16.mxu0 0
    %1160 = vmatpush1.bf16.msra.mxu0 %v870
    %1161 = vmatprep.subr.bf16.mxu0 0
    %1162 = vmatpush1.bf16.msra.mxu0 %v871
    %1163 = vmatprep.subr.bf16.mxu0 0
    %1164 = vmatpush1.bf16.msra.mxu0 %v872
    %1165 = vmatprep.subr.bf16.mxu0 0
    %1166 = vmatpush1.bf16.msra.mxu0 %v873
    %1167 = vmatprep.subr.bf16.mxu0 0
    %1168 = vmatpush1.bf16.msra.mxu0 %v874
    %1169 = vmatprep.subr.bf16.mxu0 0
    %1170 = vmatpush1.bf16.msra.mxu0 %v875
    %1171 = vmatprep.subr.bf16.mxu0 0
    %1172 = vmatpush1.bf16.msra.mxu0 %v876
    %1173 = vmatprep.mubr.bf16.mxu0 %v57
    %1174 = vmatmul.mubr.bf16.gmra.mrb[0].mxu0 %v56
    %v1175 = vpop.f32.mrb[0].mxu0
    %v1176 = vadd.f32 %v1136, %v1175
    %v1177 = vpop.f32.mrb[0].mxu0
    %v1178 = vpop.f32.mrb[0].mxu0
    %v1179 = vpop.f32.mrb[0].mxu0
    %1180 = vdwg.mxu0
    %1181 = vmatprep.subr.bf16.mxu0 0
    %1182 = vmatpush1.bf16.msra.mxu0 %v877
    %1183 = vmatprep.subr.bf16.mxu0 0
    %1184 = vmatpush1.bf16.msra.mxu0 %v878
    %1185 = vmatprep.subr.bf16.mxu0 0
    %1186 = vmatpush1.bf16.msra.mxu0 %v879
    %1187 = vmatprep.subr.bf16.mxu0 0
    %1188 = vmatpush1.bf16.msra.mxu0 %v880
    %1189 = vmatprep.subr.bf16.mxu0 0
    %1190 = vmatpush1.bf16.msra.mxu0 %v881
    %1191 = vmatprep.subr.bf16.mxu0 0
    %1192 = vmatpush1.bf16.msra.mxu0 %v882
    %1193 = vmatprep.subr.bf16.mxu0 0
    %1194 = vmatpush1.bf16.msra.mxu0 %v883
    %1195 = vmatprep.subr.bf16.mxu0 0
    %1196 = vmatpush1.bf16.msra.mxu0 %v884
    %1197 = vmatprep.subr.bf16.mxu0 0
    %1198 = vmatpush1.bf16.msra.mxu0 %v885
    %1199 = vmatprep.subr.bf16.mxu0 0
    %1200 = vmatpush1.bf16.msra.mxu0 %v886
    %1201 = vmatprep.subr.bf16.mxu0 0
    %1202 = vmatpush1.bf16.msra.mxu0 %v887
    %1203 = vmatprep.subr.bf16.mxu0 0
    %1204 = vmatpush1.bf16.msra.mxu0 %v888
    %1205 = vmatprep.subr.bf16.mxu0 0
    %1206 = vmatpush1.bf16.msra.mxu0 %v889
    %1207 = vmatprep.subr.bf16.mxu0 0
    %1208 = vmatpush1.bf16.msra.mxu0 %v890
    %1209 = vmatprep.subr.bf16.mxu0 0
    %1210 = vmatpush1.bf16.msra.mxu0 %v891
    %1211 = vmatprep.subr.bf16.mxu0 0
    %1212 = vmatpush1.bf16.msra.mxu0 %v892
    %1213 = vmatprep.mubr.bf16.mxu0 %v59
    %1214 = vmatmul.mubr.bf16.gmra.mrb[0].mxu0 %v58
    %v1215 = vpop.f32.mrb[0].mxu0
    %v1216 = vadd.f32 %v1176, %v1215
    %v1217 = vpop.f32.mrb[0].mxu0
    %v1218 = vpop.f32.mrb[0].mxu0
    %v1219 = vpop.f32.mrb[0].mxu0
    %1220 = vdwg.mxu0
    %1221 = vmatprep.subr.bf16.mxu0 0
    %1222 = vmatpush1.bf16.msra.mxu0 %v893
    %1223 = vmatprep.subr.bf16.mxu0 0
    %1224 = vmatpush1.bf16.msra.mxu0 %v894
    %1225 = vmatprep.subr.bf16.mxu0 0
    %1226 = vmatpush1.bf16.msra.mxu0 %v895
    %1227 = vmatprep.subr.bf16.mxu0 0
    %1228 = vmatpush1.bf16.msra.mxu0 %v896
    %1229 = vmatprep.subr.bf16.mxu0 0
    %1230 = vmatpush1.bf16.msra.mxu0 %v897
    %1231 = vmatprep.subr.bf16.mxu0 0
    %1232 = vmatpush1.bf16.msra.mxu0 %v898
    %1233 = vmatprep.subr.bf16.mxu0 0
    %1234 = vmatpush1.bf16.msra.mxu0 %v899
    %1235 = vmatprep.subr.bf16.mxu0 0
    %1236 = vmatpush1.bf16.msra.mxu0 %v900
    %1237 = vmatprep.subr.bf16.mxu0 0
    %1238 = vmatpush1.bf16.msra.mxu0 %v901
    %1239 = vmatprep.subr.bf16.mxu0 0
    %1240 = vmatpush1.bf16.msra.mxu0 %v902
    %1241 = vmatprep.subr.bf16.mxu0 0
    %1242 = vmatpush1.bf16.msra.mxu0 %v903
    %1243 = vmatprep.subr.bf16.mxu0 0
    %1244 = vmatpush1.bf16.msra.mxu0 %v904
    %1245 = vmatprep.subr.bf16.mxu0 0
    %1246 = vmatpush1.bf16.msra.mxu0 %v905
    %1247 = vmatprep.subr.bf16.mxu0 0
    %1248 = vmatpush1.bf16.msra.mxu0 %v906
    %1249 = vmatprep.subr.bf16.mxu0 0
    %1250 = vmatpush1.bf16.msra.mxu0 %v907
    %1251 = vmatprep.subr.bf16.mxu0 0
    %1252 = vmatpush1.bf16.msra.mxu0 %v908
    %1253 = vmatprep.mubr.bf16.mxu0 %v61
    %1254 = vmatmul.mubr.bf16.gmra.mrb[0].mxu0 %v60
    %v1255 = vpop.f32.mrb[0].mxu0
    %v1256 = vadd.f32 %v1216, %v1255
    %v1257 = vpop.f32.mrb[0].mxu0
    %v1258 = vpop.f32.mrb[0].mxu0
    %v1259 = vpop.f32.mrb[0].mxu0
    %1260 = vdwg.mxu0
    %1261 = vmatprep.subr.bf16.mxu0 0
    %1262 = vmatpush1.bf16.msra.mxu0 %v909
    %1263 = vmatprep.subr.bf16.mxu0 0
    %1264 = vmatpush1.bf16.msra.mxu0 %v910
    %1265 = vmatprep.subr.bf16.mxu0 0
    %1266 = vmatpush1.bf16.msra.mxu0 %v911
    %1267 = vmatprep.subr.bf16.mxu0 0
    %1268 = vmatpush1.bf16.msra.mxu0 %v912
    %1269 = vmatprep.subr.bf16.mxu0 0
    %1270 = vmatpush1.bf16.msra.mxu0 %v913
    %1271 = vmatprep.subr.bf16.mxu0 0
    %1272 = vmatpush1.bf16.msra.mxu0 %v914
    %1273 = vmatprep.subr.bf16.mxu0 0
    %1274 = vmatpush1.bf16.msra.mxu0 %v915
    %1275 = vmatprep.subr.bf16.mxu0 0
    %1276 = vmatpush1.bf16.msra.mxu0 %v916
    %1277 = vmatprep.subr.bf16.mxu0 0
    %1278 = vmatpush1.bf16.msra.mxu0 %v917
    %1279 = vmatprep.subr.bf16.mxu0 0
    %1280 = vmatpush1.bf16.msra.mxu0 %v918
    %1281 = vmatprep.subr.bf16.mxu0 0
    %1282 = vmatpush1.bf16.msra.mxu0 %v919
    %1283 = vmatprep.subr.bf16.mxu0 0
    %1284 = vmatpush1.bf16.msra.mxu0 %v920
    %1285 = vmatprep.subr.bf16.mxu0 0
    %1286 = vmatpush1.bf16.msra.mxu0 %v921
    %1287 = vmatprep.subr.bf16.mxu0 0
    %1288 = vmatpush1.bf16.msra.mxu0 %v922
    %1289 = vmatprep.subr.bf16.mxu0 0
    %1290 = vmatpush1.bf16.msra.mxu0 %v923
    %1291 = vmatprep.subr.bf16.mxu0 0
    %1292 = vmatpush1.bf16.msra.mxu0 %v924
    %1293 = vmatprep.mubr.bf16.mxu0 %v63
    %1294 = vmatmul.mubr.bf16.gmra.mrb[0].mxu0 %v62
    %v1295 = vpop.f32.mrb[0].mxu0
    %v1296 = vadd.f32 %v1256, %v1295
    %v1297 = vpop.f32.mrb[0].mxu0
    %v1298 = vpop.f32.mrb[0].mxu0
    %v1299 = vpop.f32.mrb[0].mxu0
    %1300 = vdwg.mxu0
    %1301 = vmatprep.subr.bf16.mxu0 0
    %1302 = vmatpush1.bf16.msra.mxu0 %v925
    %1303 = vmatprep.subr.bf16.mxu0 0
    %1304 = vmatpush1.bf16.msra.mxu0 %v926
    %1305 = vmatprep.subr.bf16.mxu0 0
    %1306 = vmatpush1.bf16.msra.mxu0 %v927
    %1307 = vmatprep.subr.bf16.mxu0 0
    %1308 = vmatpush1.bf16.msra.mxu0 %v928
    %1309 = vmatprep.subr.bf16.mxu0 0
    %1310 = vmatpush1.bf16.msra.mxu0 %v929
    %1311 = vmatprep.subr.bf16.mxu0 0
    %1312 = vmatpush1.bf16.msra.mxu0 %v930
    %1313 = vmatprep.subr.bf16.mxu0 0
    %1314 = vmatpush1.bf16.msra.mxu0 %v931
    %1315 = vmatprep.subr.bf16.mxu0 0
    %1316 = vmatpush1.bf16.msra.mxu0 %v932
    %1317 = vmatprep.subr.bf16.mxu0 0
    %1318 = vmatpush1.bf16.msra.mxu0 %v933
    %1319 = vmatprep.subr.bf16.mxu0 0
    %1320 = vmatpush1.bf16.msra.mxu0 %v934
    %1321 = vmatprep.subr.bf16.mxu0 0
    %1322 = vmatpush1.bf16.msra.mxu0 %v935
    %1323 = vmatprep.subr.bf16.mxu0 0
    %1324 = vmatpush1.bf16.msra.mxu0 %v936
    %1325 = vmatprep.subr.bf16.mxu0 0
    %1326 = vmatpush1.bf16.msra.mxu0 %v937
    %1327 = vmatprep.subr.bf16.mxu0 0
    %1328 = vmatpush1.bf16.msra.mxu0 %v938
    %1329 = vmatprep.subr.bf16.mxu0 0
    %1330 = vmatpush1.bf16.msra.mxu0 %v939
    %1331 = vmatprep.subr.bf16.mxu0 0
    %1332 = vmatpush1.bf16.msra.mxu0 %v940
    %1333 = vmatprep.mubr.bf16.mxu0 %v65
    %1334 = vmatmul.mubr.bf16.gmra.mrb[0].mxu0 %v64
    %v1335 = vpop.f32.mrb[0].mxu0
    %v1336 = vadd.f32 %v1296, %v1335
    %v1337 = vpop.f32.mrb[0].mxu0
    %v1338 = vpop.f32.mrb[0].mxu0
    %v1339 = vpop.f32.mrb[0].mxu0
    %1340 = vdwg.mxu0
    %1341 = vmatprep.subr.bf16.mxu0 0
    %1342 = vmatpush1.bf16.msra.mxu0 %v941
    %1343 = vmatprep.subr.bf16.mxu0 0
    %1344 = vmatpush1.bf16.msra.mxu0 %v942
    %1345 = vmatprep.subr.bf16.mxu0 0
    %1346 = vmatpush1.bf16.msra.mxu0 %v943
    %1347 = vmatprep.subr.bf16.mxu0 0
    %1348 = vmatpush1.bf16.msra.mxu0 %v944
    %1349 = vmatprep.subr.bf16.mxu0 0
    %1350 = vmatpush1.bf16.msra.mxu0 %v945
    %1351 = vmatprep.subr.bf16.mxu0 0
    %1352 = vmatpush1.bf16.msra.mxu0 %v946
    %1353 = vmatprep.subr.bf16.mxu0 0
    %1354 = vmatpush1.bf16.msra.mxu0 %v947
    %1355 = vmatprep.subr.bf16.mxu0 0
    %1356 = vmatpush1.bf16.msra.mxu0 %v948
    %1357 = vmatprep.subr.bf16.mxu0 0
    %1358 = vmatpush1.bf16.msra.mxu0 %v949
    %1359 = vmatprep.subr.bf16.mxu0 0
    %1360 = vmatpush1.bf16.msra.mxu0 %v950
    %1361 = vmatprep.subr.bf16.mxu0 0
    %1362 = vmatpush1.bf16.msra.mxu0 %v951
    %1363 = vmatprep.subr.bf16.mxu0 0
    %1364 = vmatpush1.bf16.msra.mxu0 %v952
    %1365 = vmatprep.subr.bf16.mxu0 0
    %1366 = vmatpush1.bf16.msra.mxu0 %v953
    %1367 = vmatprep.subr.bf16.mxu0 0
    %1368 = vmatpush1.bf16.msra.mxu0 %v954
    %1369 = vmatprep.subr.bf16.mxu0 0
    %1370 = vmatpush1.bf16.msra.mxu0 %v955
    %1371 = vmatprep.subr.bf16.mxu0 0
    %1372 = vmatpush1.bf16.msra.mxu0 %v956
    %1373 = vmatprep.mubr.bf16.mxu0 %v67
    %1374 = vmatmul.mubr.bf16.gmra.mrb[0].mxu0 %v66
    %v1375 = vpop.f32.mrb[0].mxu0
    %v1376 = vadd.f32 %v1336, %v1375
    %v1377 = vpop.f32.mrb[0].mxu0
    %v1378 = vpop.f32.mrb[0].mxu0
    %v1379 = vpop.f32.mrb[0].mxu0
    %1380 = vdwg.mxu0
    %1381 = vmatprep.subr.bf16.mxu0 0
    %1382 = vmatpush1.bf16.msra.mxu0 %v957
    %1383 = vmatprep.subr.bf16.mxu0 0
    %1384 = vmatpush1.bf16.msra.mxu0 %v958
    %1385 = vmatprep.subr.bf16.mxu0 0
    %1386 = vmatpush1.bf16.msra.mxu0 %v959
    %1387 = vmatprep.subr.bf16.mxu0 0
    %1388 = vmatpush1.bf16.msra.mxu0 %v960
    %1389 = vmatprep.subr.bf16.mxu0 0
    %1390 = vmatpush1.bf16.msra.mxu0 %v961
    %1391 = vmatprep.subr.bf16.mxu0 0
    %1392 = vmatpush1.bf16.msra.mxu0 %v962
    %1393 = vmatprep.subr.bf16.mxu0 0
    %1394 = vmatpush1.bf16.msra.mxu0 %v963
    %1395 = vmatprep.subr.bf16.mxu0 0
    %1396 = vmatpush1.bf16.msra.mxu0 %v964
    %1397 = vmatprep.subr.bf16.mxu0 0
    %1398 = vmatpush1.bf16.msra.mxu0 %v965
    %1399 = vmatprep.subr.bf16.mxu0 0
    %1400 = vmatpush1.bf16.msra.mxu0 %v966
    %1401 = vmatprep.subr.bf16.mxu0 0
    %1402 = vmatpush1.bf16.msra.mxu0 %v967
    %1403 = vmatprep.subr.bf16.mxu0 0
    %1404 = vmatpush1.bf16.msra.mxu0 %v968
    %1405 = vmatprep.subr.bf16.mxu0 0
    %1406 = vmatpush1.bf16.msra.mxu0 %v969
    %1407 = vmatprep.subr.bf16.mxu0 0
    %1408 = vmatpush1.bf16.msra.mxu0 %v970
    %1409 = vmatprep.subr.bf16.mxu0 0
    %1410 = vmatpush1.bf16.msra.mxu0 %v971
    %1411 = vmatprep.subr.bf16.mxu0 0
    %1412 = vmatpush1.bf16.msra.mxu0 %v972
    %1413 = vmatprep.mubr.bf16.mxu0 %v69
    %1414 = vmatmul.mubr.bf16.gmra.mrb[0].mxu0 %v68
    %v1415 = vpop.f32.mrb[0].mxu0
    %v1416 = vadd.f32 %v1376, %v1415
    %v1417 = vpop.f32.mrb[0].mxu0
    %v1418 = vpop.f32.mrb[0].mxu0
    %v1419 = vpop.f32.mrb[0].mxu0
    %1420 = vdwg.mxu0
    %vm1421 = vcmask 1043456
    %v1422 = vsel %vm1421, %v1416, 0.0
    %v1423 = vrot.slane %v1422, 4
    %v1424 = vadd.f32 %v1422, %v1423
    %v1425 = vrot.slane %v1424, 2
    %v1426 = vadd.f32 %v1424, %v1425
    %v1427 = vrot.slane %v1426, 1
    %v1428 = vadd.f32 %v1426, %v1427
    %v1429 = vrcp.pop 4.0
    %v1430 = vmul.f32 %v1428, %v1429
    %v1431 = vsub.f32 %v1416, %v1430
    %v1432 = vmul.f32 %v1431, %v1431
    %v1433 = vsel %vm1421, %v1432, 0.0
    %v1434 = vrot.slane %v1433, 4
    %v1435 = vadd.f32 %v1433, %v1434
    %v1436 = vrot.slane %v1435, 2
    %v1437 = vadd.f32 %v1435, %v1436
    %v1438 = vrot.slane %v1437, 1
    %v1439 = vadd.f32 %v1437, %v1438
    %v1440 = vmul.f32 %v1439, %v1429
    %v1441 = vadd.f32 %v1440, 1e-05
    %v1442 = vrsqrt.pop %v1441
    %v1443 = vmul.f32 %v1431, %v1442
    %v1444 = vld [vmem:[%s3] sm:$0x1]
    %v1446 = vlaneseq
    %v1447 = vshrl.u32 %v1446, 7
    %v1448 = vsub.s32 0, %v1447
    %v1449 = vrot.slane %v1444, %v1448
    %v1451 = vmul.f32 %v1443, %v1449
    %v1452 = vld [vmem:[%s4] sm:$0x1]
    %v1454 = vlaneseq
    %v1455 = vshrl.u32 %v1454, 7
    %v1456 = vsub.s32 0, %v1455
    %v1457 = vrot.slane %v1452, %v1456
    %v1459 = vadd.f32 %v1451, %v1457
    %1460 = vst [vmem:[#allocation2] sm:$0xf] %v1459
    // Predicated region
    $region22: #{encoder_cnn_forward.3} parent=1 // pred_check
      _
    $region23: #{encoder_cnn_forward.3} parent=1 // pred_check_branch
      %1462 = sbr.rel (0) target = $region25
    $region24: #{encoder_cnn_forward.3} parent=1 // pred_region
      %s1464 = ssub.s32 64, 64
      %1465 = vsyncadd [#allocation3], %s1464
      %s1467 = sshll.u32 [#allocation2], 4
      %s1468 = int_to_ptr.vmem [resolvable:$true] %s1467
      %1470 = dma.vmem_to_hbm [thread:$0]  %s1468, 64, %s5, [#allocation3]
    $region25: #{encoder_cnn_forward.3} parent=1 // pred_fallthru
      _
    // Predicated region
    $region26: #{encoder_cnn_forward.3} parent=1 // pred_check
      _
    $region27: #{encoder_cnn_forward.3} parent=1 // pred_check_branch
      %1472 = sbr.rel (0) target = $region29
    $region28: #{encoder_cnn_forward.3} parent=1 // pred_region
      %1473 = dma.done [#allocation3], 64
    $region29: #{encoder_cnn_forward.3} parent=1 // pred_fallthru
      _
    %1474 = vsyncpa [#allocation3], 1

</llo_original>
